<compile_context>
chip_gen: v6e
topology: v6e:2x2x1
jax: 0.10.0
libtpu: 0.0.40
codegen_flags: <defaults>
</compile_context>

<pallas_src>
import functools
import math

import jax
import jax.numpy as jnp
from jax.experimental import pallas as pl
from jax.experimental.pallas import tpu as pltpu

BN_EPS = 1e-5


# ----------------------------------------------------------------------------
# Pallas hot path: fused im2col + 3x3 conv (+ bias + optional ReLU) on the MXU
# ----------------------------------------------------------------------------
def _conv3x3_kernel(w_ref, x_ref, b_ref, o_ref, *, wp, relu):
    """One batch element per grid step.

    w_ref: (1, 9, OC, C)   bf16  tap-major weights (shared or per-sample)
    x_ref: (1, C, Lp)      bf16  flat zero-padded image, Lp = (H+3)*(W+2)
    b_ref: (1, OC, 1)      f32   bias (zeros for the dynamic conv)
    o_ref: (1, OC, Lout)   f32   Lout = H*(W+2); 2 junk cols/row dropped outside
    """
    oc = o_ref.shape[1]
    lout = o_ref.shape[2]
    acc = jnp.zeros((oc, lout), jnp.float32)
    # 9 taps == 9 static lane-offset views of the same VMEM-resident block;
    # each tap is one bf16 matmul accumulated in f32 (no HBM im2col tensor).
    for t in range(9):
        ki, kj = divmod(t, 3)
        off = ki * wp + kj
        acc = acc + jnp.dot(w_ref[0, t], x_ref[0, :, off:off + lout],
                            preferred_element_type=jnp.float32)
    acc = acc + b_ref[0]
    if relu:
        acc = jnp.maximum(acc, 0.0)
    o_ref[0] = acc


def conv3x3(x, w_taps, bias=None, relu=False):
    """3x3 conv, stride=1, padding=1 on NCHW, fused im2col in Pallas.

    x:      (B, C, H, W)          f32
    w_taps: (1 or B, 9, OC, C)    bf16  (1 -> shared weights, B -> per-sample)
    bias:   (OC,) f32 or None
    """
    B, C, H, W = x.shape
    Bw, _, OC, _ = w_taps.shape
    wp = W + 2                       # padded width
    lp = (H + 3) * wp                # flat padded length (+1 extra bottom row)
    lout = H * wp                    # flat output length (incl. 2 junk cols/row)

    xp = jnp.pad(x, ((0, 0), (0, 0), (1, 2), (1, 1)))
    xp = xp.reshape(B, C, lp).astype(jnp.bfloat16)
    if bias is None:
        bias = jnp.zeros((OC,), jnp.float32)
    b3 = bias.astype(jnp.float32).reshape(1, OC, 1)

    w_map = (lambda bi: (0, 0, 0, 0)) if Bw == 1 else (lambda bi: (bi, 0, 0, 0))

    # TODO(synk): for very large H*W (block > VMEM budget), add halo'd spatial
    # row tiling (pl.Element windows) instead of one whole-image block/batch.
    out = pl.pallas_call(
        functools.partial(_conv3x3_kernel, wp=wp, relu=relu),
        out_shape=jax.ShapeDtypeStruct((B, OC, lout), jnp.float32),
        grid=(B,),
        in_specs=[
            pl.BlockSpec((1, 9, OC, C), w_map),
            pl.BlockSpec((1, C, lp), lambda bi: (bi, 0, 0)),
            pl.BlockSpec((1, OC, 1), lambda bi: (0, 0, 0)),
        ],
        out_specs=pl.BlockSpec((1, OC, lout), lambda bi: (bi, 0, 0)),
        compiler_params=pltpu.CompilerParams(
            dimension_semantics=("parallel",),
            vmem_limit_bytes=48 * 1024 * 1024),
    )(w_taps, xp, b3)

    # Drop the 2 junk columns introduced by the flat padded-width layout.
    return out.reshape(B, OC, H, wp)[:, :, :, :W]


# ----------------------------------------------------------------------------
# Glue (tiny linears / pooling / BN) in plain JAX — fused by XLA under jit
# ----------------------------------------------------------------------------
def adaptive_avg_pool2d_3x3(x):
    """torch.nn.AdaptiveAvgPool2d((3,3)) on NCHW."""
    B, C, H, W = x.shape

    def edges(n):
        return [(int(math.floor(i * n / 3)), int(math.ceil((i + 1) * n / 3)))
                for i in range(3)]

    rows = []
    for h0, h1 in edges(H):
        cols = []
        for w0, w1 in edges(W):
            cols.append(jnp.mean(x[:, :, h0:h1, w0:w1], axis=(2, 3)))
        rows.append(jnp.stack(cols, axis=-1))
    return jnp.stack(rows, axis=-2)                  # (B, C, 3, 3)


def batchnorm1d_eval(x, p):
    """BatchNorm1d (eval mode, running stats) on (B, C, L)."""
    g = p["gamma"][None, :, None]
    b = p["beta"][None, :, None]
    m = p["mean"][None, :, None]
    v = p["var"][None, :, None]
    return (x - m) / jnp.sqrt(v + BN_EPS) * g + b


# ----------------------------------------------------------------------------
# Modules
# ----------------------------------------------------------------------------
def conv_plain(x, p, relu=False):
    """Plain 3x3 conv, padding=1, stride=1, bias; bias/ReLU fused in kernel."""
    OC, C = p["w"].shape[0], p["w"].shape[1]
    w_taps = jnp.transpose(p["w"].reshape(OC, C, 9), (2, 0, 1))      # (9, OC, C)
    w_taps = w_taps.reshape(1, 9, OC, C).astype(jnp.bfloat16)
    return conv3x3(x, w_taps, bias=p["b"], relu=relu)


def conv2d_cg(x, p, relu=False):
    """Conv2d_CG forward (kernel_size=3 path, ind=False)."""
    B, C, H, W = x.shape
    ks, OC = 3, C

    gl = adaptive_avg_pool2d_3x3(x).reshape(B, C, ks * ks)           # (B, C, 9)
    out = gl @ p["ce_w"].T                                           # (B, C, 5)

    w1 = jnp.einsum("ij,bjk->bik", p["aff1"], out)                   # (B, C, 5)
    w2 = jnp.einsum("ij,bjk->bik", p["aff2"], out)                   # (B, C, 5)
    affinity = jnp.einsum("bki,bkj->bij", w1, w2)                    # (B, 5, 5)
    out1 = jnp.einsum("bij,bcj->bic", affinity, out)                 # (B, 5, C)
    out3 = (out1 @ p["weight_g"]) @ p["weight_r"]                    # (B, 5, C)
    out4 = jnp.transpose(out3, (0, 2, 1))                            # (B, C, 5)
    out = out + out4 * out                                           # out + out_5
    ce2 = out

    out = jax.nn.relu(batchnorm1d_eval(out, p["ce_bn"]))
    out = out @ p["gd_w"].T                                          # (B, C, 9)

    g = 16 if (C // 16) else C
    if g > 3:
        t = batchnorm1d_eval(ce2, p["ci_bn2"]).reshape(B, C // g, g, -1)
        t = jnp.swapaxes(t, 2, 3)                                    # (B, C//g, 5, g)
        t = jax.nn.relu(t) @ p["ci_w"].T
        t = jnp.swapaxes(t, 2, 3)
    else:
        t = batchnorm1d_eval(ce2, p["ci_bn2"])
        t = jnp.swapaxes(t, 1, 2)                                    # (B, 5, C)
        t = jax.nn.relu(t) @ p["ci_w"].T                             # (B, 5, OC)
        t = jnp.swapaxes(t, 1, 2)
    oc_t = t.reshape(B, OC, -1)                                      # (B, OC, 5)
    oc_t = jax.nn.relu(batchnorm1d_eval(oc_t, p["ci_bn"]))
    oc_t = oc_t @ p["gd2_w"].T                                       # (B, OC, 9)

    att = jax.nn.sigmoid(out.reshape(B, 1, C, ks, ks)
                         + oc_t.reshape(B, OC, 1, ks, ks))           # (B, OC, C, 3, 3)
    dyn = (att * p["weight_conv"][None]).reshape(B, OC, C, ks * ks)
    dyn = jnp.transpose(dyn, (0, 3, 1, 2)).astype(jnp.bfloat16)      # (B, 9, OC, C)

    # Per-sample dynamic weights -> fused Pallas conv (no bias in this path).
    return conv3x3(x, dyn, bias=None, relu=relu)


def crab_layer(x, p, res_scale=1.0):
    y = conv2d_cg(x, p["cg1"], relu=True)          # ReLU fused in conv epilogue
    y = conv2d_cg(y, p["cg2"], relu=False)
    return y * res_scale + x


def rb_block(x, p, res_scale=1.0):
    y = conv_plain(x, p["conv1"], relu=True)       # ReLU fused in conv epilogue
    y = conv_plain(y, p["conv2"], relu=False)
    y = crab_layer(y, p["crab"])
    return y * res_scale + x


def residual_group(x, params):
    res = x
    for rbp in params["rbs"]:
        res = rb_block(res, rbp)
    res = conv_plain(res, params["tail"], relu=False)
    return res + x


# ----------------------------------------------------------------------------
# Deterministic parameter init (synthetic, kaiming-style scaling)
# ----------------------------------------------------------------------------
def kaiming(key, shape, fan_in):
    return jax.random.normal(key, shape, dtype=jnp.float32) * jnp.sqrt(2.0 / fan_in)


def bn_params(c):
    return dict(gamma=jnp.ones((c,), jnp.float32),
                beta=jnp.zeros((c,), jnp.float32),
                mean=jnp.zeros((c,), jnp.float32),
                var=jnp.ones((c,), jnp.float32))


def init_plain_conv(key, c):
    k1, k2 = jax.random.split(key)
    return dict(w=kaiming(k1, (c, c, 3, 3), c * 9),
                b=jax.random.normal(k2, (c,), jnp.float32) * 0.01)


def init_cg(key, c):
    ks, oc = 3, c
    num_lat = int(ks * ks / 2 + 1)          # 5
    g = 16 if (c // 16) else c
    ci_out = oc // (c // g)
    k = jax.random.split(key, 9)
    return dict(
        weight_g=kaiming(k[0], (c, c), c),
        weight_r=kaiming(k[1], (c, c), c),
        aff1=kaiming(k[2], (c, c), c),
        aff2=kaiming(k[3], (c, c), c),
        weight_conv=kaiming(k[4], (oc, c, ks, ks), c * ks * ks),
        ce_w=kaiming(k[5], (num_lat, ks * ks), ks * ks),
        gd_w=kaiming(k[6], (ks * ks, num_lat), num_lat),
        gd2_w=kaiming(k[7], (ks * ks, num_lat), num_lat),
        ci_w=kaiming(k[8], (ci_out, g), g),
        ce_bn=bn_params(c),
        ci_bn2=bn_params(c),
        ci_bn=bn_params(oc),
    )


def init_rb(key, c):
    k1, k2, k3, k4 = jax.random.split(key, 4)
    return dict(conv1=init_plain_conv(k1, c),
                conv2=init_plain_conv(k2, c),
                crab=dict(cg1=init_cg(k3, c), cg2=init_cg(k4, c)))


def init_residual_group(key, c, n_resblocks):
    keys = jax.random.split(key, n_resblocks + 1)
    return dict(rbs=[init_rb(keys[i], c) for i in range(n_resblocks)],
                tail=init_plain_conv(keys[-1], c))


# ----------------------------------------------------------------------------
if __name__ == "__main__":
    key = jax.random.PRNGKey(0)
    B, C, H, W = 2, 4, 16, 16
    n_resblocks = 2

    kx, kp = jax.random.split(key)
    x = jax.random.normal(kx, (B, C, H, W), jnp.float32)
    params = init_residual_group(kp, C, n_resblocks)

    forward = jax.jit(residual_group)
    y = forward(x, params)
    y = jax.block_until_ready(y)

    assert y.shape == (B, C, H, W), y.shape
    assert bool(jnp.all(jnp.isfinite(y)))
    print("KERNEL_OK")
</pallas_src>

<mosaic_0001>
module attributes {stable_mosaic.version = 11 : i64} {
  func.func @_conv3x3_kernel(%arg0: i32, %arg1: memref<1x9x4x4xbf16, #tpu.memory_space<vmem>>, %arg2: memref<1x4x342xbf16, #tpu.memory_space<vmem>>, %arg3: memref<1x4x1xf32, #tpu.memory_space<vmem>>, %arg4: memref<1x4x288xf32, #tpu.memory_space<vmem>>) attributes {dimension_semantics = [#tpu.dimension_semantics<parallel>], iteration_bounds = array<i64: 2>, scalar_prefetch = 0 : i64, scratch_operands = 0 : i64, tpu.core_type = #tpu.core_type<tc>, window_params = [{pipeline_mode = #tpu.pipeline_mode<synchronous>, transform_indices = @transform_0, window_bounds = array<i64: 1, 9, 4, 4>}, {transform_indices = @transform_1, window_bounds = array<i64: 1, 4, 342>}, {pipeline_mode = #tpu.pipeline_mode<synchronous>, transform_indices = @transform_2, window_bounds = array<i64: 1, 4, 1>}, {transform_indices = @transform_3, window_bounds = array<i64: 1, 4, 288>}]} {
    %cst = arith.constant 0.000000e+00 : f32
    %0 = vector.broadcast %cst : f32 to vector<4x288xf32>
    %c0 = arith.constant 0 : index
    %c0_0 = arith.constant 0 : index
    %c0_1 = arith.constant 0 : index
    %c0_2 = arith.constant 0 : index
    %1 = vector.load %arg1[%c0, %c0_0, %c0_1, %c0_2] : memref<1x9x4x4xbf16, #tpu.memory_space<vmem>>, vector<1x1x4x4xbf16>
    %2 = vector.shape_cast %1 : vector<1x1x4x4xbf16> to vector<4x4xbf16>
    %c0_3 = arith.constant 0 : index
    %c0_4 = arith.constant 0 : index
    %c0_5 = arith.constant 0 : index
    %3 = vector.load %arg2[%c0_3, %c0_4, %c0_5] : memref<1x4x342xbf16, #tpu.memory_space<vmem>>, vector<1x4x288xbf16>
    %4 = vector.shape_cast %3 : vector<1x4x288xbf16> to vector<4x288xbf16>
    %cst_6 = arith.constant dense<0.000000e+00> : vector<4x288xf32>
    %5 = tpu.matmul %2, %4, %cst_6 {dimension_numbers = #tpu.dot_dimension_numbers<[1], [0], [0], [1], [0, 0, 1, 1], [], []>} : vector<4x4xbf16>, vector<4x288xbf16>, vector<4x288xf32> -> vector<4x288xf32>
    %6 = arith.addf %0, %5 : vector<4x288xf32>
    %c0_7 = arith.constant 0 : index
    %c1 = arith.constant 1 : index
    %c0_8 = arith.constant 0 : index
    %c0_9 = arith.constant 0 : index
    %7 = vector.load %arg1[%c0_7, %c1, %c0_8, %c0_9] : memref<1x9x4x4xbf16, #tpu.memory_space<vmem>>, vector<1x1x4x4xbf16>
    %8 = vector.shape_cast %7 : vector<1x1x4x4xbf16> to vector<4x4xbf16>
    %c0_10 = arith.constant 0 : index
    %c0_11 = arith.constant 0 : index
    %c1_12 = arith.constant 1 : index
    %9 = vector.load %arg2[%c0_10, %c0_11, %c1_12] : memref<1x4x342xbf16, #tpu.memory_space<vmem>>, vector<1x4x288xbf16>
    %10 = vector.shape_cast %9 : vector<1x4x288xbf16> to vector<4x288xbf16>
    %cst_13 = arith.constant dense<0.000000e+00> : vector<4x288xf32>
    %11 = tpu.matmul %8, %10, %cst_13 {dimension_numbers = #tpu.dot_dimension_numbers<[1], [0], [0], [1], [0, 0, 1, 1], [], []>} : vector<4x4xbf16>, vector<4x288xbf16>, vector<4x288xf32> -> vector<4x288xf32>
    %12 = arith.addf %6, %11 : vector<4x288xf32>
    %c0_14 = arith.constant 0 : index
    %c2 = arith.constant 2 : index
    %c0_15 = arith.constant 0 : index
    %c0_16 = arith.constant 0 : index
    %13 = vector.load %arg1[%c0_14, %c2, %c0_15, %c0_16] : memref<1x9x4x4xbf16, #tpu.memory_space<vmem>>, vector<1x1x4x4xbf16>
    %14 = vector.shape_cast %13 : vector<1x1x4x4xbf16> to vector<4x4xbf16>
    %c0_17 = arith.constant 0 : index
    %c0_18 = arith.constant 0 : index
    %c2_19 = arith.constant 2 : index
    %15 = vector.load %arg2[%c0_17, %c0_18, %c2_19] : memref<1x4x342xbf16, #tpu.memory_space<vmem>>, vector<1x4x288xbf16>
    %16 = vector.shape_cast %15 : vector<1x4x288xbf16> to vector<4x288xbf16>
    %cst_20 = arith.constant dense<0.000000e+00> : vector<4x288xf32>
    %17 = tpu.matmul %14, %16, %cst_20 {dimension_numbers = #tpu.dot_dimension_numbers<[1], [0], [0], [1], [0, 0, 1, 1], [], []>} : vector<4x4xbf16>, vector<4x288xbf16>, vector<4x288xf32> -> vector<4x288xf32>
    %18 = arith.addf %12, %17 : vector<4x288xf32>
    %c0_21 = arith.constant 0 : index
    %c3 = arith.constant 3 : index
    %c0_22 = arith.constant 0 : index
    %c0_23 = arith.constant 0 : index
    %19 = vector.load %arg1[%c0_21, %c3, %c0_22, %c0_23] : memref<1x9x4x4xbf16, #tpu.memory_space<vmem>>, vector<1x1x4x4xbf16>
    %20 = vector.shape_cast %19 : vector<1x1x4x4xbf16> to vector<4x4xbf16>
    %c0_24 = arith.constant 0 : index
    %c0_25 = arith.constant 0 : index
    %c18 = arith.constant 18 : index
    %21 = vector.load %arg2[%c0_24, %c0_25, %c18] : memref<1x4x342xbf16, #tpu.memory_space<vmem>>, vector<1x4x288xbf16>
    %22 = vector.shape_cast %21 : vector<1x4x288xbf16> to vector<4x288xbf16>
    %cst_26 = arith.constant dense<0.000000e+00> : vector<4x288xf32>
    %23 = tpu.matmul %20, %22, %cst_26 {dimension_numbers = #tpu.dot_dimension_numbers<[1], [0], [0], [1], [0, 0, 1, 1], [], []>} : vector<4x4xbf16>, vector<4x288xbf16>, vector<4x288xf32> -> vector<4x288xf32>
    %24 = arith.addf %18, %23 : vector<4x288xf32>
    %c0_27 = arith.constant 0 : index
    %c4 = arith.constant 4 : index
    %c0_28 = arith.constant 0 : index
    %c0_29 = arith.constant 0 : index
    %25 = vector.load %arg1[%c0_27, %c4, %c0_28, %c0_29] : memref<1x9x4x4xbf16, #tpu.memory_space<vmem>>, vector<1x1x4x4xbf16>
    %26 = vector.shape_cast %25 : vector<1x1x4x4xbf16> to vector<4x4xbf16>
    %c0_30 = arith.constant 0 : index
    %c0_31 = arith.constant 0 : index
    %c19 = arith.constant 19 : index
    %27 = vector.load %arg2[%c0_30, %c0_31, %c19] : memref<1x4x342xbf16, #tpu.memory_space<vmem>>, vector<1x4x288xbf16>
    %28 = vector.shape_cast %27 : vector<1x4x288xbf16> to vector<4x288xbf16>
    %cst_32 = arith.constant dense<0.000000e+00> : vector<4x288xf32>
    %29 = tpu.matmul %26, %28, %cst_32 {dimension_numbers = #tpu.dot_dimension_numbers<[1], [0], [0], [1], [0, 0, 1, 1], [], []>} : vector<4x4xbf16>, vector<4x288xbf16>, vector<4x288xf32> -> vector<4x288xf32>
    %30 = arith.addf %24, %29 : vector<4x288xf32>
    %c0_33 = arith.constant 0 : index
    %c5 = arith.constant 5 : index
    %c0_34 = arith.constant 0 : index
    %c0_35 = arith.constant 0 : index
    %31 = vector.load %arg1[%c0_33, %c5, %c0_34, %c0_35] : memref<1x9x4x4xbf16, #tpu.memory_space<vmem>>, vector<1x1x4x4xbf16>
    %32 = vector.shape_cast %31 : vector<1x1x4x4xbf16> to vector<4x4xbf16>
    %c0_36 = arith.constant 0 : index
    %c0_37 = arith.constant 0 : index
    %c20 = arith.constant 20 : index
    %33 = vector.load %arg2[%c0_36, %c0_37, %c20] : memref<1x4x342xbf16, #tpu.memory_space<vmem>>, vector<1x4x288xbf16>
    %34 = vector.shape_cast %33 : vector<1x4x288xbf16> to vector<4x288xbf16>
    %cst_38 = arith.constant dense<0.000000e+00> : vector<4x288xf32>
    %35 = tpu.matmul %32, %34, %cst_38 {dimension_numbers = #tpu.dot_dimension_numbers<[1], [0], [0], [1], [0, 0, 1, 1], [], []>} : vector<4x4xbf16>, vector<4x288xbf16>, vector<4x288xf32> -> vector<4x288xf32>
    %36 = arith.addf %30, %35 : vector<4x288xf32>
    %c0_39 = arith.constant 0 : index
    %c6 = arith.constant 6 : index
    %c0_40 = arith.constant 0 : index
    %c0_41 = arith.constant 0 : index
    %37 = vector.load %arg1[%c0_39, %c6, %c0_40, %c0_41] : memref<1x9x4x4xbf16, #tpu.memory_space<vmem>>, vector<1x1x4x4xbf16>
    %38 = vector.shape_cast %37 : vector<1x1x4x4xbf16> to vector<4x4xbf16>
    %c0_42 = arith.constant 0 : index
    %c0_43 = arith.constant 0 : index
    %c36 = arith.constant 36 : index
    %39 = vector.load %arg2[%c0_42, %c0_43, %c36] : memref<1x4x342xbf16, #tpu.memory_space<vmem>>, vector<1x4x288xbf16>
    %40 = vector.shape_cast %39 : vector<1x4x288xbf16> to vector<4x288xbf16>
    %cst_44 = arith.constant dense<0.000000e+00> : vector<4x288xf32>
    %41 = tpu.matmul %38, %40, %cst_44 {dimension_numbers = #tpu.dot_dimension_numbers<[1], [0], [0], [1], [0, 0, 1, 1], [], []>} : vector<4x4xbf16>, vector<4x288xbf16>, vector<4x288xf32> -> vector<4x288xf32>
    %42 = arith.addf %36, %41 : vector<4x288xf32>
    %c0_45 = arith.constant 0 : index
    %c7 = arith.constant 7 : index
    %c0_46 = arith.constant 0 : index
    %c0_47 = arith.constant 0 : index
    %43 = vector.load %arg1[%c0_45, %c7, %c0_46, %c0_47] : memref<1x9x4x4xbf16, #tpu.memory_space<vmem>>, vector<1x1x4x4xbf16>
    %44 = vector.shape_cast %43 : vector<1x1x4x4xbf16> to vector<4x4xbf16>
    %c0_48 = arith.constant 0 : index
    %c0_49 = arith.constant 0 : index
    %c37 = arith.constant 37 : index
    %45 = vector.load %arg2[%c0_48, %c0_49, %c37] : memref<1x4x342xbf16, #tpu.memory_space<vmem>>, vector<1x4x288xbf16>
    %46 = vector.shape_cast %45 : vector<1x4x288xbf16> to vector<4x288xbf16>
    %cst_50 = arith.constant dense<0.000000e+00> : vector<4x288xf32>
    %47 = tpu.matmul %44, %46, %cst_50 {dimension_numbers = #tpu.dot_dimension_numbers<[1], [0], [0], [1], [0, 0, 1, 1], [], []>} : vector<4x4xbf16>, vector<4x288xbf16>, vector<4x288xf32> -> vector<4x288xf32>
    %48 = arith.addf %42, %47 : vector<4x288xf32>
    %c0_51 = arith.constant 0 : index
    %c8 = arith.constant 8 : index
    %c0_52 = arith.constant 0 : index
    %c0_53 = arith.constant 0 : index
    %49 = vector.load %arg1[%c0_51, %c8, %c0_52, %c0_53] : memref<1x9x4x4xbf16, #tpu.memory_space<vmem>>, vector<1x1x4x4xbf16>
    %50 = vector.shape_cast %49 : vector<1x1x4x4xbf16> to vector<4x4xbf16>
    %c0_54 = arith.constant 0 : index
    %c0_55 = arith.constant 0 : index
    %c38 = arith.constant 38 : index
    %51 = vector.load %arg2[%c0_54, %c0_55, %c38] : memref<1x4x342xbf16, #tpu.memory_space<vmem>>, vector<1x4x288xbf16>
    %52 = vector.shape_cast %51 : vector<1x4x288xbf16> to vector<4x288xbf16>
    %cst_56 = arith.constant dense<0.000000e+00> : vector<4x288xf32>
    %53 = tpu.matmul %50, %52, %cst_56 {dimension_numbers = #tpu.dot_dimension_numbers<[1], [0], [0], [1], [0, 0, 1, 1], [], []>} : vector<4x4xbf16>, vector<4x288xbf16>, vector<4x288xf32> -> vector<4x288xf32>
    %54 = arith.addf %48, %53 : vector<4x288xf32>
    %c0_57 = arith.constant 0 : index
    %c0_58 = arith.constant 0 : index
    %c0_59 = arith.constant 0 : index
    %55 = vector.load %arg3[%c0_57, %c0_58, %c0_59] : memref<1x4x1xf32, #tpu.memory_space<vmem>>, vector<1x4x1xf32>
    %56 = vector.shape_cast %55 : vector<1x4x1xf32> to vector<4x1xf32>
    %57 = vector.broadcast %56 : vector<4x1xf32> to vector<4x288xf32>
    %58 = arith.addf %54, %57 : vector<4x288xf32>
    %cst_60 = arith.constant 0.000000e+00 : f32
    %59 = vector.broadcast %cst_60 : f32 to vector<4x288xf32>
    %60 = arith.maximumf %58, %59 : vector<4x288xf32>
    %c0_61 = arith.constant 0 : index
    %c0_62 = arith.constant 0 : index
    %c0_63 = arith.constant 0 : index
    %61 = vector.load %arg4[%c0_61, %c0_62, %c0_63] : memref<1x4x288xf32, #tpu.memory_space<vmem>>, vector<1x4x288xf32>
    %62 = vector.shape_cast %61 : vector<1x4x288xf32> to vector<4x288xf32>
    %63 = vector.shape_cast %60 : vector<4x288xf32> to vector<1x4x288xf32>
    tpu.vector_store %arg4[%c0_61, %c0_62, %c0_63], %63 {strides = array<i32>} : memref<1x4x288xf32, #tpu.memory_space<vmem>>, vector<1x4x288xf32>,
    return
  }
  func.func @transform_0(%arg0: i32) -> (i32, i32, i32, i32) {
    %c0_i32 = arith.constant 0 : i32
    %c0_i32_0 = arith.constant 0 : i32
    %c0_i32_1 = arith.constant 0 : i32
    %c0_i32_2 = arith.constant 0 : i32
    %c0_i32_3 = arith.constant 0 : i32
    return %c0_i32, %c0_i32_0, %c0_i32_1, %c0_i32_2 : i32, i32, i32, i32
  }
  func.func @transform_1(%arg0: i32) -> (i32, i32, i32) {
    %c0_i32 = arith.constant 0 : i32
    %c0_i32_0 = arith.constant 0 : i32
    %c0_i32_1 = arith.constant 0 : i32
    return %arg0, %c0_i32, %c0_i32_0 : i32, i32, i32
  }
  func.func @transform_2(%arg0: i32) -> (i32, i32, i32) {
    %c0_i32 = arith.constant 0 : i32
    %c0_i32_0 = arith.constant 0 : i32
    %c0_i32_1 = arith.constant 0 : i32
    %c0_i32_2 = arith.constant 0 : i32
    return %c0_i32, %c0_i32_0, %c0_i32_1 : i32, i32, i32
  }
  func.func @transform_3(%arg0: i32) -> (i32, i32, i32) {
    %c0_i32 = arith.constant 0 : i32
    %c0_i32_0 = arith.constant 0 : i32
    %c0_i32_1 = arith.constant 0 : i32
    return %arg0, %c0_i32, %c0_i32_0 : i32, i32, i32
  }
}

module attributes {stable_mosaic.version = 11 : i64} {
  func.func @_conv3x3_kernel(%arg0: i32, %arg1: memref<1x9x4x4xbf16, #tpu.memory_space<vmem>>, %arg2: memref<1x4x342xbf16, #tpu.memory_space<vmem>>, %arg3: memref<1x4x1xf32, #tpu.memory_space<vmem>>, %arg4: memref<1x4x288xf32, #tpu.memory_space<vmem>>) attributes {dimension_semantics = [#tpu.dimension_semantics<parallel>], iteration_bounds = array<i64: 2>, scalar_prefetch = 0 : i64, scratch_operands = 0 : i64, tpu.core_type = #tpu.core_type<tc>, window_params = [{pipeline_mode = #tpu.pipeline_mode<synchronous>, transform_indices = @transform_0, window_bounds = array<i64: 1, 9, 4, 4>}, {transform_indices = @transform_1, window_bounds = array<i64: 1, 4, 342>}, {pipeline_mode = #tpu.pipeline_mode<synchronous>, transform_indices = @transform_2, window_bounds = array<i64: 1, 4, 1>}, {transform_indices = @transform_3, window_bounds = array<i64: 1, 4, 288>}]} {
    %cst = arith.constant 0.000000e+00 : f32
    %0 = vector.broadcast %cst : f32 to vector<4x288xf32>
    %c0 = arith.constant 0 : index
    %c0_0 = arith.constant 0 : index
    %c0_1 = arith.constant 0 : index
    %c0_2 = arith.constant 0 : index
    %1 = vector.load %arg1[%c0, %c0_0, %c0_1, %c0_2] : memref<1x9x4x4xbf16, #tpu.memory_space<vmem>>, vector<1x1x4x4xbf16>
    %2 = vector.shape_cast %1 : vector<1x1x4x4xbf16> to vector<4x4xbf16>
    %c0_3 = arith.constant 0 : index
    %c0_4 = arith.constant 0 : index
    %c0_5 = arith.constant 0 : index
    %3 = vector.load %arg2[%c0_3, %c0_4, %c0_5] : memref<1x4x342xbf16, #tpu.memory_space<vmem>>, vector<1x4x288xbf16>
    %4 = vector.shape_cast %3 : vector<1x4x288xbf16> to vector<4x288xbf16>
    %cst_6 = arith.constant dense<0.000000e+00> : vector<4x288xf32>
    %5 = tpu.matmul %2, %4, %cst_6 {dimension_numbers = #tpu.dot_dimension_numbers<[1], [0], [0], [1], [0, 0, 1, 1], [], []>} : vector<4x4xbf16>, vector<4x288xbf16>, vector<4x288xf32> -> vector<4x288xf32>
    %6 = arith.addf %0, %5 : vector<4x288xf32>
    %c0_7 = arith.constant 0 : index
    %c1 = arith.constant 1 : index
    %c0_8 = arith.constant 0 : index
    %c0_9 = arith.constant 0 : index
    %7 = vector.load %arg1[%c0_7, %c1, %c0_8, %c0_9] : memref<1x9x4x4xbf16, #tpu.memory_space<vmem>>, vector<1x1x4x4xbf16>
    %8 = vector.shape_cast %7 : vector<1x1x4x4xbf16> to vector<4x4xbf16>
    %c0_10 = arith.constant 0 : index
    %c0_11 = arith.constant 0 : index
    %c1_12 = arith.constant 1 : index
    %9 = vector.load %arg2[%c0_10, %c0_11, %c1_12] : memref<1x4x342xbf16, #tpu.memory_space<vmem>>, vector<1x4x288xbf16>
    %10 = vector.shape_cast %9 : vector<1x4x288xbf16> to vector<4x288xbf16>
    %cst_13 = arith.constant dense<0.000000e+00> : vector<4x288xf32>
    %11 = tpu.matmul %8, %10, %cst_13 {dimension_numbers = #tpu.dot_dimension_numbers<[1], [0], [0], [1], [0, 0, 1, 1], [], []>} : vector<4x4xbf16>, vector<4x288xbf16>, vector<4x288xf32> -> vector<4x288xf32>
    %12 = arith.addf %6, %11 : vector<4x288xf32>
    %c0_14 = arith.constant 0 : index
    %c2 = arith.constant 2 : index
    %c0_15 = arith.constant 0 : index
    %c0_16 = arith.constant 0 : index
    %13 = vector.load %arg1[%c0_14, %c2, %c0_15, %c0_16] : memref<1x9x4x4xbf16, #tpu.memory_space<vmem>>, vector<1x1x4x4xbf16>
    %14 = vector.shape_cast %13 : vector<1x1x4x4xbf16> to vector<4x4xbf16>
    %c0_17 = arith.constant 0 : index
    %c0_18 = arith.constant 0 : index
    %c2_19 = arith.constant 2 : index
    %15 = vector.load %arg2[%c0_17, %c0_18, %c2_19] : memref<1x4x342xbf16, #tpu.memory_space<vmem>>, vector<1x4x288xbf16>
    %16 = vector.shape_cast %15 : vector<1x4x288xbf16> to vector<4x288xbf16>
    %cst_20 = arith.constant dense<0.000000e+00> : vector<4x288xf32>
    %17 = tpu.matmul %14, %16, %cst_20 {dimension_numbers = #tpu.dot_dimension_numbers<[1], [0], [0], [1], [0, 0, 1, 1], [], []>} : vector<4x4xbf16>, vector<4x288xbf16>, vector<4x288xf32> -> vector<4x288xf32>
    %18 = arith.addf %12, %17 : vector<4x288xf32>
    %c0_21 = arith.constant 0 : index
    %c3 = arith.constant 3 : index
    %c0_22 = arith.constant 0 : index
    %c0_23 = arith.constant 0 : index
    %19 = vector.load %arg1[%c0_21, %c3, %c0_22, %c0_23] : memref<1x9x4x4xbf16, #tpu.memory_space<vmem>>, vector<1x1x4x4xbf16>
    %20 = vector.shape_cast %19 : vector<1x1x4x4xbf16> to vector<4x4xbf16>
    %c0_24 = arith.constant 0 : index
    %c0_25 = arith.constant 0 : index
    %c18 = arith.constant 18 : index
    %21 = vector.load %arg2[%c0_24, %c0_25, %c18] : memref<1x4x342xbf16, #tpu.memory_space<vmem>>, vector<1x4x288xbf16>
    %22 = vector.shape_cast %21 : vector<1x4x288xbf16> to vector<4x288xbf16>
    %cst_26 = arith.constant dense<0.000000e+00> : vector<4x288xf32>
    %23 = tpu.matmul %20, %22, %cst_26 {dimension_numbers = #tpu.dot_dimension_numbers<[1], [0], [0], [1], [0, 0, 1, 1], [], []>} : vector<4x4xbf16>, vector<4x288xbf16>, vector<4x288xf32> -> vector<4x288xf32>
    %24 = arith.addf %18, %23 : vector<4x288xf32>
    %c0_27 = arith.constant 0 : index
    %c4 = arith.constant 4 : index
    %c0_28 = arith.constant 0 : index
    %c0_29 = arith.constant 0 : index
    %25 = vector.load %arg1[%c0_27, %c4, %c0_28, %c0_29] : memref<1x9x4x4xbf16, #tpu.memory_space<vmem>>, vector<1x1x4x4xbf16>
    %26 = vector.shape_cast %25 : vector<1x1x4x4xbf16> to vector<4x4xbf16>
    %c0_30 = arith.constant 0 : index
    %c0_31 = arith.constant 0 : index
    %c19 = arith.constant 19 : index
    %27 = vector.load %arg2[%c0_30, %c0_31, %c19] : memref<1x4x342xbf16, #tpu.memory_space<vmem>>, vector<1x4x288xbf16>
    %28 = vector.shape_cast %27 : vector<1x4x288xbf16> to vector<4x288xbf16>
    %cst_32 = arith.constant dense<0.000000e+00> : vector<4x288xf32>
    %29 = tpu.matmul %26, %28, %cst_32 {dimension_numbers = #tpu.dot_dimension_numbers<[1], [0], [0], [1], [0, 0, 1, 1], [], []>} : vector<4x4xbf16>, vector<4x288xbf16>, vector<4x288xf32> -> vector<4x288xf32>
    %30 = arith.addf %24, %29 : vector<4x288xf32>
    %c0_33 = arith.constant 0 : index
    %c5 = arith.constant 5 : index
    %c0_34 = arith.constant 0 : index
    %c0_35 = arith.constant 0 : index
    %31 = vector.load %arg1[%c0_33, %c5, %c0_34, %c0_35] : memref<1x9x4x4xbf16, #tpu.memory_space<vmem>>, vector<1x1x4x4xbf16>
    %32 = vector.shape_cast %31 : vector<1x1x4x4xbf16> to vector<4x4xbf16>
    %c0_36 = arith.constant 0 : index
    %c0_37 = arith.constant 0 : index
    %c20 = arith.constant 20 : index
    %33 = vector.load %arg2[%c0_36, %c0_37, %c20] : memref<1x4x342xbf16, #tpu.memory_space<vmem>>, vector<1x4x288xbf16>
    %34 = vector.shape_cast %33 : vector<1x4x288xbf16> to vector<4x288xbf16>
    %cst_38 = arith.constant dense<0.000000e+00> : vector<4x288xf32>
    %35 = tpu.matmul %32, %34, %cst_38 {dimension_numbers = #tpu.dot_dimension_numbers<[1], [0], [0], [1], [0, 0, 1, 1], [], []>} : vector<4x4xbf16>, vector<4x288xbf16>, vector<4x288xf32> -> vector<4x288xf32>
    %36 = arith.addf %30, %35 : vector<4x288xf32>
    %c0_39 = arith.constant 0 : index
    %c6 = arith.constant 6 : index
    %c0_40 = arith.constant 0 : index
    %c0_41 = arith.constant 0 : index
    %37 = vector.load %arg1[%c0_39, %c6, %c0_40, %c0_41] : memref<1x9x4x4xbf16, #tpu.memory_space<vmem>>, vector<1x1x4x4xbf16>
    %38 = vector.shape_cast %37 : vector<1x1x4x4xbf16> to vector<4x4xbf16>
    %c0_42 = arith.constant 0 : index
    %c0_43 = arith.constant 0 : index
    %c36 = arith.constant 36 : index
    %39 = vector.load %arg2[%c0_42, %c0_43, %c36] : memref<1x4x342xbf16, #tpu.memory_space<vmem>>, vector<1x4x288xbf16>
    %40 = vector.shape_cast %39 : vector<1x4x288xbf16> to vector<4x288xbf16>
    %cst_44 = arith.constant dense<0.000000e+00> : vector<4x288xf32>
    %41 = tpu.matmul %38, %40, %cst_44 {dimension_numbers = #tpu.dot_dimension_numbers<[1], [0], [0], [1], [0, 0, 1, 1], [], []>} : vector<4x4xbf16>, vector<4x288xbf16>, vector<4x288xf32> -> vector<4x288xf32>
    %42 = arith.addf %36, %41 : vector<4x288xf32>
    %c0_45 = arith.constant 0 : index
    %c7 = arith.constant 7 : index
    %c0_46 = arith.constant 0 : index
    %c0_47 = arith.constant 0 : index
    %43 = vector.load %arg1[%c0_45, %c7, %c0_46, %c0_47] : memref<1x9x4x4xbf16, #tpu.memory_space<vmem>>, vector<1x1x4x4xbf16>
    %44 = vector.shape_cast %43 : vector<1x1x4x4xbf16> to vector<4x4xbf16>
    %c0_48 = arith.constant 0 : index
    %c0_49 = arith.constant 0 : index
    %c37 = arith.constant 37 : index
    %45 = vector.load %arg2[%c0_48, %c0_49, %c37] : memref<1x4x342xbf16, #tpu.memory_space<vmem>>, vector<1x4x288xbf16>
    %46 = vector.shape_cast %45 : vector<1x4x288xbf16> to vector<4x288xbf16>
    %cst_50 = arith.constant dense<0.000000e+00> : vector<4x288xf32>
    %47 = tpu.matmul %44, %46, %cst_50 {dimension_numbers = #tpu.dot_dimension_numbers<[1], [0], [0], [1], [0, 0, 1, 1], [], []>} : vector<4x4xbf16>, vector<4x288xbf16>, vector<4x288xf32> -> vector<4x288xf32>
    %48 = arith.addf %42, %47 : vector<4x288xf32>
    %c0_51 = arith.constant 0 : index
    %c8 = arith.constant 8 : index
    %c0_52 = arith.constant 0 : index
    %c0_53 = arith.constant 0 : index
    %49 = vector.load %arg1[%c0_51, %c8, %c0_52, %c0_53] : memref<1x9x4x4xbf16, #tpu.memory_space<vmem>>, vector<1x1x4x4xbf16>
    %50 = vector.shape_cast %49 : vector<1x1x4x4xbf16> to vector<4x4xbf16>
    %c0_54 = arith.constant 0 : index
    %c0_55 = arith.constant 0 : index
    %c38 = arith.constant 38 : index
    %51 = vector.load %arg2[%c0_54, %c0_55, %c38] : memref<1x4x342xbf16, #tpu.memory_space<vmem>>, vector<1x4x288xbf16>
    %52 = vector.shape_cast %51 : vector<1x4x288xbf16> to vector<4x288xbf16>
    %cst_56 = arith.constant dense<0.000000e+00> : vector<4x288xf32>
    %53 = tpu.matmul %50, %52, %cst_56 {dimension_numbers = #tpu.dot_dimension_numbers<[1], [0], [0], [1], [0, 0, 1, 1], [], []>} : vector<4x4xbf16>, vector<4x288xbf16>, vector<4x288xf32> -> vector<4x288xf32>
    %54 = arith.addf %48, %53 : vector<4x288xf32>
    %c0_57 = arith.constant 0 : index
    %c0_58 = arith.constant 0 : index
    %c0_59 = arith.constant 0 : index
    %55 = vector.load %arg3[%c0_57, %c0_58, %c0_59] : memref<1x4x1xf32, #tpu.memory_space<vmem>>, vector<1x4x1xf32>
    %56 = vector.shape_cast %55 : vector<1x4x1xf32> to vector<4x1xf32>
    %57 = vector.broadcast %56 : vector<4x1xf32> to vector<4x288xf32>
    %58 = arith.addf %54, %57 : vector<4x288xf32>
    %c0_60 = arith.constant 0 : index
    %c0_61 = arith.constant 0 : index
    %c0_62 = arith.constant 0 : index
    %59 = vector.load %arg4[%c0_60, %c0_61, %c0_62] : memref<1x4x288xf32, #tpu.memory_space<vmem>>, vector<1x4x288xf32>
    %60 = vector.shape_cast %59 : vector<1x4x288xf32> to vector<4x288xf32>
    %61 = vector.shape_cast %58 : vector<4x288xf32> to vector<1x4x288xf32>
    tpu.vector_store %arg4[%c0_60, %c0_61, %c0_62], %61 {strides = array<i32>} : memref<1x4x288xf32, #tpu.memory_space<vmem>>, vector<1x4x288xf32>,
    return
  }
  func.func @transform_0(%arg0: i32) -> (i32, i32, i32, i32) {
    %c0_i32 = arith.constant 0 : i32
    %c0_i32_0 = arith.constant 0 : i32
    %c0_i32_1 = arith.constant 0 : i32
    %c0_i32_2 = arith.constant 0 : i32
    %c0_i32_3 = arith.constant 0 : i32
    return %c0_i32, %c0_i32_0, %c0_i32_1, %c0_i32_2 : i32, i32, i32, i32
  }
  func.func @transform_1(%arg0: i32) -> (i32, i32, i32) {
    %c0_i32 = arith.constant 0 : i32
    %c0_i32_0 = arith.constant 0 : i32
    %c0_i32_1 = arith.constant 0 : i32
    return %arg0, %c0_i32, %c0_i32_0 : i32, i32, i32
  }
  func.func @transform_2(%arg0: i32) -> (i32, i32, i32) {
    %c0_i32 = arith.constant 0 : i32
    %c0_i32_0 = arith.constant 0 : i32
    %c0_i32_1 = arith.constant 0 : i32
    %c0_i32_2 = arith.constant 0 : i32
    return %c0_i32, %c0_i32_0, %c0_i32_1 : i32, i32, i32
  }
  func.func @transform_3(%arg0: i32) -> (i32, i32, i32) {
    %c0_i32 = arith.constant 0 : i32
    %c0_i32_0 = arith.constant 0 : i32
    %c0_i32_1 = arith.constant 0 : i32
    return %arg0, %c0_i32, %c0_i32_0 : i32, i32, i32
  }
}

module attributes {stable_mosaic.version = 11 : i64} {
  func.func @_conv3x3_kernel(%arg0: i32, %arg1: memref<1x9x4x4xbf16, #tpu.memory_space<vmem>>, %arg2: memref<1x4x342xbf16, #tpu.memory_space<vmem>>, %arg3: memref<1x4x1xf32, #tpu.memory_space<vmem>>, %arg4: memref<1x4x288xf32, #tpu.memory_space<vmem>>) attributes {dimension_semantics = [#tpu.dimension_semantics<parallel>], iteration_bounds = array<i64: 2>, scalar_prefetch = 0 : i64, scratch_operands = 0 : i64, tpu.core_type = #tpu.core_type<tc>, window_params = [{transform_indices = @transform_0, window_bounds = array<i64: 1, 9, 4, 4>}, {transform_indices = @transform_1, window_bounds = array<i64: 1, 4, 342>}, {pipeline_mode = #tpu.pipeline_mode<synchronous>, transform_indices = @transform_2, window_bounds = array<i64: 1, 4, 1>}, {transform_indices = @transform_3, window_bounds = array<i64: 1, 4, 288>}]} {
    %cst = arith.constant 0.000000e+00 : f32
    %0 = vector.broadcast %cst : f32 to vector<4x288xf32>
    %c0 = arith.constant 0 : index
    %c0_0 = arith.constant 0 : index
    %c0_1 = arith.constant 0 : index
    %c0_2 = arith.constant 0 : index
    %1 = vector.load %arg1[%c0, %c0_0, %c0_1, %c0_2] : memref<1x9x4x4xbf16, #tpu.memory_space<vmem>>, vector<1x1x4x4xbf16>
    %2 = vector.shape_cast %1 : vector<1x1x4x4xbf16> to vector<4x4xbf16>
    %c0_3 = arith.constant 0 : index
    %c0_4 = arith.constant 0 : index
    %c0_5 = arith.constant 0 : index
    %3 = vector.load %arg2[%c0_3, %c0_4, %c0_5] : memref<1x4x342xbf16, #tpu.memory_space<vmem>>, vector<1x4x288xbf16>
    %4 = vector.shape_cast %3 : vector<1x4x288xbf16> to vector<4x288xbf16>
    %cst_6 = arith.constant dense<0.000000e+00> : vector<4x288xf32>
    %5 = tpu.matmul %2, %4, %cst_6 {dimension_numbers = #tpu.dot_dimension_numbers<[1], [0], [0], [1], [0, 0, 1, 1], [], []>} : vector<4x4xbf16>, vector<4x288xbf16>, vector<4x288xf32> -> vector<4x288xf32>
    %6 = arith.addf %0, %5 : vector<4x288xf32>
    %c0_7 = arith.constant 0 : index
    %c1 = arith.constant 1 : index
    %c0_8 = arith.constant 0 : index
    %c0_9 = arith.constant 0 : index
    %7 = vector.load %arg1[%c0_7, %c1, %c0_8, %c0_9] : memref<1x9x4x4xbf16, #tpu.memory_space<vmem>>, vector<1x1x4x4xbf16>
    %8 = vector.shape_cast %7 : vector<1x1x4x4xbf16> to vector<4x4xbf16>
    %c0_10 = arith.constant 0 : index
    %c0_11 = arith.constant 0 : index
    %c1_12 = arith.constant 1 : index
    %9 = vector.load %arg2[%c0_10, %c0_11, %c1_12] : memref<1x4x342xbf16, #tpu.memory_space<vmem>>, vector<1x4x288xbf16>
    %10 = vector.shape_cast %9 : vector<1x4x288xbf16> to vector<4x288xbf16>
    %cst_13 = arith.constant dense<0.000000e+00> : vector<4x288xf32>
    %11 = tpu.matmul %8, %10, %cst_13 {dimension_numbers = #tpu.dot_dimension_numbers<[1], [0], [0], [1], [0, 0, 1, 1], [], []>} : vector<4x4xbf16>, vector<4x288xbf16>, vector<4x288xf32> -> vector<4x288xf32>
    %12 = arith.addf %6, %11 : vector<4x288xf32>
    %c0_14 = arith.constant 0 : index
    %c2 = arith.constant 2 : index
    %c0_15 = arith.constant 0 : index
    %c0_16 = arith.constant 0 : index
    %13 = vector.load %arg1[%c0_14, %c2, %c0_15, %c0_16] : memref<1x9x4x4xbf16, #tpu.memory_space<vmem>>, vector<1x1x4x4xbf16>
    %14 = vector.shape_cast %13 : vector<1x1x4x4xbf16> to vector<4x4xbf16>
    %c0_17 = arith.constant 0 : index
    %c0_18 = arith.constant 0 : index
    %c2_19 = arith.constant 2 : index
    %15 = vector.load %arg2[%c0_17, %c0_18, %c2_19] : memref<1x4x342xbf16, #tpu.memory_space<vmem>>, vector<1x4x288xbf16>
    %16 = vector.shape_cast %15 : vector<1x4x288xbf16> to vector<4x288xbf16>
    %cst_20 = arith.constant dense<0.000000e+00> : vector<4x288xf32>
    %17 = tpu.matmul %14, %16, %cst_20 {dimension_numbers = #tpu.dot_dimension_numbers<[1], [0], [0], [1], [0, 0, 1, 1], [], []>} : vector<4x4xbf16>, vector<4x288xbf16>, vector<4x288xf32> -> vector<4x288xf32>
    %18 = arith.addf %12, %17 : vector<4x288xf32>
    %c0_21 = arith.constant 0 : index
    %c3 = arith.constant 3 : index
    %c0_22 = arith.constant 0 : index
    %c0_23 = arith.constant 0 : index
    %19 = vector.load %arg1[%c0_21, %c3, %c0_22, %c0_23] : memref<1x9x4x4xbf16, #tpu.memory_space<vmem>>, vector<1x1x4x4xbf16>
    %20 = vector.shape_cast %19 : vector<1x1x4x4xbf16> to vector<4x4xbf16>
    %c0_24 = arith.constant 0 : index
    %c0_25 = arith.constant 0 : index
    %c18 = arith.constant 18 : index
    %21 = vector.load %arg2[%c0_24, %c0_25, %c18] : memref<1x4x342xbf16, #tpu.memory_space<vmem>>, vector<1x4x288xbf16>
    %22 = vector.shape_cast %21 : vector<1x4x288xbf16> to vector<4x288xbf16>
    %cst_26 = arith.constant dense<0.000000e+00> : vector<4x288xf32>
    %23 = tpu.matmul %20, %22, %cst_26 {dimension_numbers = #tpu.dot_dimension_numbers<[1], [0], [0], [1], [0, 0, 1, 1], [], []>} : vector<4x4xbf16>, vector<4x288xbf16>, vector<4x288xf32> -> vector<4x288xf32>
    %24 = arith.addf %18, %23 : vector<4x288xf32>
    %c0_27 = arith.constant 0 : index
    %c4 = arith.constant 4 : index
    %c0_28 = arith.constant 0 : index
    %c0_29 = arith.constant 0 : index
    %25 = vector.load %arg1[%c0_27, %c4, %c0_28, %c0_29] : memref<1x9x4x4xbf16, #tpu.memory_space<vmem>>, vector<1x1x4x4xbf16>
    %26 = vector.shape_cast %25 : vector<1x1x4x4xbf16> to vector<4x4xbf16>
    %c0_30 = arith.constant 0 : index
    %c0_31 = arith.constant 0 : index
    %c19 = arith.constant 19 : index
    %27 = vector.load %arg2[%c0_30, %c0_31, %c19] : memref<1x4x342xbf16, #tpu.memory_space<vmem>>, vector<1x4x288xbf16>
    %28 = vector.shape_cast %27 : vector<1x4x288xbf16> to vector<4x288xbf16>
    %cst_32 = arith.constant dense<0.000000e+00> : vector<4x288xf32>
    %29 = tpu.matmul %26, %28, %cst_32 {dimension_numbers = #tpu.dot_dimension_numbers<[1], [0], [0], [1], [0, 0, 1, 1], [], []>} : vector<4x4xbf16>, vector<4x288xbf16>, vector<4x288xf32> -> vector<4x288xf32>
    %30 = arith.addf %24, %29 : vector<4x288xf32>
    %c0_33 = arith.constant 0 : index
    %c5 = arith.constant 5 : index
    %c0_34 = arith.constant 0 : index
    %c0_35 = arith.constant 0 : index
    %31 = vector.load %arg1[%c0_33, %c5, %c0_34, %c0_35] : memref<1x9x4x4xbf16, #tpu.memory_space<vmem>>, vector<1x1x4x4xbf16>
    %32 = vector.shape_cast %31 : vector<1x1x4x4xbf16> to vector<4x4xbf16>
    %c0_36 = arith.constant 0 : index
    %c0_37 = arith.constant 0 : index
    %c20 = arith.constant 20 : index
    %33 = vector.load %arg2[%c0_36, %c0_37, %c20] : memref<1x4x342xbf16, #tpu.memory_space<vmem>>, vector<1x4x288xbf16>
    %34 = vector.shape_cast %33 : vector<1x4x288xbf16> to vector<4x288xbf16>
    %cst_38 = arith.constant dense<0.000000e+00> : vector<4x288xf32>
    %35 = tpu.matmul %32, %34, %cst_38 {dimension_numbers = #tpu.dot_dimension_numbers<[1], [0], [0], [1], [0, 0, 1, 1], [], []>} : vector<4x4xbf16>, vector<4x288xbf16>, vector<4x288xf32> -> vector<4x288xf32>
    %36 = arith.addf %30, %35 : vector<4x288xf32>
    %c0_39 = arith.constant 0 : index
    %c6 = arith.constant 6 : index
    %c0_40 = arith.constant 0 : index
    %c0_41 = arith.constant 0 : index
    %37 = vector.load %arg1[%c0_39, %c6, %c0_40, %c0_41] : memref<1x9x4x4xbf16, #tpu.memory_space<vmem>>, vector<1x1x4x4xbf16>
    %38 = vector.shape_cast %37 : vector<1x1x4x4xbf16> to vector<4x4xbf16>
    %c0_42 = arith.constant 0 : index
    %c0_43 = arith.constant 0 : index
    %c36 = arith.constant 36 : index
    %39 = vector.load %arg2[%c0_42, %c0_43, %c36] : memref<1x4x342xbf16, #tpu.memory_space<vmem>>, vector<1x4x288xbf16>
    %40 = vector.shape_cast %39 : vector<1x4x288xbf16> to vector<4x288xbf16>
    %cst_44 = arith.constant dense<0.000000e+00> : vector<4x288xf32>
    %41 = tpu.matmul %38, %40, %cst_44 {dimension_numbers = #tpu.dot_dimension_numbers<[1], [0], [0], [1], [0, 0, 1, 1], [], []>} : vector<4x4xbf16>, vector<4x288xbf16>, vector<4x288xf32> -> vector<4x288xf32>
    %42 = arith.addf %36, %41 : vector<4x288xf32>
    %c0_45 = arith.constant 0 : index
    %c7 = arith.constant 7 : index
    %c0_46 = arith.constant 0 : index
    %c0_47 = arith.constant 0 : index
    %43 = vector.load %arg1[%c0_45, %c7, %c0_46, %c0_47] : memref<1x9x4x4xbf16, #tpu.memory_space<vmem>>, vector<1x1x4x4xbf16>
    %44 = vector.shape_cast %43 : vector<1x1x4x4xbf16> to vector<4x4xbf16>
    %c0_48 = arith.constant 0 : index
    %c0_49 = arith.constant 0 : index
    %c37 = arith.constant 37 : index
    %45 = vector.load %arg2[%c0_48, %c0_49, %c37] : memref<1x4x342xbf16, #tpu.memory_space<vmem>>, vector<1x4x288xbf16>
    %46 = vector.shape_cast %45 : vector<1x4x288xbf16> to vector<4x288xbf16>
    %cst_50 = arith.constant dense<0.000000e+00> : vector<4x288xf32>
    %47 = tpu.matmul %44, %46, %cst_50 {dimension_numbers = #tpu.dot_dimension_numbers<[1], [0], [0], [1], [0, 0, 1, 1], [], []>} : vector<4x4xbf16>, vector<4x288xbf16>, vector<4x288xf32> -> vector<4x288xf32>
    %48 = arith.addf %42, %47 : vector<4x288xf32>
    %c0_51 = arith.constant 0 : index
    %c8 = arith.constant 8 : index
    %c0_52 = arith.constant 0 : index
    %c0_53 = arith.constant 0 : index
    %49 = vector.load %arg1[%c0_51, %c8, %c0_52, %c0_53] : memref<1x9x4x4xbf16, #tpu.memory_space<vmem>>, vector<1x1x4x4xbf16>
    %50 = vector.shape_cast %49 : vector<1x1x4x4xbf16> to vector<4x4xbf16>
    %c0_54 = arith.constant 0 : index
    %c0_55 = arith.constant 0 : index
    %c38 = arith.constant 38 : index
    %51 = vector.load %arg2[%c0_54, %c0_55, %c38] : memref<1x4x342xbf16, #tpu.memory_space<vmem>>, vector<1x4x288xbf16>
    %52 = vector.shape_cast %51 : vector<1x4x288xbf16> to vector<4x288xbf16>
    %cst_56 = arith.constant dense<0.000000e+00> : vector<4x288xf32>
    %53 = tpu.matmul %50, %52, %cst_56 {dimension_numbers = #tpu.dot_dimension_numbers<[1], [0], [0], [1], [0, 0, 1, 1], [], []>} : vector<4x4xbf16>, vector<4x288xbf16>, vector<4x288xf32> -> vector<4x288xf32>
    %54 = arith.addf %48, %53 : vector<4x288xf32>
    %c0_57 = arith.constant 0 : index
    %c0_58 = arith.constant 0 : index
    %c0_59 = arith.constant 0 : index
    %55 = vector.load %arg3[%c0_57, %c0_58, %c0_59] : memref<1x4x1xf32, #tpu.memory_space<vmem>>, vector<1x4x1xf32>
    %56 = vector.shape_cast %55 : vector<1x4x1xf32> to vector<4x1xf32>
    %57 = vector.broadcast %56 : vector<4x1xf32> to vector<4x288xf32>
    %58 = arith.addf %54, %57 : vector<4x288xf32>
    %cst_60 = arith.constant 0.000000e+00 : f32
    %59 = vector.broadcast %cst_60 : f32 to vector<4x288xf32>
    %60 = arith.maximumf %58, %59 : vector<4x288xf32>
    %c0_61 = arith.constant 0 : index
    %c0_62 = arith.constant 0 : index
    %c0_63 = arith.constant 0 : index
    %61 = vector.load %arg4[%c0_61, %c0_62, %c0_63] : memref<1x4x288xf32, #tpu.memory_space<vmem>>, vector<1x4x288xf32>
    %62 = vector.shape_cast %61 : vector<1x4x288xf32> to vector<4x288xf32>
    %63 = vector.shape_cast %60 : vector<4x288xf32> to vector<1x4x288xf32>
    tpu.vector_store %arg4[%c0_61, %c0_62, %c0_63], %63 {strides = array<i32>} : memref<1x4x288xf32, #tpu.memory_space<vmem>>, vector<1x4x288xf32>,
    return
  }
  func.func @transform_0(%arg0: i32) -> (i32, i32, i32, i32) {
    %c0_i32 = arith.constant 0 : i32
    %c0_i32_0 = arith.constant 0 : i32
    %c0_i32_1 = arith.constant 0 : i32
    %c0_i32_2 = arith.constant 0 : i32
    return %arg0, %c0_i32, %c0_i32_0, %c0_i32_1 : i32, i32, i32, i32
  }
  func.func @transform_1(%arg0: i32) -> (i32, i32, i32) {
    %c0_i32 = arith.constant 0 : i32
    %c0_i32_0 = arith.constant 0 : i32
    %c0_i32_1 = arith.constant 0 : i32
    return %arg0, %c0_i32, %c0_i32_0 : i32, i32, i32
  }
  func.func @transform_2(%arg0: i32) -> (i32, i32, i32) {
    %c0_i32 = arith.constant 0 : i32
    %c0_i32_0 = arith.constant 0 : i32
    %c0_i32_1 = arith.constant 0 : i32
    %c0_i32_2 = arith.constant 0 : i32
    return %c0_i32, %c0_i32_0, %c0_i32_1 : i32, i32, i32
  }
  func.func @transform_3(%arg0: i32) -> (i32, i32, i32) {
    %c0_i32 = arith.constant 0 : i32
    %c0_i32_0 = arith.constant 0 : i32
    %c0_i32_1 = arith.constant 0 : i32
    return %arg0, %c0_i32, %c0_i32_0 : i32, i32, i32
  }
}

module attributes {stable_mosaic.version = 11 : i64} {
  func.func @_conv3x3_kernel(%arg0: i32, %arg1: memref<1x9x4x4xbf16, #tpu.memory_space<vmem>>, %arg2: memref<1x4x342xbf16, #tpu.memory_space<vmem>>, %arg3: memref<1x4x1xf32, #tpu.memory_space<vmem>>, %arg4: memref<1x4x288xf32, #tpu.memory_space<vmem>>) attributes {dimension_semantics = [#tpu.dimension_semantics<parallel>], iteration_bounds = array<i64: 2>, scalar_prefetch = 0 : i64, scratch_operands = 0 : i64, tpu.core_type = #tpu.core_type<tc>, window_params = [{transform_indices = @transform_0, window_bounds = array<i64: 1, 9, 4, 4>}, {transform_indices = @transform_1, window_bounds = array<i64: 1, 4, 342>}, {pipeline_mode = #tpu.pipeline_mode<synchronous>, transform_indices = @transform_2, window_bounds = array<i64: 1, 4, 1>}, {transform_indices = @transform_3, window_bounds = array<i64: 1, 4, 288>}]} {
    %cst = arith.constant 0.000000e+00 : f32
    %0 = vector.broadcast %cst : f32 to vector<4x288xf32>
    %c0 = arith.constant 0 : index
    %c0_0 = arith.constant 0 : index
    %c0_1 = arith.constant 0 : index
    %c0_2 = arith.constant 0 : index
    %1 = vector.load %arg1[%c0, %c0_0, %c0_1, %c0_2] : memref<1x9x4x4xbf16, #tpu.memory_space<vmem>>, vector<1x1x4x4xbf16>
    %2 = vector.shape_cast %1 : vector<1x1x4x4xbf16> to vector<4x4xbf16>
    %c0_3 = arith.constant 0 : index
    %c0_4 = arith.constant 0 : index
    %c0_5 = arith.constant 0 : index
    %3 = vector.load %arg2[%c0_3, %c0_4, %c0_5] : memref<1x4x342xbf16, #tpu.memory_space<vmem>>, vector<1x4x288xbf16>
    %4 = vector.shape_cast %3 : vector<1x4x288xbf16> to vector<4x288xbf16>
    %cst_6 = arith.constant dense<0.000000e+00> : vector<4x288xf32>
    %5 = tpu.matmul %2, %4, %cst_6 {dimension_numbers = #tpu.dot_dimension_numbers<[1], [0], [0], [1], [0, 0, 1, 1], [], []>} : vector<4x4xbf16>, vector<4x288xbf16>, vector<4x288xf32> -> vector<4x288xf32>
    %6 = arith.addf %0, %5 : vector<4x288xf32>
    %c0_7 = arith.constant 0 : index
    %c1 = arith.constant 1 : index
    %c0_8 = arith.constant 0 : index
    %c0_9 = arith.constant 0 : index
    %7 = vector.load %arg1[%c0_7, %c1, %c0_8, %c0_9] : memref<1x9x4x4xbf16, #tpu.memory_space<vmem>>, vector<1x1x4x4xbf16>
    %8 = vector.shape_cast %7 : vector<1x1x4x4xbf16> to vector<4x4xbf16>
    %c0_10 = arith.constant 0 : index
    %c0_11 = arith.constant 0 : index
    %c1_12 = arith.constant 1 : index
    %9 = vector.load %arg2[%c0_10, %c0_11, %c1_12] : memref<1x4x342xbf16, #tpu.memory_space<vmem>>, vector<1x4x288xbf16>
    %10 = vector.shape_cast %9 : vector<1x4x288xbf16> to vector<4x288xbf16>
    %cst_13 = arith.constant dense<0.000000e+00> : vector<4x288xf32>
    %11 = tpu.matmul %8, %10, %cst_13 {dimension_numbers = #tpu.dot_dimension_numbers<[1], [0], [0], [1], [0, 0, 1, 1], [], []>} : vector<4x4xbf16>, vector<4x288xbf16>, vector<4x288xf32> -> vector<4x288xf32>
    %12 = arith.addf %6, %11 : vector<4x288xf32>
    %c0_14 = arith.constant 0 : index
    %c2 = arith.constant 2 : index
    %c0_15 = arith.constant 0 : index
    %c0_16 = arith.constant 0 : index
    %13 = vector.load %arg1[%c0_14, %c2, %c0_15, %c0_16] : memref<1x9x4x4xbf16, #tpu.memory_space<vmem>>, vector<1x1x4x4xbf16>
    %14 = vector.shape_cast %13 : vector<1x1x4x4xbf16> to vector<4x4xbf16>
    %c0_17 = arith.constant 0 : index
    %c0_18 = arith.constant 0 : index
    %c2_19 = arith.constant 2 : index
    %15 = vector.load %arg2[%c0_17, %c0_18, %c2_19] : memref<1x4x342xbf16, #tpu.memory_space<vmem>>, vector<1x4x288xbf16>
    %16 = vector.shape_cast %15 : vector<1x4x288xbf16> to vector<4x288xbf16>
    %cst_20 = arith.constant dense<0.000000e+00> : vector<4x288xf32>
    %17 = tpu.matmul %14, %16, %cst_20 {dimension_numbers = #tpu.dot_dimension_numbers<[1], [0], [0], [1], [0, 0, 1, 1], [], []>} : vector<4x4xbf16>, vector<4x288xbf16>, vector<4x288xf32> -> vector<4x288xf32>
    %18 = arith.addf %12, %17 : vector<4x288xf32>
    %c0_21 = arith.constant 0 : index
    %c3 = arith.constant 3 : index
    %c0_22 = arith.constant 0 : index
    %c0_23 = arith.constant 0 : index
    %19 = vector.load %arg1[%c0_21, %c3, %c0_22, %c0_23] : memref<1x9x4x4xbf16, #tpu.memory_space<vmem>>, vector<1x1x4x4xbf16>
    %20 = vector.shape_cast %19 : vector<1x1x4x4xbf16> to vector<4x4xbf16>
    %c0_24 = arith.constant 0 : index
    %c0_25 = arith.constant 0 : index
    %c18 = arith.constant 18 : index
    %21 = vector.load %arg2[%c0_24, %c0_25, %c18] : memref<1x4x342xbf16, #tpu.memory_space<vmem>>, vector<1x4x288xbf16>
    %22 = vector.shape_cast %21 : vector<1x4x288xbf16> to vector<4x288xbf16>
    %cst_26 = arith.constant dense<0.000000e+00> : vector<4x288xf32>
    %23 = tpu.matmul %20, %22, %cst_26 {dimension_numbers = #tpu.dot_dimension_numbers<[1], [0], [0], [1], [0, 0, 1, 1], [], []>} : vector<4x4xbf16>, vector<4x288xbf16>, vector<4x288xf32> -> vector<4x288xf32>
    %24 = arith.addf %18, %23 : vector<4x288xf32>
    %c0_27 = arith.constant 0 : index
    %c4 = arith.constant 4 : index
    %c0_28 = arith.constant 0 : index
    %c0_29 = arith.constant 0 : index
    %25 = vector.load %arg1[%c0_27, %c4, %c0_28, %c0_29] : memref<1x9x4x4xbf16, #tpu.memory_space<vmem>>, vector<1x1x4x4xbf16>
    %26 = vector.shape_cast %25 : vector<1x1x4x4xbf16> to vector<4x4xbf16>
    %c0_30 = arith.constant 0 : index
    %c0_31 = arith.constant 0 : index
    %c19 = arith.constant 19 : index
    %27 = vector.load %arg2[%c0_30, %c0_31, %c19] : memref<1x4x342xbf16, #tpu.memory_space<vmem>>, vector<1x4x288xbf16>
    %28 = vector.shape_cast %27 : vector<1x4x288xbf16> to vector<4x288xbf16>
    %cst_32 = arith.constant dense<0.000000e+00> : vector<4x288xf32>
    %29 = tpu.matmul %26, %28, %cst_32 {dimension_numbers = #tpu.dot_dimension_numbers<[1], [0], [0], [1], [0, 0, 1, 1], [], []>} : vector<4x4xbf16>, vector<4x288xbf16>, vector<4x288xf32> -> vector<4x288xf32>
    %30 = arith.addf %24, %29 : vector<4x288xf32>
    %c0_33 = arith.constant 0 : index
    %c5 = arith.constant 5 : index
    %c0_34 = arith.constant 0 : index
    %c0_35 = arith.constant 0 : index
    %31 = vector.load %arg1[%c0_33, %c5, %c0_34, %c0_35] : memref<1x9x4x4xbf16, #tpu.memory_space<vmem>>, vector<1x1x4x4xbf16>
    %32 = vector.shape_cast %31 : vector<1x1x4x4xbf16> to vector<4x4xbf16>
    %c0_36 = arith.constant 0 : index
    %c0_37 = arith.constant 0 : index
    %c20 = arith.constant 20 : index
    %33 = vector.load %arg2[%c0_36, %c0_37, %c20] : memref<1x4x342xbf16, #tpu.memory_space<vmem>>, vector<1x4x288xbf16>
    %34 = vector.shape_cast %33 : vector<1x4x288xbf16> to vector<4x288xbf16>
    %cst_38 = arith.constant dense<0.000000e+00> : vector<4x288xf32>
    %35 = tpu.matmul %32, %34, %cst_38 {dimension_numbers = #tpu.dot_dimension_numbers<[1], [0], [0], [1], [0, 0, 1, 1], [], []>} : vector<4x4xbf16>, vector<4x288xbf16>, vector<4x288xf32> -> vector<4x288xf32>
    %36 = arith.addf %30, %35 : vector<4x288xf32>
    %c0_39 = arith.constant 0 : index
    %c6 = arith.constant 6 : index
    %c0_40 = arith.constant 0 : index
    %c0_41 = arith.constant 0 : index
    %37 = vector.load %arg1[%c0_39, %c6, %c0_40, %c0_41] : memref<1x9x4x4xbf16, #tpu.memory_space<vmem>>, vector<1x1x4x4xbf16>
    %38 = vector.shape_cast %37 : vector<1x1x4x4xbf16> to vector<4x4xbf16>
    %c0_42 = arith.constant 0 : index
    %c0_43 = arith.constant 0 : index
    %c36 = arith.constant 36 : index
    %39 = vector.load %arg2[%c0_42, %c0_43, %c36] : memref<1x4x342xbf16, #tpu.memory_space<vmem>>, vector<1x4x288xbf16>
    %40 = vector.shape_cast %39 : vector<1x4x288xbf16> to vector<4x288xbf16>
    %cst_44 = arith.constant dense<0.000000e+00> : vector<4x288xf32>
    %41 = tpu.matmul %38, %40, %cst_44 {dimension_numbers = #tpu.dot_dimension_numbers<[1], [0], [0], [1], [0, 0, 1, 1], [], []>} : vector<4x4xbf16>, vector<4x288xbf16>, vector<4x288xf32> -> vector<4x288xf32>
    %42 = arith.addf %36, %41 : vector<4x288xf32>
    %c0_45 = arith.constant 0 : index
    %c7 = arith.constant 7 : index
    %c0_46 = arith.constant 0 : index
    %c0_47 = arith.constant 0 : index
    %43 = vector.load %arg1[%c0_45, %c7, %c0_46, %c0_47] : memref<1x9x4x4xbf16, #tpu.memory_space<vmem>>, vector<1x1x4x4xbf16>
    %44 = vector.shape_cast %43 : vector<1x1x4x4xbf16> to vector<4x4xbf16>
    %c0_48 = arith.constant 0 : index
    %c0_49 = arith.constant 0 : index
    %c37 = arith.constant 37 : index
    %45 = vector.load %arg2[%c0_48, %c0_49, %c37] : memref<1x4x342xbf16, #tpu.memory_space<vmem>>, vector<1x4x288xbf16>
    %46 = vector.shape_cast %45 : vector<1x4x288xbf16> to vector<4x288xbf16>
    %cst_50 = arith.constant dense<0.000000e+00> : vector<4x288xf32>
    %47 = tpu.matmul %44, %46, %cst_50 {dimension_numbers = #tpu.dot_dimension_numbers<[1], [0], [0], [1], [0, 0, 1, 1], [], []>} : vector<4x4xbf16>, vector<4x288xbf16>, vector<4x288xf32> -> vector<4x288xf32>
    %48 = arith.addf %42, %47 : vector<4x288xf32>
    %c0_51 = arith.constant 0 : index
    %c8 = arith.constant 8 : index
    %c0_52 = arith.constant 0 : index
    %c0_53 = arith.constant 0 : index
    %49 = vector.load %arg1[%c0_51, %c8, %c0_52, %c0_53] : memref<1x9x4x4xbf16, #tpu.memory_space<vmem>>, vector<1x1x4x4xbf16>
    %50 = vector.shape_cast %49 : vector<1x1x4x4xbf16> to vector<4x4xbf16>
    %c0_54 = arith.constant 0 : index
    %c0_55 = arith.constant 0 : index
    %c38 = arith.constant 38 : index
    %51 = vector.load %arg2[%c0_54, %c0_55, %c38] : memref<1x4x342xbf16, #tpu.memory_space<vmem>>, vector<1x4x288xbf16>
    %52 = vector.shape_cast %51 : vector<1x4x288xbf16> to vector<4x288xbf16>
    %cst_56 = arith.constant dense<0.000000e+00> : vector<4x288xf32>
    %53 = tpu.matmul %50, %52, %cst_56 {dimension_numbers = #tpu.dot_dimension_numbers<[1], [0], [0], [1], [0, 0, 1, 1], [], []>} : vector<4x4xbf16>, vector<4x288xbf16>, vector<4x288xf32> -> vector<4x288xf32>
    %54 = arith.addf %48, %53 : vector<4x288xf32>
    %c0_57 = arith.constant 0 : index
    %c0_58 = arith.constant 0 : index
    %c0_59 = arith.constant 0 : index
    %55 = vector.load %arg3[%c0_57, %c0_58, %c0_59] : memref<1x4x1xf32, #tpu.memory_space<vmem>>, vector<1x4x1xf32>
    %56 = vector.shape_cast %55 : vector<1x4x1xf32> to vector<4x1xf32>
    %57 = vector.broadcast %56 : vector<4x1xf32> to vector<4x288xf32>
    %58 = arith.addf %54, %57 : vector<4x288xf32>
    %c0_60 = arith.constant 0 : index
    %c0_61 = arith.constant 0 : index
    %c0_62 = arith.constant 0 : index
    %59 = vector.load %arg4[%c0_60, %c0_61, %c0_62] : memref<1x4x288xf32, #tpu.memory_space<vmem>>, vector<1x4x288xf32>
    %60 = vector.shape_cast %59 : vector<1x4x288xf32> to vector<4x288xf32>
    %61 = vector.shape_cast %58 : vector<4x288xf32> to vector<1x4x288xf32>
    tpu.vector_store %arg4[%c0_60, %c0_61, %c0_62], %61 {strides = array<i32>} : memref<1x4x288xf32, #tpu.memory_space<vmem>>, vector<1x4x288xf32>,
    return
  }
  func.func @transform_0(%arg0: i32) -> (i32, i32, i32, i32) {
    %c0_i32 = arith.constant 0 : i32
    %c0_i32_0 = arith.constant 0 : i32
    %c0_i32_1 = arith.constant 0 : i32
    %c0_i32_2 = arith.constant 0 : i32
    return %arg0, %c0_i32, %c0_i32_0, %c0_i32_1 : i32, i32, i32, i32
  }
  func.func @transform_1(%arg0: i32) -> (i32, i32, i32) {
    %c0_i32 = arith.constant 0 : i32
    %c0_i32_0 = arith.constant 0 : i32
    %c0_i32_1 = arith.constant 0 : i32
    return %arg0, %c0_i32, %c0_i32_0 : i32, i32, i32
  }
  func.func @transform_2(%arg0: i32) -> (i32, i32, i32) {
    %c0_i32 = arith.constant 0 : i32
    %c0_i32_0 = arith.constant 0 : i32
    %c0_i32_1 = arith.constant 0 : i32
    %c0_i32_2 = arith.constant 0 : i32
    return %c0_i32, %c0_i32_0, %c0_i32_1 : i32, i32, i32
  }
  func.func @transform_3(%arg0: i32) -> (i32, i32, i32) {
    %c0_i32 = arith.constant 0 : i32
    %c0_i32_0 = arith.constant 0 : i32
    %c0_i32_1 = arith.constant 0 : i32
    return %arg0, %c0_i32, %c0_i32_0 : i32, i32, i32
  }
}

</mosaic_0001>

<llo_original>
// kernel: residual_group.9
$region0: #{residual_group.9}
  #allocation0 [shape = 'u32[]', space=smem, size = 0x4, offset = 0x4, fixed_abs, tag = 'smem constant byte address 0x4 - core index']
  #allocation1 [shape = 'u32[144,128]{1,0:T(1,128)}', space=vmem, size = 0x12000, scoped, tag = 'internal scratch']
  %s0 = inlined_call_operand.vmem [shape: bf16[1,9,4,4], index: 0, kind: input, shape index: {}]
  %s1 = inlined_call_operand.vmem [shape: bf16[2,4,342], index: 1, kind: input, shape index: {}]
  %s2 = inlined_call_operand.vmem [shape: f32[1,4,1], index: 2, kind: input, shape index: {}]
  %s3 = inlined_call_operand.vmem [shape: f32[2,4,288], index: 3, kind: output, shape index: {}]
  %s4 = sld [smem:[#allocation0]]
  $region45: #{residual_group.9} parent=0
    _
  %s6 = ssub.s32 1, %s4
  %s7 = scalar_select 0, %s6, %s4
  loop: start=0, step=1, limit=4
  $region2: #{residual_group.9} parent=0 // loop_pre_header
    _
  $region3: #{residual_group.9} parent=0 // loop_header
    %s9 = sphi 0, %s13
    %p10 = scmp.ge.s32.totalorder %s9, 4
    %s17 = sphi 0, %s17
    %s19 = sphi 0, %s17
    %s20 = sphi 0, %s19
    %s34 = sphi 0, %s20
    %s40 = sphi 0, %s42
    %s43 = sphi 0, %s40
    %s44 = sphi 0, %s43
    %s60 = sphi 0, %s44
    %s64 = sphi 0, %s64
    %s66 = sphi 0, %s64
    %s67 = sphi 0, %s66
    %s81 = sphi 0, %s67
    %s87 = sphi 0, %s89
    %s90 = sphi 0, %s87
    %s91 = sphi 0, %s90
    %s107 = sphi 0, %s91
  $region4: #{residual_group.9} parent=0 // loop_header_branch
    %12 = sbr.rel (%p10) target = $region8
  $region5: #{residual_group.9} parent=0 // loop_body
    %s14 = ssub.s32 %s9, 1
    %s15 = ssub.s32 %s9, 2
    %s16 = sadd.s32 %s9, 1
    %s18 = sadd.s32 %s17, 1
    %p21 = scmp.eq.s32.totalorder %s9, 1
    %p22 = scmp.ne.s32.totalorder %s17, %s19
    %p23 = scmp.eq.s32.totalorder %s9, 0
    %p24 = por %p22, %p23
    %p25 = scmp.ne.s32.totalorder %s17, %s19
    %p26 = scmp.eq.s32.totalorder %s14, 1
    %p27 = por %p25, %p26
    %p28 = scmp.ne.s32.totalorder %s19, %s20
    %p29 = scmp.eq.s32.totalorder %s14, 0
    %p30 = por %p28, %p29
    %p31 = scmp.ne.s32.totalorder %s19, %s20
    %p32 = scmp.eq.s32.totalorder %s15, 1
    %p33 = por %p31, %p32
    %p35 = scmp.ne.s32.totalorder %s20, %s34
    %p36 = scmp.eq.s32.totalorder %s15, 0
    %p37 = por %p35, %p36
    %s38 = ssub.s32 %s9, %s16
    %p39 = scmp.eq.s32.totalorder %s38, 0
    %s41 = sadd.s32 %s40, 1
    %s42 = scalar_select %p39, %s40, %s41
    %p45 = pneg %p39
    %p46 = scmp.eq.s32.totalorder %s9, 1
    %p47 = por %p45, %p46
    %p48 = scmp.ne.s32.totalorder %s40, %s43
    %p49 = scmp.eq.s32.totalorder %s9, 0
    %p50 = por %p48, %p49
    %p51 = scmp.ne.s32.totalorder %s40, %s43
    %p52 = scmp.eq.s32.totalorder %s14, 1
    %p53 = por %p51, %p52
    %p54 = scmp.ne.s32.totalorder %s43, %s44
    %p55 = scmp.eq.s32.totalorder %s14, 0
    %p56 = por %p54, %p55
    %p57 = scmp.ne.s32.totalorder %s43, %s44
    %p58 = scmp.eq.s32.totalorder %s15, 1
    %p59 = por %p57, %p58
    %p61 = scmp.ne.s32.totalorder %s44, %s60
    %p62 = scmp.eq.s32.totalorder %s15, 0
    %p63 = por %p61, %p62
    %s65 = sadd.s32 %s64, 1
    %p68 = scmp.eq.s32.totalorder %s9, 1
    %p69 = scmp.ne.s32.totalorder %s64, %s66
    %p70 = scmp.eq.s32.totalorder %s9, 0
    %p71 = por %p69, %p70
    %p72 = scmp.ne.s32.totalorder %s64, %s66
    %p73 = scmp.eq.s32.totalorder %s14, 1
    %p74 = por %p72, %p73
    %p75 = scmp.ne.s32.totalorder %s66, %s67
    %p76 = scmp.eq.s32.totalorder %s14, 0
    %p77 = por %p75, %p76
    %p78 = scmp.ne.s32.totalorder %s66, %s67
    %p79 = scmp.eq.s32.totalorder %s15, 1
    %p80 = por %p78, %p79
    %p82 = scmp.ne.s32.totalorder %s67, %s81
    %p83 = scmp.eq.s32.totalorder %s15, 0
    %p84 = por %p82, %p83
    %s85 = ssub.s32 %s9, %s16
    %p86 = scmp.eq.s32.totalorder %s85, 0
    %s88 = sadd.s32 %s87, 1
    %s89 = scalar_select %p86, %s87, %s88
    %p92 = pneg %p86
    %p93 = scmp.eq.s32.totalorder %s9, 1
    %p94 = por %p92, %p93
    %p95 = scmp.ne.s32.totalorder %s87, %s90
    %p96 = scmp.eq.s32.totalorder %s9, 0
    %p97 = por %p95, %p96
    %p98 = scmp.ne.s32.totalorder %s87, %s90
    %p99 = scmp.eq.s32.totalorder %s14, 1
    %p100 = por %p98, %p99
    %p101 = scmp.ne.s32.totalorder %s90, %s91
    %p102 = scmp.eq.s32.totalorder %s14, 0
    %p103 = por %p101, %p102
    %p104 = scmp.ne.s32.totalorder %s90, %s91
    %p105 = scmp.eq.s32.totalorder %s15, 1
    %p106 = por %p104, %p105
    %p108 = scmp.ne.s32.totalorder %s91, %s107
    %p109 = scmp.eq.s32.totalorder %s15, 0
    %p110 = por %p108, %p109
    %p111 = scmp.le.s32.totalorder 1, %s9
    %p112 = scmp.lt.s32.totalorder %s9, 3
    %p113 = pnand %p111, %p112
    %p114 = pneg %p113
    // Predicated region
    $region9: #{residual_group.9} parent=5 // pred_check
      _
    $region10: #{residual_group.9} parent=5 // pred_check_branch
      %116 = sbr.rel (%p113) target = $region12
    $region11: #{residual_group.9} parent=5 // pred_region
      %s117 = ssub.s32 %s9, 1
      // Predicated region
      $region13: #{residual_group.9} parent=11 // pred_check
        %p118 = pneg %p30
      $region14: #{residual_group.9} parent=11 // pred_check_branch
        %120 = sbr.rel (%p118) target = $region16
      $region15: #{residual_group.9} parent=11 // pred_region
        _
      $region16: #{residual_group.9} parent=11 // pred_fallthru
        _
      // Predicated region
      $region17: #{residual_group.9} parent=11 // pred_check
        %p121 = pneg %p77
      $region18: #{residual_group.9} parent=11 // pred_check_branch
        %123 = sbr.rel (%p121) target = $region20
      $region19: #{residual_group.9} parent=11 // pred_region
        _
      $region20: #{residual_group.9} parent=11 // pred_fallthru
        _
    $region12: #{residual_group.9} parent=5 // pred_fallthru
      _
    %p124 = scmp.lt.s32.totalorder %s9, 2
    // Predicated region
    $region21: #{residual_group.9} parent=5 // pred_check
      %p125 = pneg %p124
    $region22: #{residual_group.9} parent=5 // pred_check_branch
      %127 = sbr.rel (%p125) target = $region24
    $region23: #{residual_group.9} parent=5 // pred_region
      // Predicated region
      $region25: #{residual_group.9} parent=23 // pred_check
        %p128 = pneg %p50
      $region26: #{residual_group.9} parent=23 // pred_check_branch
        %130 = sbr.rel (%p128) target = $region28
      $region27: #{residual_group.9} parent=23 // pred_region
        %p131 = scmp.lt.s32.totalorder %s9, 1
        %s132 = scalar_select %p131, %s9, 1
        %s133 = smul.addr %s132, 3
        %s134 = smul.addr %s133, 2
        %s135 = scalar_lea.vmem %s1, %s134
      $region28: #{residual_group.9} parent=23 // pred_fallthru
        _
    $region24: #{residual_group.9} parent=5 // pred_fallthru
      _
    %p136 = scmp.le.s32.totalorder 1, %s9
    %p137 = scmp.lt.s32.totalorder %s9, 3
    %p138 = pnand %p136, %p137
    %p139 = pneg %p138
    // Predicated region
    $region29: #{residual_group.9} parent=5 // pred_check
      _
    $region30: #{residual_group.9} parent=5 // pred_check_branch
      %141 = sbr.rel (%p138) target = $region32
    $region31: #{residual_group.9} parent=5 // pred_region
      %s142 = ssub.s32 %s9, 1
      %p143 = pneg %p30
      %p144 = pneg %p27
      %p145 = scmp.lt.s32.totalorder %s14, 1
      %s146 = scalar_select %p145, %s14, 1
      %s147 = smul.addr %s146, 3
      %s148 = smul.addr %s147, 2
      %s149 = scalar_lea.vmem %s1, %s148
      %p150 = pneg %p56
      %p151 = pneg %p53
      %p152 = pneg %p77
      %p153 = pneg %p74
      %p154 = pneg %p103
      %p155 = pneg %p100
      %p156 = scmp.lt.s32.totalorder %s14, 1
      %s157 = scalar_select %p156, %s14, 1
      %s158 = smul.addr %s157, 3
      %s159 = smul.addr %s158, 4
      %s160 = scalar_lea.vmem %s3, %s159
      %p161 = scmp.lt.s32.totalorder %s14, 1
      %s162 = scalar_select %p161, %s14, 1
      %s163 = smul.addr %s162, 3
      %s164 = smul.addr %s163, 2
      %s165 = scalar_lea.vmem %s1, %s164
      %p166 = scmp.lt.s32.totalorder %s14, 1
      %s167 = scalar_select %p166, %s14, 1
      %s168 = smul.addr %s167, 3
      %s169 = smul.addr %s168, 4
      %s170 = scalar_lea.vmem %s3, %s169
      %v172 = vld [vmem:[%s0] sm:$0x3]
      %v173 = vld [vmem:[%s165] sm:$0x3f]
      %s174 = scalar_lea.vmem %s0, 2
      %v175 = vld [vmem:[%s174] sm:$0x3]
      %v177 = vcombine.high %v173, %v173
      %v179 = vunpack.c.l.s4 1983009808
      %v180 = vunpack.c.0.s8 %v179
      %v181 = vlaneseq
      %v182 = vshrl.u32 %v181, 7
      %v183 = vsub.s32 %v180, %v182
      %v184 = vrot.slane %v173, %v183
      %v186 = vunpack.c.l.s4 1983009808
      %v187 = vunpack.c.0.s8 %v186
      %v188 = vlaneseq
      %v189 = vshrl.u32 %v188, 7
      %v190 = vsub.s32 %v187, %v189
      %v191 = vrot.slane %v177, %v190
      %v192 = vcombine.high %v184, %v184
      %193 = vrot.lane.b32.xlu0 %v184, 127
      %v194 = vpop.permute.xlu0 %193
      %195 = vrot.lane.b32.xlu0 %v192, 127
      %v196 = vpop.permute.xlu0 %195
      %197 = vrot.lane.b32.xlu0 %v191, 127
      %v198 = vpop.permute.xlu0 %197
      %vm199 = vcmask 1039360
      %v200 = vsel %vm199, %v194, %v196
      %v201 = vsel %vm199, %v196, %v198
      %vm202 = vcmask 31744
      %v204 = vsel %vm202, %v175, 0
      %vm206 = vcmask 1041408
      %v208 = vsel %vm206, %v200, 0
      %v211 = vsel %vm206, %v201, 0
      %v214 = vsel %vm206, %v198, 0
      %216 = vmatprep.subr.bf16.mxu0 0
      %217 = vmatpush1.bf16.msra.mxu0 0
      %218 = vmatprep.subr.bf16.mxu0 0
      %219 = vmatpush1.bf16.msra.mxu0 0
      %220 = vmatprep.subr.bf16.mxu0 0
      %221 = vmatpush1.bf16.msra.mxu0 0
      %222 = vmatprep.subr.bf16.mxu0 0
      %223 = vmatpush1.bf16.msra.mxu0 0
      %224 = vmatprep.subr.bf16.mxu0 0
      %225 = vmatpush1.bf16.msra.mxu0 0
      %226 = vmatprep.subr.bf16.mxu0 0
      %227 = vmatpush1.bf16.msra.mxu0 0
      %228 = vmatprep.subr.bf16.mxu0 0
      %229 = vmatpush1.bf16.msra.mxu0 0
      %230 = vmatprep.subr.bf16.mxu0 %v211
      %231 = vmatpush1.bf16.msra.mxu0 %v208
      %232 = vmatprep.subr.bf16.mxu0 0
      %233 = vmatpush2.bf16.msra.mxu0 0
      %234 = vmatprep.subr.bf16.mxu0 0
      %235 = vmatpush2.bf16.msra.mxu0 0
      %236 = vmatprep.subr.bf16.mxu0 0
      %237 = vmatpush2.bf16.msra.mxu0 0
      %238 = vmatprep.subr.bf16.mxu0 0
      %239 = vmatpush2.bf16.msra.mxu0 0
      %240 = vmatprep.subr.bf16.mxu0 0
      %241 = vmatpush2.bf16.msra.mxu0 0
      %242 = vmatprep.subr.bf16.mxu0 0
      %243 = vmatpush2.bf16.msra.mxu0 0
      %244 = vmatprep.subr.bf16.mxu0 0
      %245 = vmatpush2.bf16.msra.mxu0 0
      %246 = vmatprep.subr.bf16.mxu0 0
      %247 = vmatpush2.bf16.msra.mxu0 0
      %248 = vmatprep.mubr.bf16.mxu0 0
      %249 = vmatmul.mubr.bf16.gmra.mxu0 %v204
      %v250 = vpop.f32.mrf.mxu0
      %v251 = vadd.f32 0.0, %v250
      %v252 = vpop.f32.mrf.mxu0
      %v253 = vadd.f32 0.0, %v252
      %v254 = vpop.f32.mrf.mxu0
      %v255 = vpop.f32.mrf.mxu0
      %256 = vdwg.mxu0
      %257 = vmatprep.subr.bf16.mxu0 0
      %258 = vmatpush1.bf16.msra.mxu0 0
      %259 = vmatprep.subr.bf16.mxu0 0
      %260 = vmatpush1.bf16.msra.mxu0 0
      %261 = vmatprep.subr.bf16.mxu0 0
      %262 = vmatpush1.bf16.msra.mxu0 0
      %263 = vmatprep.subr.bf16.mxu0 0
      %264 = vmatpush1.bf16.msra.mxu0 0
      %265 = vmatprep.subr.bf16.mxu0 0
      %266 = vmatpush1.bf16.msra.mxu0 0
      %267 = vmatprep.subr.bf16.mxu0 0
      %268 = vmatpush1.bf16.msra.mxu0 0
      %269 = vmatprep.subr.bf16.mxu0 0
      %270 = vmatpush1.bf16.msra.mxu0 0
      %271 = vmatprep.subr.bf16.mxu0 0
      %272 = vmatpush1.bf16.msra.mxu0 %v214
      %273 = vmatprep.subr.bf16.mxu0 0
      %274 = vmatpush2.bf16.msra.mxu0 0
      %275 = vmatprep.subr.bf16.mxu0 0
      %276 = vmatpush2.bf16.msra.mxu0 0
      %277 = vmatprep.subr.bf16.mxu0 0
      %278 = vmatpush2.bf16.msra.mxu0 0
      %279 = vmatprep.subr.bf16.mxu0 0
      %280 = vmatpush2.bf16.msra.mxu0 0
      %281 = vmatprep.subr.bf16.mxu0 0
      %282 = vmatpush2.bf16.msra.mxu0 0
      %283 = vmatprep.subr.bf16.mxu0 0
      %284 = vmatpush2.bf16.msra.mxu0 0
      %285 = vmatprep.subr.bf16.mxu0 0
      %286 = vmatpush2.bf16.msra.mxu0 0
      %287 = vmatprep.subr.bf16.mxu0 0
      %288 = vmatpush2.bf16.msra.mxu0 0
      %289 = vmatprep.mubr.bf16.mxu0 0
      %290 = vmatmul.mubr.bf16.gmra.mxu0 %v204
      %v291 = vpop.f32.mrf.mxu0
      %v292 = vadd.f32 0.0, %v291
      %v293 = vpop.f32.mrf.mxu0
      %v294 = vpop.f32.mrf.mxu0
      %v295 = vpop.f32.mrf.mxu0
      %296 = vdwg.mxu0
      %v298 = vsel %vm202, %v172, 0
      %v301 = vsel %vm206, %v184, 0
      %v304 = vsel %vm206, %v192, 0
      %v307 = vsel %vm206, %v191, 0
      %309 = vmatprep.subr.bf16.mxu0 0
      %310 = vmatpush1.bf16.msra.mxu0 0
      %311 = vmatprep.subr.bf16.mxu0 0
      %312 = vmatpush1.bf16.msra.mxu0 0
      %313 = vmatprep.subr.bf16.mxu0 0
      %314 = vmatpush1.bf16.msra.mxu0 0
      %315 = vmatprep.subr.bf16.mxu0 0
      %316 = vmatpush1.bf16.msra.mxu0 0
      %317 = vmatprep.subr.bf16.mxu0 0
      %318 = vmatpush1.bf16.msra.mxu0 0
      %319 = vmatprep.subr.bf16.mxu0 0
      %320 = vmatpush1.bf16.msra.mxu0 0
      %321 = vmatprep.subr.bf16.mxu0 0
      %322 = vmatpush1.bf16.msra.mxu0 0
      %323 = vmatprep.subr.bf16.mxu0 %v304
      %324 = vmatpush1.bf16.msra.mxu0 %v301
      %325 = vmatprep.subr.bf16.mxu0 0
      %326 = vmatpush2.bf16.msra.mxu0 0
      %327 = vmatprep.subr.bf16.mxu0 0
      %328 = vmatpush2.bf16.msra.mxu0 0
      %329 = vmatprep.subr.bf16.mxu0 0
      %330 = vmatpush2.bf16.msra.mxu0 0
      %331 = vmatprep.subr.bf16.mxu0 0
      %332 = vmatpush2.bf16.msra.mxu0 0
      %333 = vmatprep.subr.bf16.mxu0 0
      %334 = vmatpush2.bf16.msra.mxu0 0
      %335 = vmatprep.subr.bf16.mxu0 0
      %336 = vmatpush2.bf16.msra.mxu0 0
      %337 = vmatprep.subr.bf16.mxu0 0
      %338 = vmatpush2.bf16.msra.mxu0 0
      %339 = vmatprep.subr.bf16.mxu0 0
      %340 = vmatpush2.bf16.msra.mxu0 0
      %341 = vmatprep.mubr.bf16.mxu0 0
      %342 = vmatmul.mubr.bf16.gmra.mxu0 %v298
      %v343 = vpop.f32.mrf.mxu0
      %v344 = vadd.f32 %v251, %v343
      %v345 = vpop.f32.mrf.mxu0
      %v346 = vadd.f32 %v253, %v345
      %v347 = vpop.f32.mrf.mxu0
      %v348 = vpop.f32.mrf.mxu0
      %349 = vdwg.mxu0
      %350 = vmatprep.subr.bf16.mxu0 0
      %351 = vmatpush1.bf16.msra.mxu0 0
      %352 = vmatprep.subr.bf16.mxu0 0
      %353 = vmatpush1.bf16.msra.mxu0 0
      %354 = vmatprep.subr.bf16.mxu0 0
      %355 = vmatpush1.bf16.msra.mxu0 0
      %356 = vmatprep.subr.bf16.mxu0 0
      %357 = vmatpush1.bf16.msra.mxu0 0
      %358 = vmatprep.subr.bf16.mxu0 0
      %359 = vmatpush1.bf16.msra.mxu0 0
      %360 = vmatprep.subr.bf16.mxu0 0
      %361 = vmatpush1.bf16.msra.mxu0 0
      %362 = vmatprep.subr.bf16.mxu0 0
      %363 = vmatpush1.bf16.msra.mxu0 0
      %364 = vmatprep.subr.bf16.mxu0 0
      %365 = vmatpush1.bf16.msra.mxu0 %v307
      %366 = vmatprep.subr.bf16.mxu0 0
      %367 = vmatpush2.bf16.msra.mxu0 0
      %368 = vmatprep.subr.bf16.mxu0 0
      %369 = vmatpush2.bf16.msra.mxu0 0
      %370 = vmatprep.subr.bf16.mxu0 0
      %371 = vmatpush2.bf16.msra.mxu0 0
      %372 = vmatprep.subr.bf16.mxu0 0
      %373 = vmatpush2.bf16.msra.mxu0 0
      %374 = vmatprep.subr.bf16.mxu0 0
      %375 = vmatpush2.bf16.msra.mxu0 0
      %376 = vmatprep.subr.bf16.mxu0 0
      %377 = vmatpush2.bf16.msra.mxu0 0
      %378 = vmatprep.subr.bf16.mxu0 0
      %379 = vmatpush2.bf16.msra.mxu0 0
      %380 = vmatprep.subr.bf16.mxu0 0
      %381 = vmatpush2.bf16.msra.mxu0 0
      %382 = vmatprep.mubr.bf16.mxu0 0
      %383 = vmatmul.mubr.bf16.gmra.mxu0 %v298
      %v384 = vpop.f32.mrf.mxu0
      %v385 = vadd.f32 %v292, %v384
      %v386 = vpop.f32.mrf.mxu0
      %v387 = vpop.f32.mrf.mxu0
      %v388 = vpop.f32.mrf.mxu0
      %389 = vdwg.mxu0
      %s390 = scalar_lea.vmem %s0, 4
      %v391 = vld [vmem:[%s390] sm:$0x3]
      %v392 = vld [vmem:[%s165] sm:$0x3f]
      %v394 = vcombine.high %v392, %v392
      %v396 = vunpack.c.l.s4 1983009808
      %v397 = vunpack.c.0.s8 %v396
      %v398 = vlaneseq
      %v399 = vshrl.u32 %v398, 7
      %v400 = vsub.s32 %v397, %v399
      %v401 = vrot.slane %v392, %v400
      %v403 = vunpack.c.l.s4 1983009808
      %v404 = vunpack.c.0.s8 %v403
      %v405 = vlaneseq
      %v406 = vshrl.u32 %v405, 7
      %v407 = vsub.s32 %v404, %v406
      %v408 = vrot.slane %v394, %v407
      %v409 = vcombine.high %v401, %v401
      %410 = vrot.lane.b32.xlu0 %v401, 126
      %v411 = vpop.permute.xlu0 %410
      %412 = vrot.lane.b32.xlu0 %v409, 126
      %v413 = vpop.permute.xlu0 %412
      %414 = vrot.lane.b32.xlu0 %v408, 126
      %v415 = vpop.permute.xlu0 %414
      %vm416 = vcmask 1031168
      %v417 = vsel %vm416, %v411, %v413
      %v418 = vsel %vm416, %v413, %v415
      %v420 = vsel %vm202, %v391, 0
      %v423 = vsel %vm206, %v417, 0
      %v426 = vsel %vm206, %v418, 0
      %v429 = vsel %vm206, %v415, 0
      %431 = vmatprep.subr.bf16.mxu0 0
      %432 = vmatpush1.bf16.msra.mxu0 0
      %433 = vmatprep.subr.bf16.mxu0 0
      %434 = vmatpush1.bf16.msra.mxu0 0
      %435 = vmatprep.subr.bf16.mxu0 0
      %436 = vmatpush1.bf16.msra.mxu0 0
      %437 = vmatprep.subr.bf16.mxu0 0
      %438 = vmatpush1.bf16.msra.mxu0 0
      %439 = vmatprep.subr.bf16.mxu0 0
      %440 = vmatpush1.bf16.msra.mxu0 0
      %441 = vmatprep.subr.bf16.mxu0 0
      %442 = vmatpush1.bf16.msra.mxu0 0
      %443 = vmatprep.subr.bf16.mxu0 0
      %444 = vmatpush1.bf16.msra.mxu0 0
      %445 = vmatprep.subr.bf16.mxu0 %v426
      %446 = vmatpush1.bf16.msra.mxu0 %v423
      %447 = vmatprep.subr.bf16.mxu0 0
      %448 = vmatpush2.bf16.msra.mxu0 0
      %449 = vmatprep.subr.bf16.mxu0 0
      %450 = vmatpush2.bf16.msra.mxu0 0
      %451 = vmatprep.subr.bf16.mxu0 0
      %452 = vmatpush2.bf16.msra.mxu0 0
      %453 = vmatprep.subr.bf16.mxu0 0
      %454 = vmatpush2.bf16.msra.mxu0 0
      %455 = vmatprep.subr.bf16.mxu0 0
      %456 = vmatpush2.bf16.msra.mxu0 0
      %457 = vmatprep.subr.bf16.mxu0 0
      %458 = vmatpush2.bf16.msra.mxu0 0
      %459 = vmatprep.subr.bf16.mxu0 0
      %460 = vmatpush2.bf16.msra.mxu0 0
      %461 = vmatprep.subr.bf16.mxu0 0
      %462 = vmatpush2.bf16.msra.mxu0 0
      %463 = vmatprep.mubr.bf16.mxu0 0
      %464 = vmatmul.mubr.bf16.gmra.mxu0 %v420
      %v465 = vpop.f32.mrf.mxu0
      %v466 = vadd.f32 0.0, %v465
      %v467 = vpop.f32.mrf.mxu0
      %v468 = vadd.f32 0.0, %v467
      %v469 = vpop.f32.mrf.mxu0
      %v470 = vpop.f32.mrf.mxu0
      %471 = vdwg.mxu0
      %472 = vmatprep.subr.bf16.mxu0 0
      %473 = vmatpush1.bf16.msra.mxu0 0
      %474 = vmatprep.subr.bf16.mxu0 0
      %475 = vmatpush1.bf16.msra.mxu0 0
      %476 = vmatprep.subr.bf16.mxu0 0
      %477 = vmatpush1.bf16.msra.mxu0 0
      %478 = vmatprep.subr.bf16.mxu0 0
      %479 = vmatpush1.bf16.msra.mxu0 0
      %480 = vmatprep.subr.bf16.mxu0 0
      %481 = vmatpush1.bf16.msra.mxu0 0
      %482 = vmatprep.subr.bf16.mxu0 0
      %483 = vmatpush1.bf16.msra.mxu0 0
      %484 = vmatprep.subr.bf16.mxu0 0
      %485 = vmatpush1.bf16.msra.mxu0 0
      %486 = vmatprep.subr.bf16.mxu0 0
      %487 = vmatpush1.bf16.msra.mxu0 %v429
      %488 = vmatprep.subr.bf16.mxu0 0
      %489 = vmatpush2.bf16.msra.mxu0 0
      %490 = vmatprep.subr.bf16.mxu0 0
      %491 = vmatpush2.bf16.msra.mxu0 0
      %492 = vmatprep.subr.bf16.mxu0 0
      %493 = vmatpush2.bf16.msra.mxu0 0
      %494 = vmatprep.subr.bf16.mxu0 0
      %495 = vmatpush2.bf16.msra.mxu0 0
      %496 = vmatprep.subr.bf16.mxu0 0
      %497 = vmatpush2.bf16.msra.mxu0 0
      %498 = vmatprep.subr.bf16.mxu0 0
      %499 = vmatpush2.bf16.msra.mxu0 0
      %500 = vmatprep.subr.bf16.mxu0 0
      %501 = vmatpush2.bf16.msra.mxu0 0
      %502 = vmatprep.subr.bf16.mxu0 0
      %503 = vmatpush2.bf16.msra.mxu0 0
      %504 = vmatprep.mubr.bf16.mxu0 0
      %505 = vmatmul.mubr.bf16.gmra.mxu0 %v420
      %v506 = vpop.f32.mrf.mxu0
      %v507 = vadd.f32 0.0, %v506
      %v508 = vpop.f32.mrf.mxu0
      %v509 = vpop.f32.mrf.mxu0
      %v510 = vpop.f32.mrf.mxu0
      %511 = vdwg.mxu0
      %v512 = vadd.f32 %v344, %v466
      %v513 = vadd.f32 %v346, %v468
      %v514 = vadd.f32 %v385, %v507
      %s515 = scalar_lea.vmem %s0, 6
      %v516 = vld [vmem:[%s515] sm:$0x3]
      %v517 = vld [vmem:[%s165] sm:$0x3f]
      %v519 = vcombine.high %v517, %v517
      %v521 = vunpack.c.l.s4 1983009808
      %v522 = vunpack.c.0.s8 %v521
      %v523 = vlaneseq
      %v524 = vshrl.u32 %v523, 7
      %v525 = vsub.s32 %v522, %v524
      %v526 = vrot.slane %v517, %v525
      %v528 = vunpack.c.l.s4 1983009808
      %v529 = vunpack.c.0.s8 %v528
      %v530 = vlaneseq
      %v531 = vshrl.u32 %v530, 7
      %v532 = vsub.s32 %v529, %v531
      %v533 = vrot.slane %v519, %v532
      %v534 = vcombine.high %v526, %v526
      %535 = vrot.lane.b32.xlu0 %v526, 110
      %v536 = vpop.permute.xlu0 %535
      %537 = vrot.lane.b32.xlu0 %v534, 110
      %v538 = vpop.permute.xlu0 %537
      %539 = vrot.lane.b32.xlu0 %v533, 110
      %v540 = vpop.permute.xlu0 %539
      %vm541 = vcmask 900096
      %v542 = vsel %vm541, %v536, %v538
      %v543 = vsel %vm541, %v538, %v540
      %v545 = vsel %vm202, %v516, 0
      %v548 = vsel %vm206, %v542, 0
      %v551 = vsel %vm206, %v543, 0
      %v554 = vsel %vm206, %v540, 0
      %556 = vmatprep.subr.bf16.mxu0 0
      %557 = vmatpush1.bf16.msra.mxu0 0
      %558 = vmatprep.subr.bf16.mxu0 0
      %559 = vmatpush1.bf16.msra.mxu0 0
      %560 = vmatprep.subr.bf16.mxu0 0
      %561 = vmatpush1.bf16.msra.mxu0 0
      %562 = vmatprep.subr.bf16.mxu0 0
      %563 = vmatpush1.bf16.msra.mxu0 0
      %564 = vmatprep.subr.bf16.mxu0 0
      %565 = vmatpush1.bf16.msra.mxu0 0
      %566 = vmatprep.subr.bf16.mxu0 0
      %567 = vmatpush1.bf16.msra.mxu0 0
      %568 = vmatprep.subr.bf16.mxu0 0
      %569 = vmatpush1.bf16.msra.mxu0 0
      %570 = vmatprep.subr.bf16.mxu0 %v551
      %571 = vmatpush1.bf16.msra.mxu0 %v548
      %572 = vmatprep.subr.bf16.mxu0 0
      %573 = vmatpush2.bf16.msra.mxu0 0
      %574 = vmatprep.subr.bf16.mxu0 0
      %575 = vmatpush2.bf16.msra.mxu0 0
      %576 = vmatprep.subr.bf16.mxu0 0
      %577 = vmatpush2.bf16.msra.mxu0 0
      %578 = vmatprep.subr.bf16.mxu0 0
      %579 = vmatpush2.bf16.msra.mxu0 0
      %580 = vmatprep.subr.bf16.mxu0 0
      %581 = vmatpush2.bf16.msra.mxu0 0
      %582 = vmatprep.subr.bf16.mxu0 0
      %583 = vmatpush2.bf16.msra.mxu0 0
      %584 = vmatprep.subr.bf16.mxu0 0
      %585 = vmatpush2.bf16.msra.mxu0 0
      %586 = vmatprep.subr.bf16.mxu0 0
      %587 = vmatpush2.bf16.msra.mxu0 0
      %588 = vmatprep.mubr.bf16.mxu0 0
      %589 = vmatmul.mubr.bf16.gmra.mxu0 %v545
      %v590 = vpop.f32.mrf.mxu0
      %v591 = vadd.f32 0.0, %v590
      %v592 = vpop.f32.mrf.mxu0
      %v593 = vadd.f32 0.0, %v592
      %v594 = vpop.f32.mrf.mxu0
      %v595 = vpop.f32.mrf.mxu0
      %596 = vdwg.mxu0
      %597 = vmatprep.subr.bf16.mxu0 0
      %598 = vmatpush1.bf16.msra.mxu0 0
      %599 = vmatprep.subr.bf16.mxu0 0
      %600 = vmatpush1.bf16.msra.mxu0 0
      %601 = vmatprep.subr.bf16.mxu0 0
      %602 = vmatpush1.bf16.msra.mxu0 0
      %603 = vmatprep.subr.bf16.mxu0 0
      %604 = vmatpush1.bf16.msra.mxu0 0
      %605 = vmatprep.subr.bf16.mxu0 0
      %606 = vmatpush1.bf16.msra.mxu0 0
      %607 = vmatprep.subr.bf16.mxu0 0
      %608 = vmatpush1.bf16.msra.mxu0 0
      %609 = vmatprep.subr.bf16.mxu0 0
      %610 = vmatpush1.bf16.msra.mxu0 0
      %611 = vmatprep.subr.bf16.mxu0 0
      %612 = vmatpush1.bf16.msra.mxu0 %v554
      %613 = vmatprep.subr.bf16.mxu0 0
      %614 = vmatpush2.bf16.msra.mxu0 0
      %615 = vmatprep.subr.bf16.mxu0 0
      %616 = vmatpush2.bf16.msra.mxu0 0
      %617 = vmatprep.subr.bf16.mxu0 0
      %618 = vmatpush2.bf16.msra.mxu0 0
      %619 = vmatprep.subr.bf16.mxu0 0
      %620 = vmatpush2.bf16.msra.mxu0 0
      %621 = vmatprep.subr.bf16.mxu0 0
      %622 = vmatpush2.bf16.msra.mxu0 0
      %623 = vmatprep.subr.bf16.mxu0 0
      %624 = vmatpush2.bf16.msra.mxu0 0
      %625 = vmatprep.subr.bf16.mxu0 0
      %626 = vmatpush2.bf16.msra.mxu0 0
      %627 = vmatprep.subr.bf16.mxu0 0
      %628 = vmatpush2.bf16.msra.mxu0 0
      %629 = vmatprep.mubr.bf16.mxu0 0
      %630 = vmatmul.mubr.bf16.gmra.mxu0 %v545
      %v631 = vpop.f32.mrf.mxu0
      %v632 = vadd.f32 0.0, %v631
      %v633 = vpop.f32.mrf.mxu0
      %v634 = vpop.f32.mrf.mxu0
      %v635 = vpop.f32.mrf.mxu0
      %636 = vdwg.mxu0
      %v637 = vadd.f32 %v512, %v591
      %v638 = vadd.f32 %v513, %v593
      %v639 = vadd.f32 %v514, %v632
      %s640 = scalar_lea.vmem %s0, 8
      %v641 = vld [vmem:[%s640] sm:$0x3]
      %v642 = vld [vmem:[%s165] sm:$0x3f]
      %v644 = vcombine.high %v642, %v642
      %v646 = vunpack.c.l.s4 1983009808
      %v647 = vunpack.c.0.s8 %v646
      %v648 = vlaneseq
      %v649 = vshrl.u32 %v648, 7
      %v650 = vsub.s32 %v647, %v649
      %v651 = vrot.slane %v642, %v650
      %v653 = vunpack.c.l.s4 1983009808
      %v654 = vunpack.c.0.s8 %v653
      %v655 = vlaneseq
      %v656 = vshrl.u32 %v655, 7
      %v657 = vsub.s32 %v654, %v656
      %v658 = vrot.slane %v644, %v657
      %v659 = vcombine.high %v651, %v651
      %660 = vrot.lane.b32.xlu0 %v651, 109
      %v661 = vpop.permute.xlu0 %660
      %662 = vrot.lane.b32.xlu0 %v659, 109
      %v663 = vpop.permute.xlu0 %662
      %664 = vrot.lane.b32.xlu0 %v658, 109
      %v665 = vpop.permute.xlu0 %664
      %vm666 = vcmask 891904
      %v667 = vsel %vm666, %v661, %v663
      %v668 = vsel %vm666, %v663, %v665
      %v670 = vsel %vm202, %v641, 0
      %v673 = vsel %vm206, %v667, 0
      %v676 = vsel %vm206, %v668, 0
      %v679 = vsel %vm206, %v665, 0
      %681 = vmatprep.subr.bf16.mxu0 0
      %682 = vmatpush1.bf16.msra.mxu0 0
      %683 = vmatprep.subr.bf16.mxu0 0
      %684 = vmatpush1.bf16.msra.mxu0 0
      %685 = vmatprep.subr.bf16.mxu0 0
      %686 = vmatpush1.bf16.msra.mxu0 0
      %687 = vmatprep.subr.bf16.mxu0 0
      %688 = vmatpush1.bf16.msra.mxu0 0
      %689 = vmatprep.subr.bf16.mxu0 0
      %690 = vmatpush1.bf16.msra.mxu0 0
      %691 = vmatprep.subr.bf16.mxu0 0
      %692 = vmatpush1.bf16.msra.mxu0 0
      %693 = vmatprep.subr.bf16.mxu0 0
      %694 = vmatpush1.bf16.msra.mxu0 0
      %695 = vmatprep.subr.bf16.mxu0 %v676
      %696 = vmatpush1.bf16.msra.mxu0 %v673
      %697 = vmatprep.subr.bf16.mxu0 0
      %698 = vmatpush2.bf16.msra.mxu0 0
      %699 = vmatprep.subr.bf16.mxu0 0
      %700 = vmatpush2.bf16.msra.mxu0 0
      %701 = vmatprep.subr.bf16.mxu0 0
      %702 = vmatpush2.bf16.msra.mxu0 0
      %703 = vmatprep.subr.bf16.mxu0 0
      %704 = vmatpush2.bf16.msra.mxu0 0
      %705 = vmatprep.subr.bf16.mxu0 0
      %706 = vmatpush2.bf16.msra.mxu0 0
      %707 = vmatprep.subr.bf16.mxu0 0
      %708 = vmatpush2.bf16.msra.mxu0 0
      %709 = vmatprep.subr.bf16.mxu0 0
      %710 = vmatpush2.bf16.msra.mxu0 0
      %711 = vmatprep.subr.bf16.mxu0 0
      %712 = vmatpush2.bf16.msra.mxu0 0
      %713 = vmatprep.mubr.bf16.mxu0 0
      %714 = vmatmul.mubr.bf16.gmra.mxu0 %v670
      %v715 = vpop.f32.mrf.mxu0
      %v716 = vadd.f32 0.0, %v715
      %v717 = vpop.f32.mrf.mxu0
      %v718 = vadd.f32 0.0, %v717
      %v719 = vpop.f32.mrf.mxu0
      %v720 = vpop.f32.mrf.mxu0
      %721 = vdwg.mxu0
      %722 = vmatprep.subr.bf16.mxu0 0
      %723 = vmatpush1.bf16.msra.mxu0 0
      %724 = vmatprep.subr.bf16.mxu0 0
      %725 = vmatpush1.bf16.msra.mxu0 0
      %726 = vmatprep.subr.bf16.mxu0 0
      %727 = vmatpush1.bf16.msra.mxu0 0
      %728 = vmatprep.subr.bf16.mxu0 0
      %729 = vmatpush1.bf16.msra.mxu0 0
      %730 = vmatprep.subr.bf16.mxu0 0
      %731 = vmatpush1.bf16.msra.mxu0 0
      %732 = vmatprep.subr.bf16.mxu0 0
      %733 = vmatpush1.bf16.msra.mxu0 0
      %734 = vmatprep.subr.bf16.mxu0 0
      %735 = vmatpush1.bf16.msra.mxu0 0
      %736 = vmatprep.subr.bf16.mxu0 0
      %737 = vmatpush1.bf16.msra.mxu0 %v679
      %738 = vmatprep.subr.bf16.mxu0 0
      %739 = vmatpush2.bf16.msra.mxu0 0
      %740 = vmatprep.subr.bf16.mxu0 0
      %741 = vmatpush2.bf16.msra.mxu0 0
      %742 = vmatprep.subr.bf16.mxu0 0
      %743 = vmatpush2.bf16.msra.mxu0 0
      %744 = vmatprep.subr.bf16.mxu0 0
      %745 = vmatpush2.bf16.msra.mxu0 0
      %746 = vmatprep.subr.bf16.mxu0 0
      %747 = vmatpush2.bf16.msra.mxu0 0
      %748 = vmatprep.subr.bf16.mxu0 0
      %749 = vmatpush2.bf16.msra.mxu0 0
      %750 = vmatprep.subr.bf16.mxu0 0
      %751 = vmatpush2.bf16.msra.mxu0 0
      %752 = vmatprep.subr.bf16.mxu0 0
      %753 = vmatpush2.bf16.msra.mxu0 0
      %754 = vmatprep.mubr.bf16.mxu0 0
      %755 = vmatmul.mubr.bf16.gmra.mxu0 %v670
      %v756 = vpop.f32.mrf.mxu0
      %v757 = vadd.f32 0.0, %v756
      %v758 = vpop.f32.mrf.mxu0
      %v759 = vpop.f32.mrf.mxu0
      %v760 = vpop.f32.mrf.mxu0
      %761 = vdwg.mxu0
      %v762 = vadd.f32 %v637, %v716
      %v763 = vadd.f32 %v638, %v718
      %v764 = vadd.f32 %v639, %v757
      %s765 = scalar_lea.vmem %s0, 10
      %v766 = vld [vmem:[%s765] sm:$0x3]
      %v767 = vld [vmem:[%s165] sm:$0x3f]
      %v769 = vcombine.high %v767, %v767
      %v771 = vunpack.c.l.s4 1983009808
      %v772 = vunpack.c.0.s8 %v771
      %v773 = vlaneseq
      %v774 = vshrl.u32 %v773, 7
      %v775 = vsub.s32 %v772, %v774
      %v776 = vrot.slane %v767, %v775
      %v778 = vunpack.c.l.s4 1983009808
      %v779 = vunpack.c.0.s8 %v778
      %v780 = vlaneseq
      %v781 = vshrl.u32 %v780, 7
      %v782 = vsub.s32 %v779, %v781
      %v783 = vrot.slane %v769, %v782
      %v784 = vcombine.high %v776, %v776
      %785 = vrot.lane.b32.xlu0 %v776, 108
      %v786 = vpop.permute.xlu0 %785
      %787 = vrot.lane.b32.xlu0 %v784, 108
      %v788 = vpop.permute.xlu0 %787
      %789 = vrot.lane.b32.xlu0 %v783, 108
      %v790 = vpop.permute.xlu0 %789
      %vm791 = vcmask 883712
      %v792 = vsel %vm791, %v786, %v788
      %v793 = vsel %vm791, %v788, %v790
      %v795 = vsel %vm202, %v766, 0
      %v798 = vsel %vm206, %v792, 0
      %v801 = vsel %vm206, %v793, 0
      %v804 = vsel %vm206, %v790, 0
      %806 = vmatprep.subr.bf16.mxu0 0
      %807 = vmatpush1.bf16.msra.mxu0 0
      %808 = vmatprep.subr.bf16.mxu0 0
      %809 = vmatpush1.bf16.msra.mxu0 0
      %810 = vmatprep.subr.bf16.mxu0 0
      %811 = vmatpush1.bf16.msra.mxu0 0
      %812 = vmatprep.subr.bf16.mxu0 0
      %813 = vmatpush1.bf16.msra.mxu0 0
      %814 = vmatprep.subr.bf16.mxu0 0
      %815 = vmatpush1.bf16.msra.mxu0 0
      %816 = vmatprep.subr.bf16.mxu0 0
      %817 = vmatpush1.bf16.msra.mxu0 0
      %818 = vmatprep.subr.bf16.mxu0 0
      %819 = vmatpush1.bf16.msra.mxu0 0
      %820 = vmatprep.subr.bf16.mxu0 %v801
      %821 = vmatpush1.bf16.msra.mxu0 %v798
      %822 = vmatprep.subr.bf16.mxu0 0
      %823 = vmatpush2.bf16.msra.mxu0 0
      %824 = vmatprep.subr.bf16.mxu0 0
      %825 = vmatpush2.bf16.msra.mxu0 0
      %826 = vmatprep.subr.bf16.mxu0 0
      %827 = vmatpush2.bf16.msra.mxu0 0
      %828 = vmatprep.subr.bf16.mxu0 0
      %829 = vmatpush2.bf16.msra.mxu0 0
      %830 = vmatprep.subr.bf16.mxu0 0
      %831 = vmatpush2.bf16.msra.mxu0 0
      %832 = vmatprep.subr.bf16.mxu0 0
      %833 = vmatpush2.bf16.msra.mxu0 0
      %834 = vmatprep.subr.bf16.mxu0 0
      %835 = vmatpush2.bf16.msra.mxu0 0
      %836 = vmatprep.subr.bf16.mxu0 0
      %837 = vmatpush2.bf16.msra.mxu0 0
      %838 = vmatprep.mubr.bf16.mxu0 0
      %839 = vmatmul.mubr.bf16.gmra.mxu0 %v795
      %v840 = vpop.f32.mrf.mxu0
      %v841 = vadd.f32 0.0, %v840
      %v842 = vpop.f32.mrf.mxu0
      %v843 = vadd.f32 0.0, %v842
      %v844 = vpop.f32.mrf.mxu0
      %v845 = vpop.f32.mrf.mxu0
      %846 = vdwg.mxu0
      %847 = vmatprep.subr.bf16.mxu0 0
      %848 = vmatpush1.bf16.msra.mxu0 0
      %849 = vmatprep.subr.bf16.mxu0 0
      %850 = vmatpush1.bf16.msra.mxu0 0
      %851 = vmatprep.subr.bf16.mxu0 0
      %852 = vmatpush1.bf16.msra.mxu0 0
      %853 = vmatprep.subr.bf16.mxu0 0
      %854 = vmatpush1.bf16.msra.mxu0 0
      %855 = vmatprep.subr.bf16.mxu0 0
      %856 = vmatpush1.bf16.msra.mxu0 0
      %857 = vmatprep.subr.bf16.mxu0 0
      %858 = vmatpush1.bf16.msra.mxu0 0
      %859 = vmatprep.subr.bf16.mxu0 0
      %860 = vmatpush1.bf16.msra.mxu0 0
      %861 = vmatprep.subr.bf16.mxu0 0
      %862 = vmatpush1.bf16.msra.mxu0 %v804
      %863 = vmatprep.subr.bf16.mxu0 0
      %864 = vmatpush2.bf16.msra.mxu0 0
      %865 = vmatprep.subr.bf16.mxu0 0
      %866 = vmatpush2.bf16.msra.mxu0 0
      %867 = vmatprep.subr.bf16.mxu0 0
      %868 = vmatpush2.bf16.msra.mxu0 0
      %869 = vmatprep.subr.bf16.mxu0 0
      %870 = vmatpush2.bf16.msra.mxu0 0
      %871 = vmatprep.subr.bf16.mxu0 0
      %872 = vmatpush2.bf16.msra.mxu0 0
      %873 = vmatprep.subr.bf16.mxu0 0
      %874 = vmatpush2.bf16.msra.mxu0 0
      %875 = vmatprep.subr.bf16.mxu0 0
      %876 = vmatpush2.bf16.msra.mxu0 0
      %877 = vmatprep.subr.bf16.mxu0 0
      %878 = vmatpush2.bf16.msra.mxu0 0
      %879 = vmatprep.mubr.bf16.mxu0 0
      %880 = vmatmul.mubr.bf16.gmra.mxu0 %v795
      %v881 = vpop.f32.mrf.mxu0
      %v882 = vadd.f32 0.0, %v881
      %v883 = vpop.f32.mrf.mxu0
      %v884 = vpop.f32.mrf.mxu0
      %v885 = vpop.f32.mrf.mxu0
      %886 = vdwg.mxu0
      %v887 = vadd.f32 %v762, %v841
      %v888 = vadd.f32 %v763, %v843
      %v889 = vadd.f32 %v764, %v882
      %s890 = scalar_lea.vmem %s0, 12
      %v891 = vld [vmem:[%s890] sm:$0x3]
      %v892 = vld [vmem:[%s165] sm:$0x3f]
      %v894 = vcombine.high %v892, %v892
      %v896 = vunpack.c.l.s4 1983009808
      %v897 = vunpack.c.0.s8 %v896
      %v898 = vlaneseq
      %v899 = vshrl.u32 %v898, 7
      %v900 = vsub.s32 %v897, %v899
      %v901 = vrot.slane %v892, %v900
      %v903 = vunpack.c.l.s4 1983009808
      %v904 = vunpack.c.0.s8 %v903
      %v905 = vlaneseq
      %v906 = vshrl.u32 %v905, 7
      %v907 = vsub.s32 %v904, %v906
      %v908 = vrot.slane %v894, %v907
      %v909 = vcombine.high %v901, %v901
      %910 = vrot.lane.b32.xlu0 %v901, 92
      %v911 = vpop.permute.xlu0 %910
      %912 = vrot.lane.b32.xlu0 %v909, 92
      %v913 = vpop.permute.xlu0 %912
      %914 = vrot.lane.b32.xlu0 %v908, 92
      %v915 = vpop.permute.xlu0 %914
      %vm916 = vcmask 752640
      %v917 = vsel %vm916, %v911, %v913
      %v918 = vsel %vm916, %v913, %v915
      %v920 = vsel %vm202, %v891, 0
      %v923 = vsel %vm206, %v917, 0
      %v926 = vsel %vm206, %v918, 0
      %v929 = vsel %vm206, %v915, 0
      %931 = vmatprep.subr.bf16.mxu0 0
      %932 = vmatpush1.bf16.msra.mxu0 0
      %933 = vmatprep.subr.bf16.mxu0 0
      %934 = vmatpush1.bf16.msra.mxu0 0
      %935 = vmatprep.subr.bf16.mxu0 0
      %936 = vmatpush1.bf16.msra.mxu0 0
      %937 = vmatprep.subr.bf16.mxu0 0
      %938 = vmatpush1.bf16.msra.mxu0 0
      %939 = vmatprep.subr.bf16.mxu0 0
      %940 = vmatpush1.bf16.msra.mxu0 0
      %941 = vmatprep.subr.bf16.mxu0 0
      %942 = vmatpush1.bf16.msra.mxu0 0
      %943 = vmatprep.subr.bf16.mxu0 0
      %944 = vmatpush1.bf16.msra.mxu0 0
      %945 = vmatprep.subr.bf16.mxu0 %v926
      %946 = vmatpush1.bf16.msra.mxu0 %v923
      %947 = vmatprep.subr.bf16.mxu0 0
      %948 = vmatpush2.bf16.msra.mxu0 0
      %949 = vmatprep.subr.bf16.mxu0 0
      %950 = vmatpush2.bf16.msra.mxu0 0
      %951 = vmatprep.subr.bf16.mxu0 0
      %952 = vmatpush2.bf16.msra.mxu0 0
      %953 = vmatprep.subr.bf16.mxu0 0
      %954 = vmatpush2.bf16.msra.mxu0 0
      %955 = vmatprep.subr.bf16.mxu0 0
      %956 = vmatpush2.bf16.msra.mxu0 0
      %957 = vmatprep.subr.bf16.mxu0 0
      %958 = vmatpush2.bf16.msra.mxu0 0
      %959 = vmatprep.subr.bf16.mxu0 0
      %960 = vmatpush2.bf16.msra.mxu0 0
      %961 = vmatprep.subr.bf16.mxu0 0
      %962 = vmatpush2.bf16.msra.mxu0 0
      %963 = vmatprep.mubr.bf16.mxu0 0
      %964 = vmatmul.mubr.bf16.gmra.mxu0 %v920
      %v965 = vpop.f32.mrf.mxu0
      %v966 = vadd.f32 0.0, %v965
      %v967 = vpop.f32.mrf.mxu0
      %v968 = vadd.f32 0.0, %v967
      %v969 = vpop.f32.mrf.mxu0
      %v970 = vpop.f32.mrf.mxu0
      %971 = vdwg.mxu0
      %972 = vmatprep.subr.bf16.mxu0 0
      %973 = vmatpush1.bf16.msra.mxu0 0
      %974 = vmatprep.subr.bf16.mxu0 0
      %975 = vmatpush1.bf16.msra.mxu0 0
      %976 = vmatprep.subr.bf16.mxu0 0
      %977 = vmatpush1.bf16.msra.mxu0 0
      %978 = vmatprep.subr.bf16.mxu0 0
      %979 = vmatpush1.bf16.msra.mxu0 0
      %980 = vmatprep.subr.bf16.mxu0 0
      %981 = vmatpush1.bf16.msra.mxu0 0
      %982 = vmatprep.subr.bf16.mxu0 0
      %983 = vmatpush1.bf16.msra.mxu0 0
      %984 = vmatprep.subr.bf16.mxu0 0
      %985 = vmatpush1.bf16.msra.mxu0 0
      %986 = vmatprep.subr.bf16.mxu0 0
      %987 = vmatpush1.bf16.msra.mxu0 %v929
      %988 = vmatprep.subr.bf16.mxu0 0
      %989 = vmatpush2.bf16.msra.mxu0 0
      %990 = vmatprep.subr.bf16.mxu0 0
      %991 = vmatpush2.bf16.msra.mxu0 0
      %992 = vmatprep.subr.bf16.mxu0 0
      %993 = vmatpush2.bf16.msra.mxu0 0
      %994 = vmatprep.subr.bf16.mxu0 0
      %995 = vmatpush2.bf16.msra.mxu0 0
      %996 = vmatprep.subr.bf16.mxu0 0
      %997 = vmatpush2.bf16.msra.mxu0 0
      %998 = vmatprep.subr.bf16.mxu0 0
      %999 = vmatpush2.bf16.msra.mxu0 0
      %1000 = vmatprep.subr.bf16.mxu0 0
      %1001 = vmatpush2.bf16.msra.mxu0 0
      %1002 = vmatprep.subr.bf16.mxu0 0
      %1003 = vmatpush2.bf16.msra.mxu0 0
      %1004 = vmatprep.mubr.bf16.mxu0 0
      %1005 = vmatmul.mubr.bf16.gmra.mxu0 %v920
      %v1006 = vpop.f32.mrf.mxu0
      %v1007 = vadd.f32 0.0, %v1006
      %v1008 = vpop.f32.mrf.mxu0
      %v1009 = vpop.f32.mrf.mxu0
      %v1010 = vpop.f32.mrf.mxu0
      %1011 = vdwg.mxu0
      %v1012 = vadd.f32 %v887, %v966
      %v1013 = vadd.f32 %v888, %v968
      %v1014 = vadd.f32 %v889, %v1007
      %s1015 = scalar_lea.vmem %s0, 14
      %v1016 = vld [vmem:[%s1015] sm:$0x3]
      %v1017 = vld [vmem:[%s165] sm:$0x3f]
      %v1019 = vcombine.high %v1017, %v1017
      %v1021 = vunpack.c.l.s4 1983009808
      %v1022 = vunpack.c.0.s8 %v1021
      %v1023 = vlaneseq
      %v1024 = vshrl.u32 %v1023, 7
      %v1025 = vsub.s32 %v1022, %v1024
      %v1026 = vrot.slane %v1017, %v1025
      %v1028 = vunpack.c.l.s4 1983009808
      %v1029 = vunpack.c.0.s8 %v1028
      %v1030 = vlaneseq
      %v1031 = vshrl.u32 %v1030, 7
      %v1032 = vsub.s32 %v1029, %v1031
      %v1033 = vrot.slane %v1019, %v1032
      %v1034 = vcombine.high %v1026, %v1026
      %1035 = vrot.lane.b32.xlu0 %v1026, 91
      %v1036 = vpop.permute.xlu0 %1035
      %1037 = vrot.lane.b32.xlu0 %v1034, 91
      %v1038 = vpop.permute.xlu0 %1037
      %1039 = vrot.lane.b32.xlu0 %v1033, 91
      %v1040 = vpop.permute.xlu0 %1039
      %vm1041 = vcmask 744448
      %v1042 = vsel %vm1041, %v1036, %v1038
      %v1043 = vsel %vm1041, %v1038, %v1040
      %v1045 = vsel %vm202, %v1016, 0
      %v1048 = vsel %vm206, %v1042, 0
      %v1051 = vsel %vm206, %v1043, 0
      %v1054 = vsel %vm206, %v1040, 0
      %1056 = vmatprep.subr.bf16.mxu0 0
      %1057 = vmatpush1.bf16.msra.mxu0 0
      %1058 = vmatprep.subr.bf16.mxu0 0
      %1059 = vmatpush1.bf16.msra.mxu0 0
      %1060 = vmatprep.subr.bf16.mxu0 0
      %1061 = vmatpush1.bf16.msra.mxu0 0
      %1062 = vmatprep.subr.bf16.mxu0 0
      %1063 = vmatpush1.bf16.msra.mxu0 0
      %1064 = vmatprep.subr.bf16.mxu0 0
      %1065 = vmatpush1.bf16.msra.mxu0 0
      %1066 = vmatprep.subr.bf16.mxu0 0
      %1067 = vmatpush1.bf16.msra.mxu0 0
      %1068 = vmatprep.subr.bf16.mxu0 0
      %1069 = vmatpush1.bf16.msra.mxu0 0
      %1070 = vmatprep.subr.bf16.mxu0 %v1051
      %1071 = vmatpush1.bf16.msra.mxu0 %v1048
      %1072 = vmatprep.subr.bf16.mxu0 0
      %1073 = vmatpush2.bf16.msra.mxu0 0
      %1074 = vmatprep.subr.bf16.mxu0 0
      %1075 = vmatpush2.bf16.msra.mxu0 0
      %1076 = vmatprep.subr.bf16.mxu0 0
      %1077 = vmatpush2.bf16.msra.mxu0 0
      %1078 = vmatprep.subr.bf16.mxu0 0
      %1079 = vmatpush2.bf16.msra.mxu0 0
      %1080 = vmatprep.subr.bf16.mxu0 0
      %1081 = vmatpush2.bf16.msra.mxu0 0
      %1082 = vmatprep.subr.bf16.mxu0 0
      %1083 = vmatpush2.bf16.msra.mxu0 0
      %1084 = vmatprep.subr.bf16.mxu0 0
      %1085 = vmatpush2.bf16.msra.mxu0 0
      %1086 = vmatprep.subr.bf16.mxu0 0
      %1087 = vmatpush2.bf16.msra.mxu0 0
      %1088 = vmatprep.mubr.bf16.mxu0 0
      %1089 = vmatmul.mubr.bf16.gmra.mxu0 %v1045
      %v1090 = vpop.f32.mrf.mxu0
      %v1091 = vadd.f32 0.0, %v1090
      %v1092 = vpop.f32.mrf.mxu0
      %v1093 = vadd.f32 0.0, %v1092
      %v1094 = vpop.f32.mrf.mxu0
      %v1095 = vpop.f32.mrf.mxu0
      %1096 = vdwg.mxu0
      %1097 = vmatprep.subr.bf16.mxu0 0
      %1098 = vmatpush1.bf16.msra.mxu0 0
      %1099 = vmatprep.subr.bf16.mxu0 0
      %1100 = vmatpush1.bf16.msra.mxu0 0
      %1101 = vmatprep.subr.bf16.mxu0 0
      %1102 = vmatpush1.bf16.msra.mxu0 0
      %1103 = vmatprep.subr.bf16.mxu0 0
      %1104 = vmatpush1.bf16.msra.mxu0 0
      %1105 = vmatprep.subr.bf16.mxu0 0
      %1106 = vmatpush1.bf16.msra.mxu0 0
      %1107 = vmatprep.subr.bf16.mxu0 0
      %1108 = vmatpush1.bf16.msra.mxu0 0
      %1109 = vmatprep.subr.bf16.mxu0 0
      %1110 = vmatpush1.bf16.msra.mxu0 0
      %1111 = vmatprep.subr.bf16.mxu0 0
      %1112 = vmatpush1.bf16.msra.mxu0 %v1054
      %1113 = vmatprep.subr.bf16.mxu0 0
      %1114 = vmatpush2.bf16.msra.mxu0 0
      %1115 = vmatprep.subr.bf16.mxu0 0
      %1116 = vmatpush2.bf16.msra.mxu0 0
      %1117 = vmatprep.subr.bf16.mxu0 0
      %1118 = vmatpush2.bf16.msra.mxu0 0
      %1119 = vmatprep.subr.bf16.mxu0 0
      %1120 = vmatpush2.bf16.msra.mxu0 0
      %1121 = vmatprep.subr.bf16.mxu0 0
      %1122 = vmatpush2.bf16.msra.mxu0 0
      %1123 = vmatprep.subr.bf16.mxu0 0
      %1124 = vmatpush2.bf16.msra.mxu0 0
      %1125 = vmatprep.subr.bf16.mxu0 0
      %1126 = vmatpush2.bf16.msra.mxu0 0
      %1127 = vmatprep.subr.bf16.mxu0 0
      %1128 = vmatpush2.bf16.msra.mxu0 0
      %1129 = vmatprep.mubr.bf16.mxu0 0
      %1130 = vmatmul.mubr.bf16.gmra.mxu0 %v1045
      %v1131 = vpop.f32.mrf.mxu0
      %v1132 = vadd.f32 0.0, %v1131
      %v1133 = vpop.f32.mrf.mxu0
      %v1134 = vpop.f32.mrf.mxu0
      %v1135 = vpop.f32.mrf.mxu0
      %1136 = vdwg.mxu0
      %v1137 = vadd.f32 %v1012, %v1091
      %v1138 = vadd.f32 %v1013, %v1093
      %v1139 = vadd.f32 %v1014, %v1132
      %s1140 = scalar_lea.vmem %s0, 16
      %v1141 = vld [vmem:[%s1140] sm:$0x3]
      %v1142 = vld [vmem:[%s165] sm:$0x3f]
      %v1144 = vcombine.high %v1142, %v1142
      %v1146 = vunpack.c.l.s4 1983009808
      %v1147 = vunpack.c.0.s8 %v1146
      %v1148 = vlaneseq
      %v1149 = vshrl.u32 %v1148, 7
      %v1150 = vsub.s32 %v1147, %v1149
      %v1151 = vrot.slane %v1142, %v1150
      %v1153 = vunpack.c.l.s4 1983009808
      %v1154 = vunpack.c.0.s8 %v1153
      %v1155 = vlaneseq
      %v1156 = vshrl.u32 %v1155, 7
      %v1157 = vsub.s32 %v1154, %v1156
      %v1158 = vrot.slane %v1144, %v1157
      %v1159 = vcombine.high %v1151, %v1151
      %1160 = vrot.lane.b32.xlu0 %v1151, 90
      %v1161 = vpop.permute.xlu0 %1160
      %1162 = vrot.lane.b32.xlu0 %v1159, 90
      %v1163 = vpop.permute.xlu0 %1162
      %1164 = vrot.lane.b32.xlu0 %v1158, 90
      %v1165 = vpop.permute.xlu0 %1164
      %vm1166 = vcmask 736256
      %v1167 = vsel %vm1166, %v1161, %v1163
      %v1168 = vsel %vm1166, %v1163, %v1165
      %v1170 = vsel %vm202, %v1141, 0
      %v1173 = vsel %vm206, %v1167, 0
      %v1176 = vsel %vm206, %v1168, 0
      %v1179 = vsel %vm206, %v1165, 0
      %1181 = vmatprep.subr.bf16.mxu0 0
      %1182 = vmatpush1.bf16.msra.mxu0 0
      %1183 = vmatprep.subr.bf16.mxu0 0
      %1184 = vmatpush1.bf16.msra.mxu0 0
      %1185 = vmatprep.subr.bf16.mxu0 0
      %1186 = vmatpush1.bf16.msra.mxu0 0
      %1187 = vmatprep.subr.bf16.mxu0 0
      %1188 = vmatpush1.bf16.msra.mxu0 0
      %1189 = vmatprep.subr.bf16.mxu0 0
      %1190 = vmatpush1.bf16.msra.mxu0 0
      %1191 = vmatprep.subr.bf16.mxu0 0
      %1192 = vmatpush1.bf16.msra.mxu0 0
      %1193 = vmatprep.subr.bf16.mxu0 0
      %1194 = vmatpush1.bf16.msra.mxu0 0
      %1195 = vmatprep.subr.bf16.mxu0 %v1176
      %1196 = vmatpush1.bf16.msra.mxu0 %v1173
      %1197 = vmatprep.subr.bf16.mxu0 0
      %1198 = vmatpush2.bf16.msra.mxu0 0
      %1199 = vmatprep.subr.bf16.mxu0 0
      %1200 = vmatpush2.bf16.msra.mxu0 0
      %1201 = vmatprep.subr.bf16.mxu0 0
      %1202 = vmatpush2.bf16.msra.mxu0 0
      %1203 = vmatprep.subr.bf16.mxu0 0
      %1204 = vmatpush2.bf16.msra.mxu0 0
      %1205 = vmatprep.subr.bf16.mxu0 0
      %1206 = vmatpush2.bf16.msra.mxu0 0
      %1207 = vmatprep.subr.bf16.mxu0 0
      %1208 = vmatpush2.bf16.msra.mxu0 0
      %1209 = vmatprep.subr.bf16.mxu0 0
      %1210 = vmatpush2.bf16.msra.mxu0 0
      %1211 = vmatprep.subr.bf16.mxu0 0
      %1212 = vmatpush2.bf16.msra.mxu0 0
      %1213 = vmatprep.mubr.bf16.mxu0 0
      %1214 = vmatmul.mubr.bf16.gmra.mxu0 %v1170
      %v1215 = vpop.f32.mrf.mxu0
      %v1216 = vadd.f32 0.0, %v1215
      %v1217 = vpop.f32.mrf.mxu0
      %v1218 = vadd.f32 0.0, %v1217
      %v1219 = vpop.f32.mrf.mxu0
      %v1220 = vpop.f32.mrf.mxu0
      %1221 = vdwg.mxu0
      %1222 = vmatprep.subr.bf16.mxu0 0
      %1223 = vmatpush1.bf16.msra.mxu0 0
      %1224 = vmatprep.subr.bf16.mxu0 0
      %1225 = vmatpush1.bf16.msra.mxu0 0
      %1226 = vmatprep.subr.bf16.mxu0 0
      %1227 = vmatpush1.bf16.msra.mxu0 0
      %1228 = vmatprep.subr.bf16.mxu0 0
      %1229 = vmatpush1.bf16.msra.mxu0 0
      %1230 = vmatprep.subr.bf16.mxu0 0
      %1231 = vmatpush1.bf16.msra.mxu0 0
      %1232 = vmatprep.subr.bf16.mxu0 0
      %1233 = vmatpush1.bf16.msra.mxu0 0
      %1234 = vmatprep.subr.bf16.mxu0 0
      %1235 = vmatpush1.bf16.msra.mxu0 0
      %1236 = vmatprep.subr.bf16.mxu0 0
      %1237 = vmatpush1.bf16.msra.mxu0 %v1179
      %1238 = vmatprep.subr.bf16.mxu0 0
      %1239 = vmatpush2.bf16.msra.mxu0 0
      %1240 = vmatprep.subr.bf16.mxu0 0
      %1241 = vmatpush2.bf16.msra.mxu0 0
      %1242 = vmatprep.subr.bf16.mxu0 0
      %1243 = vmatpush2.bf16.msra.mxu0 0
      %1244 = vmatprep.subr.bf16.mxu0 0
      %1245 = vmatpush2.bf16.msra.mxu0 0
      %1246 = vmatprep.subr.bf16.mxu0 0
      %1247 = vmatpush2.bf16.msra.mxu0 0
      %1248 = vmatprep.subr.bf16.mxu0 0
      %1249 = vmatpush2.bf16.msra.mxu0 0
      %1250 = vmatprep.subr.bf16.mxu0 0
      %1251 = vmatpush2.bf16.msra.mxu0 0
      %1252 = vmatprep.subr.bf16.mxu0 0
      %1253 = vmatpush2.bf16.msra.mxu0 0
      %1254 = vmatprep.mubr.bf16.mxu0 0
      %1255 = vmatmul.mubr.bf16.gmra.mxu0 %v1170
      %v1256 = vpop.f32.mrf.mxu0
      %v1257 = vadd.f32 0.0, %v1256
      %v1258 = vpop.f32.mrf.mxu0
      %v1259 = vpop.f32.mrf.mxu0
      %v1260 = vpop.f32.mrf.mxu0
      %1261 = vdwg.mxu0
      %v1262 = vadd.f32 %v1137, %v1216
      %v1263 = vadd.f32 %v1138, %v1218
      %v1264 = vadd.f32 %v1139, %v1257
      %v1265 = vld [vmem:[%s2] sm:$0xf]
      %1267 = vset.pattern.permute.xlu0 0
      %1268 = vperm.xlu0 %1267, %v1265
      %v1269 = vpop.permute.xlu0 %1268
      %v1271 = vadd.f32 %v1262, %v1269
      %v1272 = vadd.f32 %v1263, %v1269
      %v1273 = vadd.f32 %v1264, %v1269
      %v1274 = vmax.f32 %v1271, 0.0
      %v1275 = vmax.f32 %v1272, 0.0
      %v1276 = vmax.f32 %v1273, 0.0
      %v1279 = vcombine.low %v1274, %v1275
      %1281 = vst [vmem:[%s170] sm:$0xff] %v1279
      %vm1282 = vcmask 257024
      %1283 = vst.msk [vmem:[%s170 + $0x8] sm:$0xf] %vm1282, %v1276
      %p1284 = scmp.lt.s32.totalorder %s14, 1
      %s1285 = scalar_select %p1284, %s14, 1
      %s1286 = smul.addr %s1285, 3
      %s1287 = smul.addr %s1286, 4
      %s1288 = scalar_lea.vmem %s3, %s1287
      // Predicated region
      $region33: #{residual_group.9} parent=31 // pred_check
        %p1289 = pneg %p100
      $region34: #{residual_group.9} parent=31 // pred_check_branch
        %1291 = sbr.rel (%p1289) target = $region36
      $region35: #{residual_group.9} parent=31 // pred_region
        _
      $region36: #{residual_group.9} parent=31 // pred_fallthru
        _
    $region32: #{residual_group.9} parent=5 // pred_fallthru
      _
    %p1292 = scmp.le.s32.totalorder 2, %s9
    // Predicated region
    $region37: #{residual_group.9} parent=5 // pred_check
      %p1293 = pneg %p1292
    $region38: #{residual_group.9} parent=5 // pred_check_branch
      %1295 = sbr.rel (%p1293) target = $region40
    $region39: #{residual_group.9} parent=5 // pred_region
      %s1296 = ssub.s32 %s9, 2
      // Predicated region
      $region41: #{residual_group.9} parent=39 // pred_check
        %p1297 = pneg %p106
      $region42: #{residual_group.9} parent=39 // pred_check_branch
        %1299 = sbr.rel (%p1297) target = $region44
      $region43: #{residual_group.9} parent=39 // pred_region
        %p1300 = scmp.lt.s32.totalorder %s15, 1
        %s1301 = scalar_select %p1300, %s15, 1
        %s1302 = smul.addr %s1301, 3
        %s1303 = smul.addr %s1302, 4
        %s1304 = scalar_lea.vmem %s3, %s1303
      $region44: #{residual_group.9} parent=39 // pred_fallthru
        _
    $region40: #{residual_group.9} parent=5 // pred_fallthru
      _
  $region6: #{residual_group.9} parent=0 // loop_footer
    %s13 = sadd.s32 1, %s9
  $region7: #{residual_group.9} parent=0 // loop_footer_branch
    %8 = sbr.rel target = $region3
  $region8: #{residual_group.9} parent=0 // loop_exit
    _

// kernel: residual_group.10
$region0: #{residual_group.10}
  #allocation0 [shape = 'u32[]', space=smem, size = 0x4, offset = 0x4, fixed_abs, tag = 'smem constant byte address 0x4 - core index']
  #allocation1 [shape = 'u32[144,128]{1,0:T(1,128)}', space=vmem, size = 0x12000, scoped, tag = 'internal scratch']
  %s0 = inlined_call_operand.vmem [shape: bf16[1,9,4,4], index: 0, kind: input, shape index: {}]
  %s1 = inlined_call_operand.vmem [shape: bf16[2,4,342], index: 1, kind: input, shape index: {}]
  %s2 = inlined_call_operand.vmem [shape: f32[1,4,1], index: 2, kind: input, shape index: {}]
  %s3 = inlined_call_operand.vmem [shape: f32[2,4,288], index: 3, kind: output, shape index: {}]
  %s4 = sld [smem:[#allocation0]]
  $region45: #{residual_group.10} parent=0
    _
  %s6 = ssub.s32 1, %s4
  %s7 = scalar_select 0, %s6, %s4
  loop: start=0, step=1, limit=4
  $region2: #{residual_group.10} parent=0 // loop_pre_header
    _
  $region3: #{residual_group.10} parent=0 // loop_header
    %s9 = sphi 0, %s13
    %p10 = scmp.ge.s32.totalorder %s9, 4
    %s17 = sphi 0, %s17
    %s19 = sphi 0, %s17
    %s20 = sphi 0, %s19
    %s34 = sphi 0, %s20
    %s40 = sphi 0, %s42
    %s43 = sphi 0, %s40
    %s44 = sphi 0, %s43
    %s60 = sphi 0, %s44
    %s64 = sphi 0, %s64
    %s66 = sphi 0, %s64
    %s67 = sphi 0, %s66
    %s81 = sphi 0, %s67
    %s87 = sphi 0, %s89
    %s90 = sphi 0, %s87
    %s91 = sphi 0, %s90
    %s107 = sphi 0, %s91
  $region4: #{residual_group.10} parent=0 // loop_header_branch
    %12 = sbr.rel (%p10) target = $region8
  $region5: #{residual_group.10} parent=0 // loop_body
    %s14 = ssub.s32 %s9, 1
    %s15 = ssub.s32 %s9, 2
    %s16 = sadd.s32 %s9, 1
    %s18 = sadd.s32 %s17, 1
    %p21 = scmp.eq.s32.totalorder %s9, 1
    %p22 = scmp.ne.s32.totalorder %s17, %s19
    %p23 = scmp.eq.s32.totalorder %s9, 0
    %p24 = por %p22, %p23
    %p25 = scmp.ne.s32.totalorder %s17, %s19
    %p26 = scmp.eq.s32.totalorder %s14, 1
    %p27 = por %p25, %p26
    %p28 = scmp.ne.s32.totalorder %s19, %s20
    %p29 = scmp.eq.s32.totalorder %s14, 0
    %p30 = por %p28, %p29
    %p31 = scmp.ne.s32.totalorder %s19, %s20
    %p32 = scmp.eq.s32.totalorder %s15, 1
    %p33 = por %p31, %p32
    %p35 = scmp.ne.s32.totalorder %s20, %s34
    %p36 = scmp.eq.s32.totalorder %s15, 0
    %p37 = por %p35, %p36
    %s38 = ssub.s32 %s9, %s16
    %p39 = scmp.eq.s32.totalorder %s38, 0
    %s41 = sadd.s32 %s40, 1
    %s42 = scalar_select %p39, %s40, %s41
    %p45 = pneg %p39
    %p46 = scmp.eq.s32.totalorder %s9, 1
    %p47 = por %p45, %p46
    %p48 = scmp.ne.s32.totalorder %s40, %s43
    %p49 = scmp.eq.s32.totalorder %s9, 0
    %p50 = por %p48, %p49
    %p51 = scmp.ne.s32.totalorder %s40, %s43
    %p52 = scmp.eq.s32.totalorder %s14, 1
    %p53 = por %p51, %p52
    %p54 = scmp.ne.s32.totalorder %s43, %s44
    %p55 = scmp.eq.s32.totalorder %s14, 0
    %p56 = por %p54, %p55
    %p57 = scmp.ne.s32.totalorder %s43, %s44
    %p58 = scmp.eq.s32.totalorder %s15, 1
    %p59 = por %p57, %p58
    %p61 = scmp.ne.s32.totalorder %s44, %s60
    %p62 = scmp.eq.s32.totalorder %s15, 0
    %p63 = por %p61, %p62
    %s65 = sadd.s32 %s64, 1
    %p68 = scmp.eq.s32.totalorder %s9, 1
    %p69 = scmp.ne.s32.totalorder %s64, %s66
    %p70 = scmp.eq.s32.totalorder %s9, 0
    %p71 = por %p69, %p70
    %p72 = scmp.ne.s32.totalorder %s64, %s66
    %p73 = scmp.eq.s32.totalorder %s14, 1
    %p74 = por %p72, %p73
    %p75 = scmp.ne.s32.totalorder %s66, %s67
    %p76 = scmp.eq.s32.totalorder %s14, 0
    %p77 = por %p75, %p76
    %p78 = scmp.ne.s32.totalorder %s66, %s67
    %p79 = scmp.eq.s32.totalorder %s15, 1
    %p80 = por %p78, %p79
    %p82 = scmp.ne.s32.totalorder %s67, %s81
    %p83 = scmp.eq.s32.totalorder %s15, 0
    %p84 = por %p82, %p83
    %s85 = ssub.s32 %s9, %s16
    %p86 = scmp.eq.s32.totalorder %s85, 0
    %s88 = sadd.s32 %s87, 1
    %s89 = scalar_select %p86, %s87, %s88
    %p92 = pneg %p86
    %p93 = scmp.eq.s32.totalorder %s9, 1
    %p94 = por %p92, %p93
    %p95 = scmp.ne.s32.totalorder %s87, %s90
    %p96 = scmp.eq.s32.totalorder %s9, 0
    %p97 = por %p95, %p96
    %p98 = scmp.ne.s32.totalorder %s87, %s90
    %p99 = scmp.eq.s32.totalorder %s14, 1
    %p100 = por %p98, %p99
    %p101 = scmp.ne.s32.totalorder %s90, %s91
    %p102 = scmp.eq.s32.totalorder %s14, 0
    %p103 = por %p101, %p102
    %p104 = scmp.ne.s32.totalorder %s90, %s91
    %p105 = scmp.eq.s32.totalorder %s15, 1
    %p106 = por %p104, %p105
    %p108 = scmp.ne.s32.totalorder %s91, %s107
    %p109 = scmp.eq.s32.totalorder %s15, 0
    %p110 = por %p108, %p109
    %p111 = scmp.le.s32.totalorder 1, %s9
    %p112 = scmp.lt.s32.totalorder %s9, 3
    %p113 = pnand %p111, %p112
    %p114 = pneg %p113
    // Predicated region
    $region9: #{residual_group.10} parent=5 // pred_check
      _
    $region10: #{residual_group.10} parent=5 // pred_check_branch
      %116 = sbr.rel (%p113) target = $region12
    $region11: #{residual_group.10} parent=5 // pred_region
      %s117 = ssub.s32 %s9, 1
      // Predicated region
      $region13: #{residual_group.10} parent=11 // pred_check
        %p118 = pneg %p30
      $region14: #{residual_group.10} parent=11 // pred_check_branch
        %120 = sbr.rel (%p118) target = $region16
      $region15: #{residual_group.10} parent=11 // pred_region
        _
      $region16: #{residual_group.10} parent=11 // pred_fallthru
        _
      // Predicated region
      $region17: #{residual_group.10} parent=11 // pred_check
        %p121 = pneg %p77
      $region18: #{residual_group.10} parent=11 // pred_check_branch
        %123 = sbr.rel (%p121) target = $region20
      $region19: #{residual_group.10} parent=11 // pred_region
        _
      $region20: #{residual_group.10} parent=11 // pred_fallthru
        _
    $region12: #{residual_group.10} parent=5 // pred_fallthru
      _
    %p124 = scmp.lt.s32.totalorder %s9, 2
    // Predicated region
    $region21: #{residual_group.10} parent=5 // pred_check
      %p125 = pneg %p124
    $region22: #{residual_group.10} parent=5 // pred_check_branch
      %127 = sbr.rel (%p125) target = $region24
    $region23: #{residual_group.10} parent=5 // pred_region
      // Predicated region
      $region25: #{residual_group.10} parent=23 // pred_check
        %p128 = pneg %p50
      $region26: #{residual_group.10} parent=23 // pred_check_branch
        %130 = sbr.rel (%p128) target = $region28
      $region27: #{residual_group.10} parent=23 // pred_region
        %p131 = scmp.lt.s32.totalorder %s9, 1
        %s132 = scalar_select %p131, %s9, 1
        %s133 = smul.addr %s132, 3
        %s134 = smul.addr %s133, 2
        %s135 = scalar_lea.vmem %s1, %s134
      $region28: #{residual_group.10} parent=23 // pred_fallthru
        _
    $region24: #{residual_group.10} parent=5 // pred_fallthru
      _
    %p136 = scmp.le.s32.totalorder 1, %s9
    %p137 = scmp.lt.s32.totalorder %s9, 3
    %p138 = pnand %p136, %p137
    %p139 = pneg %p138
    // Predicated region
    $region29: #{residual_group.10} parent=5 // pred_check
      _
    $region30: #{residual_group.10} parent=5 // pred_check_branch
      %141 = sbr.rel (%p138) target = $region32
    $region31: #{residual_group.10} parent=5 // pred_region
      %s142 = ssub.s32 %s9, 1
      %p143 = pneg %p30
      %p144 = pneg %p27
      %p145 = scmp.lt.s32.totalorder %s14, 1
      %s146 = scalar_select %p145, %s14, 1
      %s147 = smul.addr %s146, 3
      %s148 = smul.addr %s147, 2
      %s149 = scalar_lea.vmem %s1, %s148
      %p150 = pneg %p56
      %p151 = pneg %p53
      %p152 = pneg %p77
      %p153 = pneg %p74
      %p154 = pneg %p103
      %p155 = pneg %p100
      %p156 = scmp.lt.s32.totalorder %s14, 1
      %s157 = scalar_select %p156, %s14, 1
      %s158 = smul.addr %s157, 3
      %s159 = smul.addr %s158, 4
      %s160 = scalar_lea.vmem %s3, %s159
      %p161 = scmp.lt.s32.totalorder %s14, 1
      %s162 = scalar_select %p161, %s14, 1
      %s163 = smul.addr %s162, 3
      %s164 = smul.addr %s163, 2
      %s165 = scalar_lea.vmem %s1, %s164
      %p166 = scmp.lt.s32.totalorder %s14, 1
      %s167 = scalar_select %p166, %s14, 1
      %s168 = smul.addr %s167, 3
      %s169 = smul.addr %s168, 4
      %s170 = scalar_lea.vmem %s3, %s169
      %v172 = vld [vmem:[%s0] sm:$0x3]
      %v173 = vld [vmem:[%s165] sm:$0x3f]
      %s174 = scalar_lea.vmem %s0, 2
      %v175 = vld [vmem:[%s174] sm:$0x3]
      %v177 = vcombine.high %v173, %v173
      %v179 = vunpack.c.l.s4 1983009808
      %v180 = vunpack.c.0.s8 %v179
      %v181 = vlaneseq
      %v182 = vshrl.u32 %v181, 7
      %v183 = vsub.s32 %v180, %v182
      %v184 = vrot.slane %v173, %v183
      %v186 = vunpack.c.l.s4 1983009808
      %v187 = vunpack.c.0.s8 %v186
      %v188 = vlaneseq
      %v189 = vshrl.u32 %v188, 7
      %v190 = vsub.s32 %v187, %v189
      %v191 = vrot.slane %v177, %v190
      %v192 = vcombine.high %v184, %v184
      %193 = vrot.lane.b32.xlu0 %v184, 127
      %v194 = vpop.permute.xlu0 %193
      %195 = vrot.lane.b32.xlu0 %v192, 127
      %v196 = vpop.permute.xlu0 %195
      %197 = vrot.lane.b32.xlu0 %v191, 127
      %v198 = vpop.permute.xlu0 %197
      %vm199 = vcmask 1039360
      %v200 = vsel %vm199, %v194, %v196
      %v201 = vsel %vm199, %v196, %v198
      %vm202 = vcmask 31744
      %v204 = vsel %vm202, %v175, 0
      %vm206 = vcmask 1041408
      %v208 = vsel %vm206, %v200, 0
      %v211 = vsel %vm206, %v201, 0
      %v214 = vsel %vm206, %v198, 0
      %216 = vmatprep.subr.bf16.mxu0 0
      %217 = vmatpush1.bf16.msra.mxu0 0
      %218 = vmatprep.subr.bf16.mxu0 0
      %219 = vmatpush1.bf16.msra.mxu0 0
      %220 = vmatprep.subr.bf16.mxu0 0
      %221 = vmatpush1.bf16.msra.mxu0 0
      %222 = vmatprep.subr.bf16.mxu0 0
      %223 = vmatpush1.bf16.msra.mxu0 0
      %224 = vmatprep.subr.bf16.mxu0 0
      %225 = vmatpush1.bf16.msra.mxu0 0
      %226 = vmatprep.subr.bf16.mxu0 0
      %227 = vmatpush1.bf16.msra.mxu0 0
      %228 = vmatprep.subr.bf16.mxu0 0
      %229 = vmatpush1.bf16.msra.mxu0 0
      %230 = vmatprep.subr.bf16.mxu0 %v211
      %231 = vmatpush1.bf16.msra.mxu0 %v208
      %232 = vmatprep.subr.bf16.mxu0 0
      %233 = vmatpush2.bf16.msra.mxu0 0
      %234 = vmatprep.subr.bf16.mxu0 0
      %235 = vmatpush2.bf16.msra.mxu0 0
      %236 = vmatprep.subr.bf16.mxu0 0
      %237 = vmatpush2.bf16.msra.mxu0 0
      %238 = vmatprep.subr.bf16.mxu0 0
      %239 = vmatpush2.bf16.msra.mxu0 0
      %240 = vmatprep.subr.bf16.mxu0 0
      %241 = vmatpush2.bf16.msra.mxu0 0
      %242 = vmatprep.subr.bf16.mxu0 0
      %243 = vmatpush2.bf16.msra.mxu0 0
      %244 = vmatprep.subr.bf16.mxu0 0
      %245 = vmatpush2.bf16.msra.mxu0 0
      %246 = vmatprep.subr.bf16.mxu0 0
      %247 = vmatpush2.bf16.msra.mxu0 0
      %248 = vmatprep.mubr.bf16.mxu0 0
      %249 = vmatmul.mubr.bf16.gmra.mxu0 %v204
      %v250 = vpop.f32.mrf.mxu0
      %v251 = vadd.f32 0.0, %v250
      %v252 = vpop.f32.mrf.mxu0
      %v253 = vadd.f32 0.0, %v252
      %v254 = vpop.f32.mrf.mxu0
      %v255 = vpop.f32.mrf.mxu0
      %256 = vdwg.mxu0
      %257 = vmatprep.subr.bf16.mxu0 0
      %258 = vmatpush1.bf16.msra.mxu0 0
      %259 = vmatprep.subr.bf16.mxu0 0
      %260 = vmatpush1.bf16.msra.mxu0 0
      %261 = vmatprep.subr.bf16.mxu0 0
      %262 = vmatpush1.bf16.msra.mxu0 0
      %263 = vmatprep.subr.bf16.mxu0 0
      %264 = vmatpush1.bf16.msra.mxu0 0
      %265 = vmatprep.subr.bf16.mxu0 0
      %266 = vmatpush1.bf16.msra.mxu0 0
      %267 = vmatprep.subr.bf16.mxu0 0
      %268 = vmatpush1.bf16.msra.mxu0 0
      %269 = vmatprep.subr.bf16.mxu0 0
      %270 = vmatpush1.bf16.msra.mxu0 0
      %271 = vmatprep.subr.bf16.mxu0 0
      %272 = vmatpush1.bf16.msra.mxu0 %v214
      %273 = vmatprep.subr.bf16.mxu0 0
      %274 = vmatpush2.bf16.msra.mxu0 0
      %275 = vmatprep.subr.bf16.mxu0 0
      %276 = vmatpush2.bf16.msra.mxu0 0
      %277 = vmatprep.subr.bf16.mxu0 0
      %278 = vmatpush2.bf16.msra.mxu0 0
      %279 = vmatprep.subr.bf16.mxu0 0
      %280 = vmatpush2.bf16.msra.mxu0 0
      %281 = vmatprep.subr.bf16.mxu0 0
      %282 = vmatpush2.bf16.msra.mxu0 0
      %283 = vmatprep.subr.bf16.mxu0 0
      %284 = vmatpush2.bf16.msra.mxu0 0
      %285 = vmatprep.subr.bf16.mxu0 0
      %286 = vmatpush2.bf16.msra.mxu0 0
      %287 = vmatprep.subr.bf16.mxu0 0
      %288 = vmatpush2.bf16.msra.mxu0 0
      %289 = vmatprep.mubr.bf16.mxu0 0
      %290 = vmatmul.mubr.bf16.gmra.mxu0 %v204
      %v291 = vpop.f32.mrf.mxu0
      %v292 = vadd.f32 0.0, %v291
      %v293 = vpop.f32.mrf.mxu0
      %v294 = vpop.f32.mrf.mxu0
      %v295 = vpop.f32.mrf.mxu0
      %296 = vdwg.mxu0
      %v298 = vsel %vm202, %v172, 0
      %v301 = vsel %vm206, %v184, 0
      %v304 = vsel %vm206, %v192, 0
      %v307 = vsel %vm206, %v191, 0
      %309 = vmatprep.subr.bf16.mxu0 0
      %310 = vmatpush1.bf16.msra.mxu0 0
      %311 = vmatprep.subr.bf16.mxu0 0
      %312 = vmatpush1.bf16.msra.mxu0 0
      %313 = vmatprep.subr.bf16.mxu0 0
      %314 = vmatpush1.bf16.msra.mxu0 0
      %315 = vmatprep.subr.bf16.mxu0 0
      %316 = vmatpush1.bf16.msra.mxu0 0
      %317 = vmatprep.subr.bf16.mxu0 0
      %318 = vmatpush1.bf16.msra.mxu0 0
      %319 = vmatprep.subr.bf16.mxu0 0
      %320 = vmatpush1.bf16.msra.mxu0 0
      %321 = vmatprep.subr.bf16.mxu0 0
      %322 = vmatpush1.bf16.msra.mxu0 0
      %323 = vmatprep.subr.bf16.mxu0 %v304
      %324 = vmatpush1.bf16.msra.mxu0 %v301
      %325 = vmatprep.subr.bf16.mxu0 0
      %326 = vmatpush2.bf16.msra.mxu0 0
      %327 = vmatprep.subr.bf16.mxu0 0
      %328 = vmatpush2.bf16.msra.mxu0 0
      %329 = vmatprep.subr.bf16.mxu0 0
      %330 = vmatpush2.bf16.msra.mxu0 0
      %331 = vmatprep.subr.bf16.mxu0 0
      %332 = vmatpush2.bf16.msra.mxu0 0
      %333 = vmatprep.subr.bf16.mxu0 0
      %334 = vmatpush2.bf16.msra.mxu0 0
      %335 = vmatprep.subr.bf16.mxu0 0
      %336 = vmatpush2.bf16.msra.mxu0 0
      %337 = vmatprep.subr.bf16.mxu0 0
      %338 = vmatpush2.bf16.msra.mxu0 0
      %339 = vmatprep.subr.bf16.mxu0 0
      %340 = vmatpush2.bf16.msra.mxu0 0
      %341 = vmatprep.mubr.bf16.mxu0 0
      %342 = vmatmul.mubr.bf16.gmra.mxu0 %v298
      %v343 = vpop.f32.mrf.mxu0
      %v344 = vadd.f32 %v251, %v343
      %v345 = vpop.f32.mrf.mxu0
      %v346 = vadd.f32 %v253, %v345
      %v347 = vpop.f32.mrf.mxu0
      %v348 = vpop.f32.mrf.mxu0
      %349 = vdwg.mxu0
      %350 = vmatprep.subr.bf16.mxu0 0
      %351 = vmatpush1.bf16.msra.mxu0 0
      %352 = vmatprep.subr.bf16.mxu0 0
      %353 = vmatpush1.bf16.msra.mxu0 0
      %354 = vmatprep.subr.bf16.mxu0 0
      %355 = vmatpush1.bf16.msra.mxu0 0
      %356 = vmatprep.subr.bf16.mxu0 0
      %357 = vmatpush1.bf16.msra.mxu0 0
      %358 = vmatprep.subr.bf16.mxu0 0
      %359 = vmatpush1.bf16.msra.mxu0 0
      %360 = vmatprep.subr.bf16.mxu0 0
      %361 = vmatpush1.bf16.msra.mxu0 0
      %362 = vmatprep.subr.bf16.mxu0 0
      %363 = vmatpush1.bf16.msra.mxu0 0
      %364 = vmatprep.subr.bf16.mxu0 0
      %365 = vmatpush1.bf16.msra.mxu0 %v307
      %366 = vmatprep.subr.bf16.mxu0 0
      %367 = vmatpush2.bf16.msra.mxu0 0
      %368 = vmatprep.subr.bf16.mxu0 0
      %369 = vmatpush2.bf16.msra.mxu0 0
      %370 = vmatprep.subr.bf16.mxu0 0
      %371 = vmatpush2.bf16.msra.mxu0 0
      %372 = vmatprep.subr.bf16.mxu0 0
      %373 = vmatpush2.bf16.msra.mxu0 0
      %374 = vmatprep.subr.bf16.mxu0 0
      %375 = vmatpush2.bf16.msra.mxu0 0
      %376 = vmatprep.subr.bf16.mxu0 0
      %377 = vmatpush2.bf16.msra.mxu0 0
      %378 = vmatprep.subr.bf16.mxu0 0
      %379 = vmatpush2.bf16.msra.mxu0 0
      %380 = vmatprep.subr.bf16.mxu0 0
      %381 = vmatpush2.bf16.msra.mxu0 0
      %382 = vmatprep.mubr.bf16.mxu0 0
      %383 = vmatmul.mubr.bf16.gmra.mxu0 %v298
      %v384 = vpop.f32.mrf.mxu0
      %v385 = vadd.f32 %v292, %v384
      %v386 = vpop.f32.mrf.mxu0
      %v387 = vpop.f32.mrf.mxu0
      %v388 = vpop.f32.mrf.mxu0
      %389 = vdwg.mxu0
      %s390 = scalar_lea.vmem %s0, 4
      %v391 = vld [vmem:[%s390] sm:$0x3]
      %v392 = vld [vmem:[%s165] sm:$0x3f]
      %v394 = vcombine.high %v392, %v392
      %v396 = vunpack.c.l.s4 1983009808
      %v397 = vunpack.c.0.s8 %v396
      %v398 = vlaneseq
      %v399 = vshrl.u32 %v398, 7
      %v400 = vsub.s32 %v397, %v399
      %v401 = vrot.slane %v392, %v400
      %v403 = vunpack.c.l.s4 1983009808
      %v404 = vunpack.c.0.s8 %v403
      %v405 = vlaneseq
      %v406 = vshrl.u32 %v405, 7
      %v407 = vsub.s32 %v404, %v406
      %v408 = vrot.slane %v394, %v407
      %v409 = vcombine.high %v401, %v401
      %410 = vrot.lane.b32.xlu0 %v401, 126
      %v411 = vpop.permute.xlu0 %410
      %412 = vrot.lane.b32.xlu0 %v409, 126
      %v413 = vpop.permute.xlu0 %412
      %414 = vrot.lane.b32.xlu0 %v408, 126
      %v415 = vpop.permute.xlu0 %414
      %vm416 = vcmask 1031168
      %v417 = vsel %vm416, %v411, %v413
      %v418 = vsel %vm416, %v413, %v415
      %v420 = vsel %vm202, %v391, 0
      %v423 = vsel %vm206, %v417, 0
      %v426 = vsel %vm206, %v418, 0
      %v429 = vsel %vm206, %v415, 0
      %431 = vmatprep.subr.bf16.mxu0 0
      %432 = vmatpush1.bf16.msra.mxu0 0
      %433 = vmatprep.subr.bf16.mxu0 0
      %434 = vmatpush1.bf16.msra.mxu0 0
      %435 = vmatprep.subr.bf16.mxu0 0
      %436 = vmatpush1.bf16.msra.mxu0 0
      %437 = vmatprep.subr.bf16.mxu0 0
      %438 = vmatpush1.bf16.msra.mxu0 0
      %439 = vmatprep.subr.bf16.mxu0 0
      %440 = vmatpush1.bf16.msra.mxu0 0
      %441 = vmatprep.subr.bf16.mxu0 0
      %442 = vmatpush1.bf16.msra.mxu0 0
      %443 = vmatprep.subr.bf16.mxu0 0
      %444 = vmatpush1.bf16.msra.mxu0 0
      %445 = vmatprep.subr.bf16.mxu0 %v426
      %446 = vmatpush1.bf16.msra.mxu0 %v423
      %447 = vmatprep.subr.bf16.mxu0 0
      %448 = vmatpush2.bf16.msra.mxu0 0
      %449 = vmatprep.subr.bf16.mxu0 0
      %450 = vmatpush2.bf16.msra.mxu0 0
      %451 = vmatprep.subr.bf16.mxu0 0
      %452 = vmatpush2.bf16.msra.mxu0 0
      %453 = vmatprep.subr.bf16.mxu0 0
      %454 = vmatpush2.bf16.msra.mxu0 0
      %455 = vmatprep.subr.bf16.mxu0 0
      %456 = vmatpush2.bf16.msra.mxu0 0
      %457 = vmatprep.subr.bf16.mxu0 0
      %458 = vmatpush2.bf16.msra.mxu0 0
      %459 = vmatprep.subr.bf16.mxu0 0
      %460 = vmatpush2.bf16.msra.mxu0 0
      %461 = vmatprep.subr.bf16.mxu0 0
      %462 = vmatpush2.bf16.msra.mxu0 0
      %463 = vmatprep.mubr.bf16.mxu0 0
      %464 = vmatmul.mubr.bf16.gmra.mxu0 %v420
      %v465 = vpop.f32.mrf.mxu0
      %v466 = vadd.f32 0.0, %v465
      %v467 = vpop.f32.mrf.mxu0
      %v468 = vadd.f32 0.0, %v467
      %v469 = vpop.f32.mrf.mxu0
      %v470 = vpop.f32.mrf.mxu0
      %471 = vdwg.mxu0
      %472 = vmatprep.subr.bf16.mxu0 0
      %473 = vmatpush1.bf16.msra.mxu0 0
      %474 = vmatprep.subr.bf16.mxu0 0
      %475 = vmatpush1.bf16.msra.mxu0 0
      %476 = vmatprep.subr.bf16.mxu0 0
      %477 = vmatpush1.bf16.msra.mxu0 0
      %478 = vmatprep.subr.bf16.mxu0 0
      %479 = vmatpush1.bf16.msra.mxu0 0
      %480 = vmatprep.subr.bf16.mxu0 0
      %481 = vmatpush1.bf16.msra.mxu0 0
      %482 = vmatprep.subr.bf16.mxu0 0
      %483 = vmatpush1.bf16.msra.mxu0 0
      %484 = vmatprep.subr.bf16.mxu0 0
      %485 = vmatpush1.bf16.msra.mxu0 0
      %486 = vmatprep.subr.bf16.mxu0 0
      %487 = vmatpush1.bf16.msra.mxu0 %v429
      %488 = vmatprep.subr.bf16.mxu0 0
      %489 = vmatpush2.bf16.msra.mxu0 0
      %490 = vmatprep.subr.bf16.mxu0 0
      %491 = vmatpush2.bf16.msra.mxu0 0
      %492 = vmatprep.subr.bf16.mxu0 0
      %493 = vmatpush2.bf16.msra.mxu0 0
      %494 = vmatprep.subr.bf16.mxu0 0
      %495 = vmatpush2.bf16.msra.mxu0 0
      %496 = vmatprep.subr.bf16.mxu0 0
      %497 = vmatpush2.bf16.msra.mxu0 0
      %498 = vmatprep.subr.bf16.mxu0 0
      %499 = vmatpush2.bf16.msra.mxu0 0
      %500 = vmatprep.subr.bf16.mxu0 0
      %501 = vmatpush2.bf16.msra.mxu0 0
      %502 = vmatprep.subr.bf16.mxu0 0
      %503 = vmatpush2.bf16.msra.mxu0 0
      %504 = vmatprep.mubr.bf16.mxu0 0
      %505 = vmatmul.mubr.bf16.gmra.mxu0 %v420
      %v506 = vpop.f32.mrf.mxu0
      %v507 = vadd.f32 0.0, %v506
      %v508 = vpop.f32.mrf.mxu0
      %v509 = vpop.f32.mrf.mxu0
      %v510 = vpop.f32.mrf.mxu0
      %511 = vdwg.mxu0
      %v512 = vadd.f32 %v344, %v466
      %v513 = vadd.f32 %v346, %v468
      %v514 = vadd.f32 %v385, %v507
      %s515 = scalar_lea.vmem %s0, 6
      %v516 = vld [vmem:[%s515] sm:$0x3]
      %v517 = vld [vmem:[%s165] sm:$0x3f]
      %v519 = vcombine.high %v517, %v517
      %v521 = vunpack.c.l.s4 1983009808
      %v522 = vunpack.c.0.s8 %v521
      %v523 = vlaneseq
      %v524 = vshrl.u32 %v523, 7
      %v525 = vsub.s32 %v522, %v524
      %v526 = vrot.slane %v517, %v525
      %v528 = vunpack.c.l.s4 1983009808
      %v529 = vunpack.c.0.s8 %v528
      %v530 = vlaneseq
      %v531 = vshrl.u32 %v530, 7
      %v532 = vsub.s32 %v529, %v531
      %v533 = vrot.slane %v519, %v532
      %v534 = vcombine.high %v526, %v526
      %535 = vrot.lane.b32.xlu0 %v526, 110
      %v536 = vpop.permute.xlu0 %535
      %537 = vrot.lane.b32.xlu0 %v534, 110
      %v538 = vpop.permute.xlu0 %537
      %539 = vrot.lane.b32.xlu0 %v533, 110
      %v540 = vpop.permute.xlu0 %539
      %vm541 = vcmask 900096
      %v542 = vsel %vm541, %v536, %v538
      %v543 = vsel %vm541, %v538, %v540
      %v545 = vsel %vm202, %v516, 0
      %v548 = vsel %vm206, %v542, 0
      %v551 = vsel %vm206, %v543, 0
      %v554 = vsel %vm206, %v540, 0
      %556 = vmatprep.subr.bf16.mxu0 0
      %557 = vmatpush1.bf16.msra.mxu0 0
      %558 = vmatprep.subr.bf16.mxu0 0
      %559 = vmatpush1.bf16.msra.mxu0 0
      %560 = vmatprep.subr.bf16.mxu0 0
      %561 = vmatpush1.bf16.msra.mxu0 0
      %562 = vmatprep.subr.bf16.mxu0 0
      %563 = vmatpush1.bf16.msra.mxu0 0
      %564 = vmatprep.subr.bf16.mxu0 0
      %565 = vmatpush1.bf16.msra.mxu0 0
      %566 = vmatprep.subr.bf16.mxu0 0
      %567 = vmatpush1.bf16.msra.mxu0 0
      %568 = vmatprep.subr.bf16.mxu0 0
      %569 = vmatpush1.bf16.msra.mxu0 0
      %570 = vmatprep.subr.bf16.mxu0 %v551
      %571 = vmatpush1.bf16.msra.mxu0 %v548
      %572 = vmatprep.subr.bf16.mxu0 0
      %573 = vmatpush2.bf16.msra.mxu0 0
      %574 = vmatprep.subr.bf16.mxu0 0
      %575 = vmatpush2.bf16.msra.mxu0 0
      %576 = vmatprep.subr.bf16.mxu0 0
      %577 = vmatpush2.bf16.msra.mxu0 0
      %578 = vmatprep.subr.bf16.mxu0 0
      %579 = vmatpush2.bf16.msra.mxu0 0
      %580 = vmatprep.subr.bf16.mxu0 0
      %581 = vmatpush2.bf16.msra.mxu0 0
      %582 = vmatprep.subr.bf16.mxu0 0
      %583 = vmatpush2.bf16.msra.mxu0 0
      %584 = vmatprep.subr.bf16.mxu0 0
      %585 = vmatpush2.bf16.msra.mxu0 0
      %586 = vmatprep.subr.bf16.mxu0 0
      %587 = vmatpush2.bf16.msra.mxu0 0
      %588 = vmatprep.mubr.bf16.mxu0 0
      %589 = vmatmul.mubr.bf16.gmra.mxu0 %v545
      %v590 = vpop.f32.mrf.mxu0
      %v591 = vadd.f32 0.0, %v590
      %v592 = vpop.f32.mrf.mxu0
      %v593 = vadd.f32 0.0, %v592
      %v594 = vpop.f32.mrf.mxu0
      %v595 = vpop.f32.mrf.mxu0
      %596 = vdwg.mxu0
      %597 = vmatprep.subr.bf16.mxu0 0
      %598 = vmatpush1.bf16.msra.mxu0 0
      %599 = vmatprep.subr.bf16.mxu0 0
      %600 = vmatpush1.bf16.msra.mxu0 0
      %601 = vmatprep.subr.bf16.mxu0 0
      %602 = vmatpush1.bf16.msra.mxu0 0
      %603 = vmatprep.subr.bf16.mxu0 0
      %604 = vmatpush1.bf16.msra.mxu0 0
      %605 = vmatprep.subr.bf16.mxu0 0
      %606 = vmatpush1.bf16.msra.mxu0 0
      %607 = vmatprep.subr.bf16.mxu0 0
      %608 = vmatpush1.bf16.msra.mxu0 0
      %609 = vmatprep.subr.bf16.mxu0 0
      %610 = vmatpush1.bf16.msra.mxu0 0
      %611 = vmatprep.subr.bf16.mxu0 0
      %612 = vmatpush1.bf16.msra.mxu0 %v554
      %613 = vmatprep.subr.bf16.mxu0 0
      %614 = vmatpush2.bf16.msra.mxu0 0
      %615 = vmatprep.subr.bf16.mxu0 0
      %616 = vmatpush2.bf16.msra.mxu0 0
      %617 = vmatprep.subr.bf16.mxu0 0
      %618 = vmatpush2.bf16.msra.mxu0 0
      %619 = vmatprep.subr.bf16.mxu0 0
      %620 = vmatpush2.bf16.msra.mxu0 0
      %621 = vmatprep.subr.bf16.mxu0 0
      %622 = vmatpush2.bf16.msra.mxu0 0
      %623 = vmatprep.subr.bf16.mxu0 0
      %624 = vmatpush2.bf16.msra.mxu0 0
      %625 = vmatprep.subr.bf16.mxu0 0
      %626 = vmatpush2.bf16.msra.mxu0 0
      %627 = vmatprep.subr.bf16.mxu0 0
      %628 = vmatpush2.bf16.msra.mxu0 0
      %629 = vmatprep.mubr.bf16.mxu0 0
      %630 = vmatmul.mubr.bf16.gmra.mxu0 %v545
      %v631 = vpop.f32.mrf.mxu0
      %v632 = vadd.f32 0.0, %v631
      %v633 = vpop.f32.mrf.mxu0
      %v634 = vpop.f32.mrf.mxu0
      %v635 = vpop.f32.mrf.mxu0
      %636 = vdwg.mxu0
      %v637 = vadd.f32 %v512, %v591
      %v638 = vadd.f32 %v513, %v593
      %v639 = vadd.f32 %v514, %v632
      %s640 = scalar_lea.vmem %s0, 8
      %v641 = vld [vmem:[%s640] sm:$0x3]
      %v642 = vld [vmem:[%s165] sm:$0x3f]
      %v644 = vcombine.high %v642, %v642
      %v646 = vunpack.c.l.s4 1983009808
      %v647 = vunpack.c.0.s8 %v646
      %v648 = vlaneseq
      %v649 = vshrl.u32 %v648, 7
      %v650 = vsub.s32 %v647, %v649
      %v651 = vrot.slane %v642, %v650
      %v653 = vunpack.c.l.s4 1983009808
      %v654 = vunpack.c.0.s8 %v653
      %v655 = vlaneseq
      %v656 = vshrl.u32 %v655, 7
      %v657 = vsub.s32 %v654, %v656
      %v658 = vrot.slane %v644, %v657
      %v659 = vcombine.high %v651, %v651
      %660 = vrot.lane.b32.xlu0 %v651, 109
      %v661 = vpop.permute.xlu0 %660
      %662 = vrot.lane.b32.xlu0 %v659, 109
      %v663 = vpop.permute.xlu0 %662
      %664 = vrot.lane.b32.xlu0 %v658, 109
      %v665 = vpop.permute.xlu0 %664
      %vm666 = vcmask 891904
      %v667 = vsel %vm666, %v661, %v663
      %v668 = vsel %vm666, %v663, %v665
      %v670 = vsel %vm202, %v641, 0
      %v673 = vsel %vm206, %v667, 0
      %v676 = vsel %vm206, %v668, 0
      %v679 = vsel %vm206, %v665, 0
      %681 = vmatprep.subr.bf16.mxu0 0
      %682 = vmatpush1.bf16.msra.mxu0 0
      %683 = vmatprep.subr.bf16.mxu0 0
      %684 = vmatpush1.bf16.msra.mxu0 0
      %685 = vmatprep.subr.bf16.mxu0 0
      %686 = vmatpush1.bf16.msra.mxu0 0
      %687 = vmatprep.subr.bf16.mxu0 0
      %688 = vmatpush1.bf16.msra.mxu0 0
      %689 = vmatprep.subr.bf16.mxu0 0
      %690 = vmatpush1.bf16.msra.mxu0 0
      %691 = vmatprep.subr.bf16.mxu0 0
      %692 = vmatpush1.bf16.msra.mxu0 0
      %693 = vmatprep.subr.bf16.mxu0 0
      %694 = vmatpush1.bf16.msra.mxu0 0
      %695 = vmatprep.subr.bf16.mxu0 %v676
      %696 = vmatpush1.bf16.msra.mxu0 %v673
      %697 = vmatprep.subr.bf16.mxu0 0
      %698 = vmatpush2.bf16.msra.mxu0 0
      %699 = vmatprep.subr.bf16.mxu0 0
      %700 = vmatpush2.bf16.msra.mxu0 0
      %701 = vmatprep.subr.bf16.mxu0 0
      %702 = vmatpush2.bf16.msra.mxu0 0
      %703 = vmatprep.subr.bf16.mxu0 0
      %704 = vmatpush2.bf16.msra.mxu0 0
      %705 = vmatprep.subr.bf16.mxu0 0
      %706 = vmatpush2.bf16.msra.mxu0 0
      %707 = vmatprep.subr.bf16.mxu0 0
      %708 = vmatpush2.bf16.msra.mxu0 0
      %709 = vmatprep.subr.bf16.mxu0 0
      %710 = vmatpush2.bf16.msra.mxu0 0
      %711 = vmatprep.subr.bf16.mxu0 0
      %712 = vmatpush2.bf16.msra.mxu0 0
      %713 = vmatprep.mubr.bf16.mxu0 0
      %714 = vmatmul.mubr.bf16.gmra.mxu0 %v670
      %v715 = vpop.f32.mrf.mxu0
      %v716 = vadd.f32 0.0, %v715
      %v717 = vpop.f32.mrf.mxu0
      %v718 = vadd.f32 0.0, %v717
      %v719 = vpop.f32.mrf.mxu0
      %v720 = vpop.f32.mrf.mxu0
      %721 = vdwg.mxu0
      %722 = vmatprep.subr.bf16.mxu0 0
      %723 = vmatpush1.bf16.msra.mxu0 0
      %724 = vmatprep.subr.bf16.mxu0 0
      %725 = vmatpush1.bf16.msra.mxu0 0
      %726 = vmatprep.subr.bf16.mxu0 0
      %727 = vmatpush1.bf16.msra.mxu0 0
      %728 = vmatprep.subr.bf16.mxu0 0
      %729 = vmatpush1.bf16.msra.mxu0 0
      %730 = vmatprep.subr.bf16.mxu0 0
      %731 = vmatpush1.bf16.msra.mxu0 0
      %732 = vmatprep.subr.bf16.mxu0 0
      %733 = vmatpush1.bf16.msra.mxu0 0
      %734 = vmatprep.subr.bf16.mxu0 0
      %735 = vmatpush1.bf16.msra.mxu0 0
      %736 = vmatprep.subr.bf16.mxu0 0
      %737 = vmatpush1.bf16.msra.mxu0 %v679
      %738 = vmatprep.subr.bf16.mxu0 0
      %739 = vmatpush2.bf16.msra.mxu0 0
      %740 = vmatprep.subr.bf16.mxu0 0
      %741 = vmatpush2.bf16.msra.mxu0 0
      %742 = vmatprep.subr.bf16.mxu0 0
      %743 = vmatpush2.bf16.msra.mxu0 0
      %744 = vmatprep.subr.bf16.mxu0 0
      %745 = vmatpush2.bf16.msra.mxu0 0
      %746 = vmatprep.subr.bf16.mxu0 0
      %747 = vmatpush2.bf16.msra.mxu0 0
      %748 = vmatprep.subr.bf16.mxu0 0
      %749 = vmatpush2.bf16.msra.mxu0 0
      %750 = vmatprep.subr.bf16.mxu0 0
      %751 = vmatpush2.bf16.msra.mxu0 0
      %752 = vmatprep.subr.bf16.mxu0 0
      %753 = vmatpush2.bf16.msra.mxu0 0
      %754 = vmatprep.mubr.bf16.mxu0 0
      %755 = vmatmul.mubr.bf16.gmra.mxu0 %v670
      %v756 = vpop.f32.mrf.mxu0
      %v757 = vadd.f32 0.0, %v756
      %v758 = vpop.f32.mrf.mxu0
      %v759 = vpop.f32.mrf.mxu0
      %v760 = vpop.f32.mrf.mxu0
      %761 = vdwg.mxu0
      %v762 = vadd.f32 %v637, %v716
      %v763 = vadd.f32 %v638, %v718
      %v764 = vadd.f32 %v639, %v757
      %s765 = scalar_lea.vmem %s0, 10
      %v766 = vld [vmem:[%s765] sm:$0x3]
      %v767 = vld [vmem:[%s165] sm:$0x3f]
      %v769 = vcombine.high %v767, %v767
      %v771 = vunpack.c.l.s4 1983009808
      %v772 = vunpack.c.0.s8 %v771
      %v773 = vlaneseq
      %v774 = vshrl.u32 %v773, 7
      %v775 = vsub.s32 %v772, %v774
      %v776 = vrot.slane %v767, %v775
      %v778 = vunpack.c.l.s4 1983009808
      %v779 = vunpack.c.0.s8 %v778
      %v780 = vlaneseq
      %v781 = vshrl.u32 %v780, 7
      %v782 = vsub.s32 %v779, %v781
      %v783 = vrot.slane %v769, %v782
      %v784 = vcombine.high %v776, %v776
      %785 = vrot.lane.b32.xlu0 %v776, 108
      %v786 = vpop.permute.xlu0 %785
      %787 = vrot.lane.b32.xlu0 %v784, 108
      %v788 = vpop.permute.xlu0 %787
      %789 = vrot.lane.b32.xlu0 %v783, 108
      %v790 = vpop.permute.xlu0 %789
      %vm791 = vcmask 883712
      %v792 = vsel %vm791, %v786, %v788
      %v793 = vsel %vm791, %v788, %v790
      %v795 = vsel %vm202, %v766, 0
      %v798 = vsel %vm206, %v792, 0
      %v801 = vsel %vm206, %v793, 0
      %v804 = vsel %vm206, %v790, 0
      %806 = vmatprep.subr.bf16.mxu0 0
      %807 = vmatpush1.bf16.msra.mxu0 0
      %808 = vmatprep.subr.bf16.mxu0 0
      %809 = vmatpush1.bf16.msra.mxu0 0
      %810 = vmatprep.subr.bf16.mxu0 0
      %811 = vmatpush1.bf16.msra.mxu0 0
      %812 = vmatprep.subr.bf16.mxu0 0
      %813 = vmatpush1.bf16.msra.mxu0 0
      %814 = vmatprep.subr.bf16.mxu0 0
      %815 = vmatpush1.bf16.msra.mxu0 0
      %816 = vmatprep.subr.bf16.mxu0 0
      %817 = vmatpush1.bf16.msra.mxu0 0
      %818 = vmatprep.subr.bf16.mxu0 0
      %819 = vmatpush1.bf16.msra.mxu0 0
      %820 = vmatprep.subr.bf16.mxu0 %v801
      %821 = vmatpush1.bf16.msra.mxu0 %v798
      %822 = vmatprep.subr.bf16.mxu0 0
      %823 = vmatpush2.bf16.msra.mxu0 0
      %824 = vmatprep.subr.bf16.mxu0 0
      %825 = vmatpush2.bf16.msra.mxu0 0
      %826 = vmatprep.subr.bf16.mxu0 0
      %827 = vmatpush2.bf16.msra.mxu0 0
      %828 = vmatprep.subr.bf16.mxu0 0
      %829 = vmatpush2.bf16.msra.mxu0 0
      %830 = vmatprep.subr.bf16.mxu0 0
      %831 = vmatpush2.bf16.msra.mxu0 0
      %832 = vmatprep.subr.bf16.mxu0 0
      %833 = vmatpush2.bf16.msra.mxu0 0
      %834 = vmatprep.subr.bf16.mxu0 0
      %835 = vmatpush2.bf16.msra.mxu0 0
      %836 = vmatprep.subr.bf16.mxu0 0
      %837 = vmatpush2.bf16.msra.mxu0 0
      %838 = vmatprep.mubr.bf16.mxu0 0
      %839 = vmatmul.mubr.bf16.gmra.mxu0 %v795
      %v840 = vpop.f32.mrf.mxu0
      %v841 = vadd.f32 0.0, %v840
      %v842 = vpop.f32.mrf.mxu0
      %v843 = vadd.f32 0.0, %v842
      %v844 = vpop.f32.mrf.mxu0
      %v845 = vpop.f32.mrf.mxu0
      %846 = vdwg.mxu0
      %847 = vmatprep.subr.bf16.mxu0 0
      %848 = vmatpush1.bf16.msra.mxu0 0
      %849 = vmatprep.subr.bf16.mxu0 0
      %850 = vmatpush1.bf16.msra.mxu0 0
      %851 = vmatprep.subr.bf16.mxu0 0
      %852 = vmatpush1.bf16.msra.mxu0 0
      %853 = vmatprep.subr.bf16.mxu0 0
      %854 = vmatpush1.bf16.msra.mxu0 0
      %855 = vmatprep.subr.bf16.mxu0 0
      %856 = vmatpush1.bf16.msra.mxu0 0
      %857 = vmatprep.subr.bf16.mxu0 0
      %858 = vmatpush1.bf16.msra.mxu0 0
      %859 = vmatprep.subr.bf16.mxu0 0
      %860 = vmatpush1.bf16.msra.mxu0 0
      %861 = vmatprep.subr.bf16.mxu0 0
      %862 = vmatpush1.bf16.msra.mxu0 %v804
      %863 = vmatprep.subr.bf16.mxu0 0
      %864 = vmatpush2.bf16.msra.mxu0 0
      %865 = vmatprep.subr.bf16.mxu0 0
      %866 = vmatpush2.bf16.msra.mxu0 0
      %867 = vmatprep.subr.bf16.mxu0 0
      %868 = vmatpush2.bf16.msra.mxu0 0
      %869 = vmatprep.subr.bf16.mxu0 0
      %870 = vmatpush2.bf16.msra.mxu0 0
      %871 = vmatprep.subr.bf16.mxu0 0
      %872 = vmatpush2.bf16.msra.mxu0 0
      %873 = vmatprep.subr.bf16.mxu0 0
      %874 = vmatpush2.bf16.msra.mxu0 0
      %875 = vmatprep.subr.bf16.mxu0 0
      %876 = vmatpush2.bf16.msra.mxu0 0
      %877 = vmatprep.subr.bf16.mxu0 0
      %878 = vmatpush2.bf16.msra.mxu0 0
      %879 = vmatprep.mubr.bf16.mxu0 0
      %880 = vmatmul.mubr.bf16.gmra.mxu0 %v795
      %v881 = vpop.f32.mrf.mxu0
      %v882 = vadd.f32 0.0, %v881
      %v883 = vpop.f32.mrf.mxu0
      %v884 = vpop.f32.mrf.mxu0
      %v885 = vpop.f32.mrf.mxu0
      %886 = vdwg.mxu0
      %v887 = vadd.f32 %v762, %v841
      %v888 = vadd.f32 %v763, %v843
      %v889 = vadd.f32 %v764, %v882
      %s890 = scalar_lea.vmem %s0, 12
      %v891 = vld [vmem:[%s890] sm:$0x3]
      %v892 = vld [vmem:[%s165] sm:$0x3f]
      %v894 = vcombine.high %v892, %v892
      %v896 = vunpack.c.l.s4 1983009808
      %v897 = vunpack.c.0.s8 %v896
      %v898 = vlaneseq
      %v899 = vshrl.u32 %v898, 7
      %v900 = vsub.s32 %v897, %v899
      %v901 = vrot.slane %v892, %v900
      %v903 = vunpack.c.l.s4 1983009808
      %v904 = vunpack.c.0.s8 %v903
      %v905 = vlaneseq
      %v906 = vshrl.u32 %v905, 7
      %v907 = vsub.s32 %v904, %v906
      %v908 = vrot.slane %v894, %v907
      %v909 = vcombine.high %v901, %v901
      %910 = vrot.lane.b32.xlu0 %v901, 92
      %v911 = vpop.permute.xlu0 %910
      %912 = vrot.lane.b32.xlu0 %v909, 92
      %v913 = vpop.permute.xlu0 %912
      %914 = vrot.lane.b32.xlu0 %v908, 92
      %v915 = vpop.permute.xlu0 %914
      %vm916 = vcmask 752640
      %v917 = vsel %vm916, %v911, %v913
      %v918 = vsel %vm916, %v913, %v915
      %v920 = vsel %vm202, %v891, 0
      %v923 = vsel %vm206, %v917, 0
      %v926 = vsel %vm206, %v918, 0
      %v929 = vsel %vm206, %v915, 0
      %931 = vmatprep.subr.bf16.mxu0 0
      %932 = vmatpush1.bf16.msra.mxu0 0
      %933 = vmatprep.subr.bf16.mxu0 0
      %934 = vmatpush1.bf16.msra.mxu0 0
      %935 = vmatprep.subr.bf16.mxu0 0
      %936 = vmatpush1.bf16.msra.mxu0 0
      %937 = vmatprep.subr.bf16.mxu0 0
      %938 = vmatpush1.bf16.msra.mxu0 0
      %939 = vmatprep.subr.bf16.mxu0 0
      %940 = vmatpush1.bf16.msra.mxu0 0
      %941 = vmatprep.subr.bf16.mxu0 0
      %942 = vmatpush1.bf16.msra.mxu0 0
      %943 = vmatprep.subr.bf16.mxu0 0
      %944 = vmatpush1.bf16.msra.mxu0 0
      %945 = vmatprep.subr.bf16.mxu0 %v926
      %946 = vmatpush1.bf16.msra.mxu0 %v923
      %947 = vmatprep.subr.bf16.mxu0 0
      %948 = vmatpush2.bf16.msra.mxu0 0
      %949 = vmatprep.subr.bf16.mxu0 0
      %950 = vmatpush2.bf16.msra.mxu0 0
      %951 = vmatprep.subr.bf16.mxu0 0
      %952 = vmatpush2.bf16.msra.mxu0 0
      %953 = vmatprep.subr.bf16.mxu0 0
      %954 = vmatpush2.bf16.msra.mxu0 0
      %955 = vmatprep.subr.bf16.mxu0 0
      %956 = vmatpush2.bf16.msra.mxu0 0
      %957 = vmatprep.subr.bf16.mxu0 0
      %958 = vmatpush2.bf16.msra.mxu0 0
      %959 = vmatprep.subr.bf16.mxu0 0
      %960 = vmatpush2.bf16.msra.mxu0 0
      %961 = vmatprep.subr.bf16.mxu0 0
      %962 = vmatpush2.bf16.msra.mxu0 0
      %963 = vmatprep.mubr.bf16.mxu0 0
      %964 = vmatmul.mubr.bf16.gmra.mxu0 %v920
      %v965 = vpop.f32.mrf.mxu0
      %v966 = vadd.f32 0.0, %v965
      %v967 = vpop.f32.mrf.mxu0
      %v968 = vadd.f32 0.0, %v967
      %v969 = vpop.f32.mrf.mxu0
      %v970 = vpop.f32.mrf.mxu0
      %971 = vdwg.mxu0
      %972 = vmatprep.subr.bf16.mxu0 0
      %973 = vmatpush1.bf16.msra.mxu0 0
      %974 = vmatprep.subr.bf16.mxu0 0
      %975 = vmatpush1.bf16.msra.mxu0 0
      %976 = vmatprep.subr.bf16.mxu0 0
      %977 = vmatpush1.bf16.msra.mxu0 0
      %978 = vmatprep.subr.bf16.mxu0 0
      %979 = vmatpush1.bf16.msra.mxu0 0
      %980 = vmatprep.subr.bf16.mxu0 0
      %981 = vmatpush1.bf16.msra.mxu0 0
      %982 = vmatprep.subr.bf16.mxu0 0
      %983 = vmatpush1.bf16.msra.mxu0 0
      %984 = vmatprep.subr.bf16.mxu0 0
      %985 = vmatpush1.bf16.msra.mxu0 0
      %986 = vmatprep.subr.bf16.mxu0 0
      %987 = vmatpush1.bf16.msra.mxu0 %v929
      %988 = vmatprep.subr.bf16.mxu0 0
      %989 = vmatpush2.bf16.msra.mxu0 0
      %990 = vmatprep.subr.bf16.mxu0 0
      %991 = vmatpush2.bf16.msra.mxu0 0
      %992 = vmatprep.subr.bf16.mxu0 0
      %993 = vmatpush2.bf16.msra.mxu0 0
      %994 = vmatprep.subr.bf16.mxu0 0
      %995 = vmatpush2.bf16.msra.mxu0 0
      %996 = vmatprep.subr.bf16.mxu0 0
      %997 = vmatpush2.bf16.msra.mxu0 0
      %998 = vmatprep.subr.bf16.mxu0 0
      %999 = vmatpush2.bf16.msra.mxu0 0
      %1000 = vmatprep.subr.bf16.mxu0 0
      %1001 = vmatpush2.bf16.msra.mxu0 0
      %1002 = vmatprep.subr.bf16.mxu0 0
      %1003 = vmatpush2.bf16.msra.mxu0 0
      %1004 = vmatprep.mubr.bf16.mxu0 0
      %1005 = vmatmul.mubr.bf16.gmra.mxu0 %v920
      %v1006 = vpop.f32.mrf.mxu0
      %v1007 = vadd.f32 0.0, %v1006
      %v1008 = vpop.f32.mrf.mxu0
      %v1009 = vpop.f32.mrf.mxu0
      %v1010 = vpop.f32.mrf.mxu0
      %1011 = vdwg.mxu0
      %v1012 = vadd.f32 %v887, %v966
      %v1013 = vadd.f32 %v888, %v968
      %v1014 = vadd.f32 %v889, %v1007
      %s1015 = scalar_lea.vmem %s0, 14
      %v1016 = vld [vmem:[%s1015] sm:$0x3]
      %v1017 = vld [vmem:[%s165] sm:$0x3f]
      %v1019 = vcombine.high %v1017, %v1017
      %v1021 = vunpack.c.l.s4 1983009808
      %v1022 = vunpack.c.0.s8 %v1021
      %v1023 = vlaneseq
      %v1024 = vshrl.u32 %v1023, 7
      %v1025 = vsub.s32 %v1022, %v1024
      %v1026 = vrot.slane %v1017, %v1025
      %v1028 = vunpack.c.l.s4 1983009808
      %v1029 = vunpack.c.0.s8 %v1028
      %v1030 = vlaneseq
      %v1031 = vshrl.u32 %v1030, 7
      %v1032 = vsub.s32 %v1029, %v1031
      %v1033 = vrot.slane %v1019, %v1032
      %v1034 = vcombine.high %v1026, %v1026
      %1035 = vrot.lane.b32.xlu0 %v1026, 91
      %v1036 = vpop.permute.xlu0 %1035
      %1037 = vrot.lane.b32.xlu0 %v1034, 91
      %v1038 = vpop.permute.xlu0 %1037
      %1039 = vrot.lane.b32.xlu0 %v1033, 91
      %v1040 = vpop.permute.xlu0 %1039
      %vm1041 = vcmask 744448
      %v1042 = vsel %vm1041, %v1036, %v1038
      %v1043 = vsel %vm1041, %v1038, %v1040
      %v1045 = vsel %vm202, %v1016, 0
      %v1048 = vsel %vm206, %v1042, 0
      %v1051 = vsel %vm206, %v1043, 0
      %v1054 = vsel %vm206, %v1040, 0
      %1056 = vmatprep.subr.bf16.mxu0 0
      %1057 = vmatpush1.bf16.msra.mxu0 0
      %1058 = vmatprep.subr.bf16.mxu0 0
      %1059 = vmatpush1.bf16.msra.mxu0 0
      %1060 = vmatprep.subr.bf16.mxu0 0
      %1061 = vmatpush1.bf16.msra.mxu0 0
      %1062 = vmatprep.subr.bf16.mxu0 0
      %1063 = vmatpush1.bf16.msra.mxu0 0
      %1064 = vmatprep.subr.bf16.mxu0 0
      %1065 = vmatpush1.bf16.msra.mxu0 0
      %1066 = vmatprep.subr.bf16.mxu0 0
      %1067 = vmatpush1.bf16.msra.mxu0 0
      %1068 = vmatprep.subr.bf16.mxu0 0
      %1069 = vmatpush1.bf16.msra.mxu0 0
      %1070 = vmatprep.subr.bf16.mxu0 %v1051
      %1071 = vmatpush1.bf16.msra.mxu0 %v1048
      %1072 = vmatprep.subr.bf16.mxu0 0
      %1073 = vmatpush2.bf16.msra.mxu0 0
      %1074 = vmatprep.subr.bf16.mxu0 0
      %1075 = vmatpush2.bf16.msra.mxu0 0
      %1076 = vmatprep.subr.bf16.mxu0 0
      %1077 = vmatpush2.bf16.msra.mxu0 0
      %1078 = vmatprep.subr.bf16.mxu0 0
      %1079 = vmatpush2.bf16.msra.mxu0 0
      %1080 = vmatprep.subr.bf16.mxu0 0
      %1081 = vmatpush2.bf16.msra.mxu0 0
      %1082 = vmatprep.subr.bf16.mxu0 0
      %1083 = vmatpush2.bf16.msra.mxu0 0
      %1084 = vmatprep.subr.bf16.mxu0 0
      %1085 = vmatpush2.bf16.msra.mxu0 0
      %1086 = vmatprep.subr.bf16.mxu0 0
      %1087 = vmatpush2.bf16.msra.mxu0 0
      %1088 = vmatprep.mubr.bf16.mxu0 0
      %1089 = vmatmul.mubr.bf16.gmra.mxu0 %v1045
      %v1090 = vpop.f32.mrf.mxu0
      %v1091 = vadd.f32 0.0, %v1090
      %v1092 = vpop.f32.mrf.mxu0
      %v1093 = vadd.f32 0.0, %v1092
      %v1094 = vpop.f32.mrf.mxu0
      %v1095 = vpop.f32.mrf.mxu0
      %1096 = vdwg.mxu0
      %1097 = vmatprep.subr.bf16.mxu0 0
      %1098 = vmatpush1.bf16.msra.mxu0 0
      %1099 = vmatprep.subr.bf16.mxu0 0
      %1100 = vmatpush1.bf16.msra.mxu0 0
      %1101 = vmatprep.subr.bf16.mxu0 0
      %1102 = vmatpush1.bf16.msra.mxu0 0
      %1103 = vmatprep.subr.bf16.mxu0 0
      %1104 = vmatpush1.bf16.msra.mxu0 0
      %1105 = vmatprep.subr.bf16.mxu0 0
      %1106 = vmatpush1.bf16.msra.mxu0 0
      %1107 = vmatprep.subr.bf16.mxu0 0
      %1108 = vmatpush1.bf16.msra.mxu0 0
      %1109 = vmatprep.subr.bf16.mxu0 0
      %1110 = vmatpush1.bf16.msra.mxu0 0
      %1111 = vmatprep.subr.bf16.mxu0 0
      %1112 = vmatpush1.bf16.msra.mxu0 %v1054
      %1113 = vmatprep.subr.bf16.mxu0 0
      %1114 = vmatpush2.bf16.msra.mxu0 0
      %1115 = vmatprep.subr.bf16.mxu0 0
      %1116 = vmatpush2.bf16.msra.mxu0 0
      %1117 = vmatprep.subr.bf16.mxu0 0
      %1118 = vmatpush2.bf16.msra.mxu0 0
      %1119 = vmatprep.subr.bf16.mxu0 0
      %1120 = vmatpush2.bf16.msra.mxu0 0
      %1121 = vmatprep.subr.bf16.mxu0 0
      %1122 = vmatpush2.bf16.msra.mxu0 0
      %1123 = vmatprep.subr.bf16.mxu0 0
      %1124 = vmatpush2.bf16.msra.mxu0 0
      %1125 = vmatprep.subr.bf16.mxu0 0
      %1126 = vmatpush2.bf16.msra.mxu0 0
      %1127 = vmatprep.subr.bf16.mxu0 0
      %1128 = vmatpush2.bf16.msra.mxu0 0
      %1129 = vmatprep.mubr.bf16.mxu0 0
      %1130 = vmatmul.mubr.bf16.gmra.mxu0 %v1045
      %v1131 = vpop.f32.mrf.mxu0
      %v1132 = vadd.f32 0.0, %v1131
      %v1133 = vpop.f32.mrf.mxu0
      %v1134 = vpop.f32.mrf.mxu0
      %v1135 = vpop.f32.mrf.mxu0
      %1136 = vdwg.mxu0
      %v1137 = vadd.f32 %v1012, %v1091
      %v1138 = vadd.f32 %v1013, %v1093
      %v1139 = vadd.f32 %v1014, %v1132
      %s1140 = scalar_lea.vmem %s0, 16
      %v1141 = vld [vmem:[%s1140] sm:$0x3]
      %v1142 = vld [vmem:[%s165] sm:$0x3f]
      %v1144 = vcombine.high %v1142, %v1142
      %v1146 = vunpack.c.l.s4 1983009808
      %v1147 = vunpack.c.0.s8 %v1146
      %v1148 = vlaneseq
      %v1149 = vshrl.u32 %v1148, 7
      %v1150 = vsub.s32 %v1147, %v1149
      %v1151 = vrot.slane %v1142, %v1150
      %v1153 = vunpack.c.l.s4 1983009808
      %v1154 = vunpack.c.0.s8 %v1153
      %v1155 = vlaneseq
      %v1156 = vshrl.u32 %v1155, 7
      %v1157 = vsub.s32 %v1154, %v1156
      %v1158 = vrot.slane %v1144, %v1157
      %v1159 = vcombine.high %v1151, %v1151
      %1160 = vrot.lane.b32.xlu0 %v1151, 90
      %v1161 = vpop.permute.xlu0 %1160
      %1162 = vrot.lane.b32.xlu0 %v1159, 90
      %v1163 = vpop.permute.xlu0 %1162
      %1164 = vrot.lane.b32.xlu0 %v1158, 90
      %v1165 = vpop.permute.xlu0 %1164
      %vm1166 = vcmask 736256
      %v1167 = vsel %vm1166, %v1161, %v1163
      %v1168 = vsel %vm1166, %v1163, %v1165
      %v1170 = vsel %vm202, %v1141, 0
      %v1173 = vsel %vm206, %v1167, 0
      %v1176 = vsel %vm206, %v1168, 0
      %v1179 = vsel %vm206, %v1165, 0
      %1181 = vmatprep.subr.bf16.mxu0 0
      %1182 = vmatpush1.bf16.msra.mxu0 0
      %1183 = vmatprep.subr.bf16.mxu0 0
      %1184 = vmatpush1.bf16.msra.mxu0 0
      %1185 = vmatprep.subr.bf16.mxu0 0
      %1186 = vmatpush1.bf16.msra.mxu0 0
      %1187 = vmatprep.subr.bf16.mxu0 0
      %1188 = vmatpush1.bf16.msra.mxu0 0
      %1189 = vmatprep.subr.bf16.mxu0 0
      %1190 = vmatpush1.bf16.msra.mxu0 0
      %1191 = vmatprep.subr.bf16.mxu0 0
      %1192 = vmatpush1.bf16.msra.mxu0 0
      %1193 = vmatprep.subr.bf16.mxu0 0
      %1194 = vmatpush1.bf16.msra.mxu0 0
      %1195 = vmatprep.subr.bf16.mxu0 %v1176
      %1196 = vmatpush1.bf16.msra.mxu0 %v1173
      %1197 = vmatprep.subr.bf16.mxu0 0
      %1198 = vmatpush2.bf16.msra.mxu0 0
      %1199 = vmatprep.subr.bf16.mxu0 0
      %1200 = vmatpush2.bf16.msra.mxu0 0
      %1201 = vmatprep.subr.bf16.mxu0 0
      %1202 = vmatpush2.bf16.msra.mxu0 0
      %1203 = vmatprep.subr.bf16.mxu0 0
      %1204 = vmatpush2.bf16.msra.mxu0 0
      %1205 = vmatprep.subr.bf16.mxu0 0
      %1206 = vmatpush2.bf16.msra.mxu0 0
      %1207 = vmatprep.subr.bf16.mxu0 0
      %1208 = vmatpush2.bf16.msra.mxu0 0
      %1209 = vmatprep.subr.bf16.mxu0 0
      %1210 = vmatpush2.bf16.msra.mxu0 0
      %1211 = vmatprep.subr.bf16.mxu0 0
      %1212 = vmatpush2.bf16.msra.mxu0 0
      %1213 = vmatprep.mubr.bf16.mxu0 0
      %1214 = vmatmul.mubr.bf16.gmra.mxu0 %v1170
      %v1215 = vpop.f32.mrf.mxu0
      %v1216 = vadd.f32 0.0, %v1215
      %v1217 = vpop.f32.mrf.mxu0
      %v1218 = vadd.f32 0.0, %v1217
      %v1219 = vpop.f32.mrf.mxu0
      %v1220 = vpop.f32.mrf.mxu0
      %1221 = vdwg.mxu0
      %1222 = vmatprep.subr.bf16.mxu0 0
      %1223 = vmatpush1.bf16.msra.mxu0 0
      %1224 = vmatprep.subr.bf16.mxu0 0
      %1225 = vmatpush1.bf16.msra.mxu0 0
      %1226 = vmatprep.subr.bf16.mxu0 0
      %1227 = vmatpush1.bf16.msra.mxu0 0
      %1228 = vmatprep.subr.bf16.mxu0 0
      %1229 = vmatpush1.bf16.msra.mxu0 0
      %1230 = vmatprep.subr.bf16.mxu0 0
      %1231 = vmatpush1.bf16.msra.mxu0 0
      %1232 = vmatprep.subr.bf16.mxu0 0
      %1233 = vmatpush1.bf16.msra.mxu0 0
      %1234 = vmatprep.subr.bf16.mxu0 0
      %1235 = vmatpush1.bf16.msra.mxu0 0
      %1236 = vmatprep.subr.bf16.mxu0 0
      %1237 = vmatpush1.bf16.msra.mxu0 %v1179
      %1238 = vmatprep.subr.bf16.mxu0 0
      %1239 = vmatpush2.bf16.msra.mxu0 0
      %1240 = vmatprep.subr.bf16.mxu0 0
      %1241 = vmatpush2.bf16.msra.mxu0 0
      %1242 = vmatprep.subr.bf16.mxu0 0
      %1243 = vmatpush2.bf16.msra.mxu0 0
      %1244 = vmatprep.subr.bf16.mxu0 0
      %1245 = vmatpush2.bf16.msra.mxu0 0
      %1246 = vmatprep.subr.bf16.mxu0 0
      %1247 = vmatpush2.bf16.msra.mxu0 0
      %1248 = vmatprep.subr.bf16.mxu0 0
      %1249 = vmatpush2.bf16.msra.mxu0 0
      %1250 = vmatprep.subr.bf16.mxu0 0
      %1251 = vmatpush2.bf16.msra.mxu0 0
      %1252 = vmatprep.subr.bf16.mxu0 0
      %1253 = vmatpush2.bf16.msra.mxu0 0
      %1254 = vmatprep.mubr.bf16.mxu0 0
      %1255 = vmatmul.mubr.bf16.gmra.mxu0 %v1170
      %v1256 = vpop.f32.mrf.mxu0
      %v1257 = vadd.f32 0.0, %v1256
      %v1258 = vpop.f32.mrf.mxu0
      %v1259 = vpop.f32.mrf.mxu0
      %v1260 = vpop.f32.mrf.mxu0
      %1261 = vdwg.mxu0
      %v1262 = vadd.f32 %v1137, %v1216
      %v1263 = vadd.f32 %v1138, %v1218
      %v1264 = vadd.f32 %v1139, %v1257
      %v1265 = vld [vmem:[%s2] sm:$0xf]
      %1267 = vset.pattern.permute.xlu0 0
      %1268 = vperm.xlu0 %1267, %v1265
      %v1269 = vpop.permute.xlu0 %1268
      %v1271 = vadd.f32 %v1262, %v1269
      %v1272 = vadd.f32 %v1263, %v1269
      %v1273 = vadd.f32 %v1264, %v1269
      %v1276 = vcombine.low %v1271, %v1272
      %1278 = vst [vmem:[%s170] sm:$0xff] %v1276
      %vm1279 = vcmask 257024
      %1280 = vst.msk [vmem:[%s170 + $0x8] sm:$0xf] %vm1279, %v1273
      %p1281 = scmp.lt.s32.totalorder %s14, 1
      %s1282 = scalar_select %p1281, %s14, 1
      %s1283 = smul.addr %s1282, 3
      %s1284 = smul.addr %s1283, 4
      %s1285 = scalar_lea.vmem %s3, %s1284
      // Predicated region
      $region33: #{residual_group.10} parent=31 // pred_check
        %p1286 = pneg %p100
      $region34: #{residual_group.10} parent=31 // pred_check_branch
        %1288 = sbr.rel (%p1286) target = $region36
      $region35: #{residual_group.10} parent=31 // pred_region
        _
      $region36: #{residual_group.10} parent=31 // pred_fallthru
        _
    $region32: #{residual_group.10} parent=5 // pred_fallthru
      _
    %p1289 = scmp.le.s32.totalorder 2, %s9
    // Predicated region
    $region37: #{residual_group.10} parent=5 // pred_check
      %p1290 = pneg %p1289
    $region38: #{residual_group.10} parent=5 // pred_check_branch
      %1292 = sbr.rel (%p1290) target = $region40
    $region39: #{residual_group.10} parent=5 // pred_region
      %s1293 = ssub.s32 %s9, 2
      // Predicated region
      $region41: #{residual_group.10} parent=39 // pred_check
        %p1294 = pneg %p106
      $region42: #{residual_group.10} parent=39 // pred_check_branch
        %1296 = sbr.rel (%p1294) target = $region44
      $region43: #{residual_group.10} parent=39 // pred_region
        %p1297 = scmp.lt.s32.totalorder %s15, 1
        %s1298 = scalar_select %p1297, %s15, 1
        %s1299 = smul.addr %s1298, 3
        %s1300 = smul.addr %s1299, 4
        %s1301 = scalar_lea.vmem %s3, %s1300
      $region44: #{residual_group.10} parent=39 // pred_fallthru
        _
    $region40: #{residual_group.10} parent=5 // pred_fallthru
      _
  $region6: #{residual_group.10} parent=0 // loop_footer
    %s13 = sadd.s32 1, %s9
  $region7: #{residual_group.10} parent=0 // loop_footer_branch
    %8 = sbr.rel target = $region3
  $region8: #{residual_group.10} parent=0 // loop_exit
    _

// kernel: residual_group.11
$region0: #{residual_group.11}
  #allocation0 [shape = 'u32[]', space=smem, size = 0x4, offset = 0x4, fixed_abs, tag = 'smem constant byte address 0x4 - core index']
  #allocation1 [shape = 'u32[144,128]{1,0:T(1,128)}', space=vmem, size = 0x12000, scoped, tag = 'internal scratch']
  %s0 = inlined_call_operand.vmem [shape: bf16[2,9,4,4], index: 0, kind: input, shape index: {}]
  %s1 = inlined_call_operand.vmem [shape: bf16[2,4,342], index: 1, kind: input, shape index: {}]
  %s2 = inlined_call_operand.vmem [shape: f32[1,4,1], index: 2, kind: input, shape index: {}]
  %s3 = inlined_call_operand.vmem [shape: f32[2,4,288], index: 3, kind: output, shape index: {}]
  %s4 = sld [smem:[#allocation0]]
  $region45: #{residual_group.11} parent=0
    _
  %s6 = ssub.s32 1, %s4
  %s7 = scalar_select 0, %s6, %s4
  loop: start=0, step=1, limit=4
  $region2: #{residual_group.11} parent=0 // loop_pre_header
    _
  $region3: #{residual_group.11} parent=0 // loop_header
    %s9 = sphi 0, %s13
    %p10 = scmp.ge.s32.totalorder %s9, 4
    %s19 = sphi 0, %s21
    %s22 = sphi 0, %s19
    %s23 = sphi 0, %s22
    %s39 = sphi 0, %s23
    %s45 = sphi 0, %s47
    %s48 = sphi 0, %s45
    %s49 = sphi 0, %s48
    %s65 = sphi 0, %s49
    %s69 = sphi 0, %s69
    %s71 = sphi 0, %s69
    %s72 = sphi 0, %s71
    %s86 = sphi 0, %s72
    %s92 = sphi 0, %s94
    %s95 = sphi 0, %s92
    %s96 = sphi 0, %s95
    %s112 = sphi 0, %s96
  $region4: #{residual_group.11} parent=0 // loop_header_branch
    %12 = sbr.rel (%p10) target = $region8
  $region5: #{residual_group.11} parent=0 // loop_body
    %s14 = ssub.s32 %s9, 1
    %s15 = ssub.s32 %s9, 2
    %s16 = sadd.s32 %s9, 1
    %s17 = ssub.s32 %s9, %s16
    %p18 = scmp.eq.s32.totalorder %s17, 0
    %s20 = sadd.s32 %s19, 1
    %s21 = scalar_select %p18, %s19, %s20
    %p24 = pneg %p18
    %p25 = scmp.eq.s32.totalorder %s9, 1
    %p26 = por %p24, %p25
    %p27 = scmp.ne.s32.totalorder %s19, %s22
    %p28 = scmp.eq.s32.totalorder %s9, 0
    %p29 = por %p27, %p28
    %p30 = scmp.ne.s32.totalorder %s19, %s22
    %p31 = scmp.eq.s32.totalorder %s14, 1
    %p32 = por %p30, %p31
    %p33 = scmp.ne.s32.totalorder %s22, %s23
    %p34 = scmp.eq.s32.totalorder %s14, 0
    %p35 = por %p33, %p34
    %p36 = scmp.ne.s32.totalorder %s22, %s23
    %p37 = scmp.eq.s32.totalorder %s15, 1
    %p38 = por %p36, %p37
    %p40 = scmp.ne.s32.totalorder %s23, %s39
    %p41 = scmp.eq.s32.totalorder %s15, 0
    %p42 = por %p40, %p41
    %s43 = ssub.s32 %s9, %s16
    %p44 = scmp.eq.s32.totalorder %s43, 0
    %s46 = sadd.s32 %s45, 1
    %s47 = scalar_select %p44, %s45, %s46
    %p50 = pneg %p44
    %p51 = scmp.eq.s32.totalorder %s9, 1
    %p52 = por %p50, %p51
    %p53 = scmp.ne.s32.totalorder %s45, %s48
    %p54 = scmp.eq.s32.totalorder %s9, 0
    %p55 = por %p53, %p54
    %p56 = scmp.ne.s32.totalorder %s45, %s48
    %p57 = scmp.eq.s32.totalorder %s14, 1
    %p58 = por %p56, %p57
    %p59 = scmp.ne.s32.totalorder %s48, %s49
    %p60 = scmp.eq.s32.totalorder %s14, 0
    %p61 = por %p59, %p60
    %p62 = scmp.ne.s32.totalorder %s48, %s49
    %p63 = scmp.eq.s32.totalorder %s15, 1
    %p64 = por %p62, %p63
    %p66 = scmp.ne.s32.totalorder %s49, %s65
    %p67 = scmp.eq.s32.totalorder %s15, 0
    %p68 = por %p66, %p67
    %s70 = sadd.s32 %s69, 1
    %p73 = scmp.eq.s32.totalorder %s9, 1
    %p74 = scmp.ne.s32.totalorder %s69, %s71
    %p75 = scmp.eq.s32.totalorder %s9, 0
    %p76 = por %p74, %p75
    %p77 = scmp.ne.s32.totalorder %s69, %s71
    %p78 = scmp.eq.s32.totalorder %s14, 1
    %p79 = por %p77, %p78
    %p80 = scmp.ne.s32.totalorder %s71, %s72
    %p81 = scmp.eq.s32.totalorder %s14, 0
    %p82 = por %p80, %p81
    %p83 = scmp.ne.s32.totalorder %s71, %s72
    %p84 = scmp.eq.s32.totalorder %s15, 1
    %p85 = por %p83, %p84
    %p87 = scmp.ne.s32.totalorder %s72, %s86
    %p88 = scmp.eq.s32.totalorder %s15, 0
    %p89 = por %p87, %p88
    %s90 = ssub.s32 %s9, %s16
    %p91 = scmp.eq.s32.totalorder %s90, 0
    %s93 = sadd.s32 %s92, 1
    %s94 = scalar_select %p91, %s92, %s93
    %p97 = pneg %p91
    %p98 = scmp.eq.s32.totalorder %s9, 1
    %p99 = por %p97, %p98
    %p100 = scmp.ne.s32.totalorder %s92, %s95
    %p101 = scmp.eq.s32.totalorder %s9, 0
    %p102 = por %p100, %p101
    %p103 = scmp.ne.s32.totalorder %s92, %s95
    %p104 = scmp.eq.s32.totalorder %s14, 1
    %p105 = por %p103, %p104
    %p106 = scmp.ne.s32.totalorder %s95, %s96
    %p107 = scmp.eq.s32.totalorder %s14, 0
    %p108 = por %p106, %p107
    %p109 = scmp.ne.s32.totalorder %s95, %s96
    %p110 = scmp.eq.s32.totalorder %s15, 1
    %p111 = por %p109, %p110
    %p113 = scmp.ne.s32.totalorder %s96, %s112
    %p114 = scmp.eq.s32.totalorder %s15, 0
    %p115 = por %p113, %p114
    %p116 = scmp.le.s32.totalorder 1, %s9
    %p117 = scmp.lt.s32.totalorder %s9, 3
    %p118 = pnand %p116, %p117
    %p119 = pneg %p118
    // Predicated region
    $region9: #{residual_group.11} parent=5 // pred_check
      _
    $region10: #{residual_group.11} parent=5 // pred_check_branch
      %121 = sbr.rel (%p118) target = $region12
    $region11: #{residual_group.11} parent=5 // pred_region
      %s122 = ssub.s32 %s9, 1
      // Predicated region
      $region13: #{residual_group.11} parent=11 // pred_check
        %p123 = pneg %p82
      $region14: #{residual_group.11} parent=11 // pred_check_branch
        %125 = sbr.rel (%p123) target = $region16
      $region15: #{residual_group.11} parent=11 // pred_region
        _
      $region16: #{residual_group.11} parent=11 // pred_fallthru
        _
    $region12: #{residual_group.11} parent=5 // pred_fallthru
      _
    %p126 = scmp.lt.s32.totalorder %s9, 2
    // Predicated region
    $region17: #{residual_group.11} parent=5 // pred_check
      %p127 = pneg %p126
    $region18: #{residual_group.11} parent=5 // pred_check_branch
      %129 = sbr.rel (%p127) target = $region20
    $region19: #{residual_group.11} parent=5 // pred_region
      // Predicated region
      $region21: #{residual_group.11} parent=19 // pred_check
        %p130 = pneg %p29
      $region22: #{residual_group.11} parent=19 // pred_check_branch
        %132 = sbr.rel (%p130) target = $region24
      $region23: #{residual_group.11} parent=19 // pred_region
        %p133 = scmp.lt.s32.totalorder %s9, 1
        %s134 = scalar_select %p133, %s9, 1
        %s135 = smul.addr %s134, 9
        %s136 = smul.addr %s135, 2
        %s137 = scalar_lea.vmem %s0, %s136
      $region24: #{residual_group.11} parent=19 // pred_fallthru
        _
      // Predicated region
      $region25: #{residual_group.11} parent=19 // pred_check
        %p138 = pneg %p55
      $region26: #{residual_group.11} parent=19 // pred_check_branch
        %140 = sbr.rel (%p138) target = $region28
      $region27: #{residual_group.11} parent=19 // pred_region
        %p141 = scmp.lt.s32.totalorder %s9, 1
        %s142 = scalar_select %p141, %s9, 1
        %s143 = smul.addr %s142, 3
        %s144 = smul.addr %s143, 2
        %s145 = scalar_lea.vmem %s1, %s144
      $region28: #{residual_group.11} parent=19 // pred_fallthru
        _
    $region20: #{residual_group.11} parent=5 // pred_fallthru
      _
    %p146 = scmp.le.s32.totalorder 1, %s9
    %p147 = scmp.lt.s32.totalorder %s9, 3
    %p148 = pnand %p146, %p147
    %p149 = pneg %p148
    // Predicated region
    $region29: #{residual_group.11} parent=5 // pred_check
      _
    $region30: #{residual_group.11} parent=5 // pred_check_branch
      %151 = sbr.rel (%p148) target = $region32
    $region31: #{residual_group.11} parent=5 // pred_region
      %s152 = ssub.s32 %s9, 1
      %p153 = scmp.lt.s32.totalorder %s14, 1
      %s154 = scalar_select %p153, %s14, 1
      %s155 = smul.addr %s154, 9
      %s156 = smul.addr %s155, 2
      %s157 = scalar_lea.vmem %s0, %s156
      %p158 = pneg %p35
      %p159 = pneg %p32
      %p160 = scmp.lt.s32.totalorder %s14, 1
      %s161 = scalar_select %p160, %s14, 1
      %s162 = smul.addr %s161, 3
      %s163 = smul.addr %s162, 2
      %s164 = scalar_lea.vmem %s1, %s163
      %p165 = pneg %p61
      %p166 = pneg %p58
      %p167 = pneg %p82
      %p168 = pneg %p79
      %p169 = pneg %p108
      %p170 = pneg %p105
      %p171 = scmp.lt.s32.totalorder %s14, 1
      %s172 = scalar_select %p171, %s14, 1
      %s173 = smul.addr %s172, 3
      %s174 = smul.addr %s173, 4
      %s175 = scalar_lea.vmem %s3, %s174
      %p176 = scmp.lt.s32.totalorder %s14, 1
      %s177 = scalar_select %p176, %s14, 1
      %s178 = smul.addr %s177, 9
      %s179 = smul.addr %s178, 2
      %s180 = scalar_lea.vmem %s0, %s179
      %p181 = scmp.lt.s32.totalorder %s14, 1
      %s182 = scalar_select %p181, %s14, 1
      %s183 = smul.addr %s182, 3
      %s184 = smul.addr %s183, 2
      %s185 = scalar_lea.vmem %s1, %s184
      %p186 = scmp.lt.s32.totalorder %s14, 1
      %s187 = scalar_select %p186, %s14, 1
      %s188 = smul.addr %s187, 3
      %s189 = smul.addr %s188, 4
      %s190 = scalar_lea.vmem %s3, %s189
      %v192 = vld [vmem:[%s180] sm:$0x3]
      %v193 = vld [vmem:[%s185] sm:$0x3f]
      %s194 = scalar_lea.vmem %s180, 2
      %v195 = vld [vmem:[%s194] sm:$0x3]
      %v197 = vcombine.high %v193, %v193
      %v199 = vunpack.c.l.s4 1983009808
      %v200 = vunpack.c.0.s8 %v199
      %v201 = vlaneseq
      %v202 = vshrl.u32 %v201, 7
      %v203 = vsub.s32 %v200, %v202
      %v204 = vrot.slane %v193, %v203
      %v206 = vunpack.c.l.s4 1983009808
      %v207 = vunpack.c.0.s8 %v206
      %v208 = vlaneseq
      %v209 = vshrl.u32 %v208, 7
      %v210 = vsub.s32 %v207, %v209
      %v211 = vrot.slane %v197, %v210
      %v212 = vcombine.high %v204, %v204
      %213 = vrot.lane.b32.xlu0 %v204, 127
      %v214 = vpop.permute.xlu0 %213
      %215 = vrot.lane.b32.xlu0 %v212, 127
      %v216 = vpop.permute.xlu0 %215
      %217 = vrot.lane.b32.xlu0 %v211, 127
      %v218 = vpop.permute.xlu0 %217
      %vm219 = vcmask 1039360
      %v220 = vsel %vm219, %v214, %v216
      %v221 = vsel %vm219, %v216, %v218
      %vm222 = vcmask 31744
      %v224 = vsel %vm222, %v195, 0
      %vm226 = vcmask 1041408
      %v228 = vsel %vm226, %v220, 0
      %v231 = vsel %vm226, %v221, 0
      %v234 = vsel %vm226, %v218, 0
      %236 = vmatprep.subr.bf16.mxu0 0
      %237 = vmatpush1.bf16.msra.mxu0 0
      %238 = vmatprep.subr.bf16.mxu0 0
      %239 = vmatpush1.bf16.msra.mxu0 0
      %240 = vmatprep.subr.bf16.mxu0 0
      %241 = vmatpush1.bf16.msra.mxu0 0
      %242 = vmatprep.subr.bf16.mxu0 0
      %243 = vmatpush1.bf16.msra.mxu0 0
      %244 = vmatprep.subr.bf16.mxu0 0
      %245 = vmatpush1.bf16.msra.mxu0 0
      %246 = vmatprep.subr.bf16.mxu0 0
      %247 = vmatpush1.bf16.msra.mxu0 0
      %248 = vmatprep.subr.bf16.mxu0 0
      %249 = vmatpush1.bf16.msra.mxu0 0
      %250 = vmatprep.subr.bf16.mxu0 %v231
      %251 = vmatpush1.bf16.msra.mxu0 %v228
      %252 = vmatprep.subr.bf16.mxu0 0
      %253 = vmatpush2.bf16.msra.mxu0 0
      %254 = vmatprep.subr.bf16.mxu0 0
      %255 = vmatpush2.bf16.msra.mxu0 0
      %256 = vmatprep.subr.bf16.mxu0 0
      %257 = vmatpush2.bf16.msra.mxu0 0
      %258 = vmatprep.subr.bf16.mxu0 0
      %259 = vmatpush2.bf16.msra.mxu0 0
      %260 = vmatprep.subr.bf16.mxu0 0
      %261 = vmatpush2.bf16.msra.mxu0 0
      %262 = vmatprep.subr.bf16.mxu0 0
      %263 = vmatpush2.bf16.msra.mxu0 0
      %264 = vmatprep.subr.bf16.mxu0 0
      %265 = vmatpush2.bf16.msra.mxu0 0
      %266 = vmatprep.subr.bf16.mxu0 0
      %267 = vmatpush2.bf16.msra.mxu0 0
      %268 = vmatprep.mubr.bf16.mxu0 0
      %269 = vmatmul.mubr.bf16.gmra.mxu0 %v224
      %v270 = vpop.f32.mrf.mxu0
      %v271 = vadd.f32 0.0, %v270
      %v272 = vpop.f32.mrf.mxu0
      %v273 = vadd.f32 0.0, %v272
      %v274 = vpop.f32.mrf.mxu0
      %v275 = vpop.f32.mrf.mxu0
      %276 = vdwg.mxu0
      %277 = vmatprep.subr.bf16.mxu0 0
      %278 = vmatpush1.bf16.msra.mxu0 0
      %279 = vmatprep.subr.bf16.mxu0 0
      %280 = vmatpush1.bf16.msra.mxu0 0
      %281 = vmatprep.subr.bf16.mxu0 0
      %282 = vmatpush1.bf16.msra.mxu0 0
      %283 = vmatprep.subr.bf16.mxu0 0
      %284 = vmatpush1.bf16.msra.mxu0 0
      %285 = vmatprep.subr.bf16.mxu0 0
      %286 = vmatpush1.bf16.msra.mxu0 0
      %287 = vmatprep.subr.bf16.mxu0 0
      %288 = vmatpush1.bf16.msra.mxu0 0
      %289 = vmatprep.subr.bf16.mxu0 0
      %290 = vmatpush1.bf16.msra.mxu0 0
      %291 = vmatprep.subr.bf16.mxu0 0
      %292 = vmatpush1.bf16.msra.mxu0 %v234
      %293 = vmatprep.subr.bf16.mxu0 0
      %294 = vmatpush2.bf16.msra.mxu0 0
      %295 = vmatprep.subr.bf16.mxu0 0
      %296 = vmatpush2.bf16.msra.mxu0 0
      %297 = vmatprep.subr.bf16.mxu0 0
      %298 = vmatpush2.bf16.msra.mxu0 0
      %299 = vmatprep.subr.bf16.mxu0 0
      %300 = vmatpush2.bf16.msra.mxu0 0
      %301 = vmatprep.subr.bf16.mxu0 0
      %302 = vmatpush2.bf16.msra.mxu0 0
      %303 = vmatprep.subr.bf16.mxu0 0
      %304 = vmatpush2.bf16.msra.mxu0 0
      %305 = vmatprep.subr.bf16.mxu0 0
      %306 = vmatpush2.bf16.msra.mxu0 0
      %307 = vmatprep.subr.bf16.mxu0 0
      %308 = vmatpush2.bf16.msra.mxu0 0
      %309 = vmatprep.mubr.bf16.mxu0 0
      %310 = vmatmul.mubr.bf16.gmra.mxu0 %v224
      %v311 = vpop.f32.mrf.mxu0
      %v312 = vadd.f32 0.0, %v311
      %v313 = vpop.f32.mrf.mxu0
      %v314 = vpop.f32.mrf.mxu0
      %v315 = vpop.f32.mrf.mxu0
      %316 = vdwg.mxu0
      %v318 = vsel %vm222, %v192, 0
      %v321 = vsel %vm226, %v204, 0
      %v324 = vsel %vm226, %v212, 0
      %v327 = vsel %vm226, %v211, 0
      %329 = vmatprep.subr.bf16.mxu0 0
      %330 = vmatpush1.bf16.msra.mxu0 0
      %331 = vmatprep.subr.bf16.mxu0 0
      %332 = vmatpush1.bf16.msra.mxu0 0
      %333 = vmatprep.subr.bf16.mxu0 0
      %334 = vmatpush1.bf16.msra.mxu0 0
      %335 = vmatprep.subr.bf16.mxu0 0
      %336 = vmatpush1.bf16.msra.mxu0 0
      %337 = vmatprep.subr.bf16.mxu0 0
      %338 = vmatpush1.bf16.msra.mxu0 0
      %339 = vmatprep.subr.bf16.mxu0 0
      %340 = vmatpush1.bf16.msra.mxu0 0
      %341 = vmatprep.subr.bf16.mxu0 0
      %342 = vmatpush1.bf16.msra.mxu0 0
      %343 = vmatprep.subr.bf16.mxu0 %v324
      %344 = vmatpush1.bf16.msra.mxu0 %v321
      %345 = vmatprep.subr.bf16.mxu0 0
      %346 = vmatpush2.bf16.msra.mxu0 0
      %347 = vmatprep.subr.bf16.mxu0 0
      %348 = vmatpush2.bf16.msra.mxu0 0
      %349 = vmatprep.subr.bf16.mxu0 0
      %350 = vmatpush2.bf16.msra.mxu0 0
      %351 = vmatprep.subr.bf16.mxu0 0
      %352 = vmatpush2.bf16.msra.mxu0 0
      %353 = vmatprep.subr.bf16.mxu0 0
      %354 = vmatpush2.bf16.msra.mxu0 0
      %355 = vmatprep.subr.bf16.mxu0 0
      %356 = vmatpush2.bf16.msra.mxu0 0
      %357 = vmatprep.subr.bf16.mxu0 0
      %358 = vmatpush2.bf16.msra.mxu0 0
      %359 = vmatprep.subr.bf16.mxu0 0
      %360 = vmatpush2.bf16.msra.mxu0 0
      %361 = vmatprep.mubr.bf16.mxu0 0
      %362 = vmatmul.mubr.bf16.gmra.mxu0 %v318
      %v363 = vpop.f32.mrf.mxu0
      %v364 = vadd.f32 %v271, %v363
      %v365 = vpop.f32.mrf.mxu0
      %v366 = vadd.f32 %v273, %v365
      %v367 = vpop.f32.mrf.mxu0
      %v368 = vpop.f32.mrf.mxu0
      %369 = vdwg.mxu0
      %370 = vmatprep.subr.bf16.mxu0 0
      %371 = vmatpush1.bf16.msra.mxu0 0
      %372 = vmatprep.subr.bf16.mxu0 0
      %373 = vmatpush1.bf16.msra.mxu0 0
      %374 = vmatprep.subr.bf16.mxu0 0
      %375 = vmatpush1.bf16.msra.mxu0 0
      %376 = vmatprep.subr.bf16.mxu0 0
      %377 = vmatpush1.bf16.msra.mxu0 0
      %378 = vmatprep.subr.bf16.mxu0 0
      %379 = vmatpush1.bf16.msra.mxu0 0
      %380 = vmatprep.subr.bf16.mxu0 0
      %381 = vmatpush1.bf16.msra.mxu0 0
      %382 = vmatprep.subr.bf16.mxu0 0
      %383 = vmatpush1.bf16.msra.mxu0 0
      %384 = vmatprep.subr.bf16.mxu0 0
      %385 = vmatpush1.bf16.msra.mxu0 %v327
      %386 = vmatprep.subr.bf16.mxu0 0
      %387 = vmatpush2.bf16.msra.mxu0 0
      %388 = vmatprep.subr.bf16.mxu0 0
      %389 = vmatpush2.bf16.msra.mxu0 0
      %390 = vmatprep.subr.bf16.mxu0 0
      %391 = vmatpush2.bf16.msra.mxu0 0
      %392 = vmatprep.subr.bf16.mxu0 0
      %393 = vmatpush2.bf16.msra.mxu0 0
      %394 = vmatprep.subr.bf16.mxu0 0
      %395 = vmatpush2.bf16.msra.mxu0 0
      %396 = vmatprep.subr.bf16.mxu0 0
      %397 = vmatpush2.bf16.msra.mxu0 0
      %398 = vmatprep.subr.bf16.mxu0 0
      %399 = vmatpush2.bf16.msra.mxu0 0
      %400 = vmatprep.subr.bf16.mxu0 0
      %401 = vmatpush2.bf16.msra.mxu0 0
      %402 = vmatprep.mubr.bf16.mxu0 0
      %403 = vmatmul.mubr.bf16.gmra.mxu0 %v318
      %v404 = vpop.f32.mrf.mxu0
      %v405 = vadd.f32 %v312, %v404
      %v406 = vpop.f32.mrf.mxu0
      %v407 = vpop.f32.mrf.mxu0
      %v408 = vpop.f32.mrf.mxu0
      %409 = vdwg.mxu0
      %s410 = scalar_lea.vmem %s180, 4
      %v411 = vld [vmem:[%s410] sm:$0x3]
      %v412 = vld [vmem:[%s185] sm:$0x3f]
      %v414 = vcombine.high %v412, %v412
      %v416 = vunpack.c.l.s4 1983009808
      %v417 = vunpack.c.0.s8 %v416
      %v418 = vlaneseq
      %v419 = vshrl.u32 %v418, 7
      %v420 = vsub.s32 %v417, %v419
      %v421 = vrot.slane %v412, %v420
      %v423 = vunpack.c.l.s4 1983009808
      %v424 = vunpack.c.0.s8 %v423
      %v425 = vlaneseq
      %v426 = vshrl.u32 %v425, 7
      %v427 = vsub.s32 %v424, %v426
      %v428 = vrot.slane %v414, %v427
      %v429 = vcombine.high %v421, %v421
      %430 = vrot.lane.b32.xlu0 %v421, 126
      %v431 = vpop.permute.xlu0 %430
      %432 = vrot.lane.b32.xlu0 %v429, 126
      %v433 = vpop.permute.xlu0 %432
      %434 = vrot.lane.b32.xlu0 %v428, 126
      %v435 = vpop.permute.xlu0 %434
      %vm436 = vcmask 1031168
      %v437 = vsel %vm436, %v431, %v433
      %v438 = vsel %vm436, %v433, %v435
      %v440 = vsel %vm222, %v411, 0
      %v443 = vsel %vm226, %v437, 0
      %v446 = vsel %vm226, %v438, 0
      %v449 = vsel %vm226, %v435, 0
      %451 = vmatprep.subr.bf16.mxu0 0
      %452 = vmatpush1.bf16.msra.mxu0 0
      %453 = vmatprep.subr.bf16.mxu0 0
      %454 = vmatpush1.bf16.msra.mxu0 0
      %455 = vmatprep.subr.bf16.mxu0 0
      %456 = vmatpush1.bf16.msra.mxu0 0
      %457 = vmatprep.subr.bf16.mxu0 0
      %458 = vmatpush1.bf16.msra.mxu0 0
      %459 = vmatprep.subr.bf16.mxu0 0
      %460 = vmatpush1.bf16.msra.mxu0 0
      %461 = vmatprep.subr.bf16.mxu0 0
      %462 = vmatpush1.bf16.msra.mxu0 0
      %463 = vmatprep.subr.bf16.mxu0 0
      %464 = vmatpush1.bf16.msra.mxu0 0
      %465 = vmatprep.subr.bf16.mxu0 %v446
      %466 = vmatpush1.bf16.msra.mxu0 %v443
      %467 = vmatprep.subr.bf16.mxu0 0
      %468 = vmatpush2.bf16.msra.mxu0 0
      %469 = vmatprep.subr.bf16.mxu0 0
      %470 = vmatpush2.bf16.msra.mxu0 0
      %471 = vmatprep.subr.bf16.mxu0 0
      %472 = vmatpush2.bf16.msra.mxu0 0
      %473 = vmatprep.subr.bf16.mxu0 0
      %474 = vmatpush2.bf16.msra.mxu0 0
      %475 = vmatprep.subr.bf16.mxu0 0
      %476 = vmatpush2.bf16.msra.mxu0 0
      %477 = vmatprep.subr.bf16.mxu0 0
      %478 = vmatpush2.bf16.msra.mxu0 0
      %479 = vmatprep.subr.bf16.mxu0 0
      %480 = vmatpush2.bf16.msra.mxu0 0
      %481 = vmatprep.subr.bf16.mxu0 0
      %482 = vmatpush2.bf16.msra.mxu0 0
      %483 = vmatprep.mubr.bf16.mxu0 0
      %484 = vmatmul.mubr.bf16.gmra.mxu0 %v440
      %v485 = vpop.f32.mrf.mxu0
      %v486 = vadd.f32 0.0, %v485
      %v487 = vpop.f32.mrf.mxu0
      %v488 = vadd.f32 0.0, %v487
      %v489 = vpop.f32.mrf.mxu0
      %v490 = vpop.f32.mrf.mxu0
      %491 = vdwg.mxu0
      %492 = vmatprep.subr.bf16.mxu0 0
      %493 = vmatpush1.bf16.msra.mxu0 0
      %494 = vmatprep.subr.bf16.mxu0 0
      %495 = vmatpush1.bf16.msra.mxu0 0
      %496 = vmatprep.subr.bf16.mxu0 0
      %497 = vmatpush1.bf16.msra.mxu0 0
      %498 = vmatprep.subr.bf16.mxu0 0
      %499 = vmatpush1.bf16.msra.mxu0 0
      %500 = vmatprep.subr.bf16.mxu0 0
      %501 = vmatpush1.bf16.msra.mxu0 0
      %502 = vmatprep.subr.bf16.mxu0 0
      %503 = vmatpush1.bf16.msra.mxu0 0
      %504 = vmatprep.subr.bf16.mxu0 0
      %505 = vmatpush1.bf16.msra.mxu0 0
      %506 = vmatprep.subr.bf16.mxu0 0
      %507 = vmatpush1.bf16.msra.mxu0 %v449
      %508 = vmatprep.subr.bf16.mxu0 0
      %509 = vmatpush2.bf16.msra.mxu0 0
      %510 = vmatprep.subr.bf16.mxu0 0
      %511 = vmatpush2.bf16.msra.mxu0 0
      %512 = vmatprep.subr.bf16.mxu0 0
      %513 = vmatpush2.bf16.msra.mxu0 0
      %514 = vmatprep.subr.bf16.mxu0 0
      %515 = vmatpush2.bf16.msra.mxu0 0
      %516 = vmatprep.subr.bf16.mxu0 0
      %517 = vmatpush2.bf16.msra.mxu0 0
      %518 = vmatprep.subr.bf16.mxu0 0
      %519 = vmatpush2.bf16.msra.mxu0 0
      %520 = vmatprep.subr.bf16.mxu0 0
      %521 = vmatpush2.bf16.msra.mxu0 0
      %522 = vmatprep.subr.bf16.mxu0 0
      %523 = vmatpush2.bf16.msra.mxu0 0
      %524 = vmatprep.mubr.bf16.mxu0 0
      %525 = vmatmul.mubr.bf16.gmra.mxu0 %v440
      %v526 = vpop.f32.mrf.mxu0
      %v527 = vadd.f32 0.0, %v526
      %v528 = vpop.f32.mrf.mxu0
      %v529 = vpop.f32.mrf.mxu0
      %v530 = vpop.f32.mrf.mxu0
      %531 = vdwg.mxu0
      %v532 = vadd.f32 %v364, %v486
      %v533 = vadd.f32 %v366, %v488
      %v534 = vadd.f32 %v405, %v527
      %s535 = scalar_lea.vmem %s180, 6
      %v536 = vld [vmem:[%s535] sm:$0x3]
      %v537 = vld [vmem:[%s185] sm:$0x3f]
      %v539 = vcombine.high %v537, %v537
      %v541 = vunpack.c.l.s4 1983009808
      %v542 = vunpack.c.0.s8 %v541
      %v543 = vlaneseq
      %v544 = vshrl.u32 %v543, 7
      %v545 = vsub.s32 %v542, %v544
      %v546 = vrot.slane %v537, %v545
      %v548 = vunpack.c.l.s4 1983009808
      %v549 = vunpack.c.0.s8 %v548
      %v550 = vlaneseq
      %v551 = vshrl.u32 %v550, 7
      %v552 = vsub.s32 %v549, %v551
      %v553 = vrot.slane %v539, %v552
      %v554 = vcombine.high %v546, %v546
      %555 = vrot.lane.b32.xlu0 %v546, 110
      %v556 = vpop.permute.xlu0 %555
      %557 = vrot.lane.b32.xlu0 %v554, 110
      %v558 = vpop.permute.xlu0 %557
      %559 = vrot.lane.b32.xlu0 %v553, 110
      %v560 = vpop.permute.xlu0 %559
      %vm561 = vcmask 900096
      %v562 = vsel %vm561, %v556, %v558
      %v563 = vsel %vm561, %v558, %v560
      %v565 = vsel %vm222, %v536, 0
      %v568 = vsel %vm226, %v562, 0
      %v571 = vsel %vm226, %v563, 0
      %v574 = vsel %vm226, %v560, 0
      %576 = vmatprep.subr.bf16.mxu0 0
      %577 = vmatpush1.bf16.msra.mxu0 0
      %578 = vmatprep.subr.bf16.mxu0 0
      %579 = vmatpush1.bf16.msra.mxu0 0
      %580 = vmatprep.subr.bf16.mxu0 0
      %581 = vmatpush1.bf16.msra.mxu0 0
      %582 = vmatprep.subr.bf16.mxu0 0
      %583 = vmatpush1.bf16.msra.mxu0 0
      %584 = vmatprep.subr.bf16.mxu0 0
      %585 = vmatpush1.bf16.msra.mxu0 0
      %586 = vmatprep.subr.bf16.mxu0 0
      %587 = vmatpush1.bf16.msra.mxu0 0
      %588 = vmatprep.subr.bf16.mxu0 0
      %589 = vmatpush1.bf16.msra.mxu0 0
      %590 = vmatprep.subr.bf16.mxu0 %v571
      %591 = vmatpush1.bf16.msra.mxu0 %v568
      %592 = vmatprep.subr.bf16.mxu0 0
      %593 = vmatpush2.bf16.msra.mxu0 0
      %594 = vmatprep.subr.bf16.mxu0 0
      %595 = vmatpush2.bf16.msra.mxu0 0
      %596 = vmatprep.subr.bf16.mxu0 0
      %597 = vmatpush2.bf16.msra.mxu0 0
      %598 = vmatprep.subr.bf16.mxu0 0
      %599 = vmatpush2.bf16.msra.mxu0 0
      %600 = vmatprep.subr.bf16.mxu0 0
      %601 = vmatpush2.bf16.msra.mxu0 0
      %602 = vmatprep.subr.bf16.mxu0 0
      %603 = vmatpush2.bf16.msra.mxu0 0
      %604 = vmatprep.subr.bf16.mxu0 0
      %605 = vmatpush2.bf16.msra.mxu0 0
      %606 = vmatprep.subr.bf16.mxu0 0
      %607 = vmatpush2.bf16.msra.mxu0 0
      %608 = vmatprep.mubr.bf16.mxu0 0
      %609 = vmatmul.mubr.bf16.gmra.mxu0 %v565
      %v610 = vpop.f32.mrf.mxu0
      %v611 = vadd.f32 0.0, %v610
      %v612 = vpop.f32.mrf.mxu0
      %v613 = vadd.f32 0.0, %v612
      %v614 = vpop.f32.mrf.mxu0
      %v615 = vpop.f32.mrf.mxu0
      %616 = vdwg.mxu0
      %617 = vmatprep.subr.bf16.mxu0 0
      %618 = vmatpush1.bf16.msra.mxu0 0
      %619 = vmatprep.subr.bf16.mxu0 0
      %620 = vmatpush1.bf16.msra.mxu0 0
      %621 = vmatprep.subr.bf16.mxu0 0
      %622 = vmatpush1.bf16.msra.mxu0 0
      %623 = vmatprep.subr.bf16.mxu0 0
      %624 = vmatpush1.bf16.msra.mxu0 0
      %625 = vmatprep.subr.bf16.mxu0 0
      %626 = vmatpush1.bf16.msra.mxu0 0
      %627 = vmatprep.subr.bf16.mxu0 0
      %628 = vmatpush1.bf16.msra.mxu0 0
      %629 = vmatprep.subr.bf16.mxu0 0
      %630 = vmatpush1.bf16.msra.mxu0 0
      %631 = vmatprep.subr.bf16.mxu0 0
      %632 = vmatpush1.bf16.msra.mxu0 %v574
      %633 = vmatprep.subr.bf16.mxu0 0
      %634 = vmatpush2.bf16.msra.mxu0 0
      %635 = vmatprep.subr.bf16.mxu0 0
      %636 = vmatpush2.bf16.msra.mxu0 0
      %637 = vmatprep.subr.bf16.mxu0 0
      %638 = vmatpush2.bf16.msra.mxu0 0
      %639 = vmatprep.subr.bf16.mxu0 0
      %640 = vmatpush2.bf16.msra.mxu0 0
      %641 = vmatprep.subr.bf16.mxu0 0
      %642 = vmatpush2.bf16.msra.mxu0 0
      %643 = vmatprep.subr.bf16.mxu0 0
      %644 = vmatpush2.bf16.msra.mxu0 0
      %645 = vmatprep.subr.bf16.mxu0 0
      %646 = vmatpush2.bf16.msra.mxu0 0
      %647 = vmatprep.subr.bf16.mxu0 0
      %648 = vmatpush2.bf16.msra.mxu0 0
      %649 = vmatprep.mubr.bf16.mxu0 0
      %650 = vmatmul.mubr.bf16.gmra.mxu0 %v565
      %v651 = vpop.f32.mrf.mxu0
      %v652 = vadd.f32 0.0, %v651
      %v653 = vpop.f32.mrf.mxu0
      %v654 = vpop.f32.mrf.mxu0
      %v655 = vpop.f32.mrf.mxu0
      %656 = vdwg.mxu0
      %v657 = vadd.f32 %v532, %v611
      %v658 = vadd.f32 %v533, %v613
      %v659 = vadd.f32 %v534, %v652
      %s660 = scalar_lea.vmem %s180, 8
      %v661 = vld [vmem:[%s660] sm:$0x3]
      %v662 = vld [vmem:[%s185] sm:$0x3f]
      %v664 = vcombine.high %v662, %v662
      %v666 = vunpack.c.l.s4 1983009808
      %v667 = vunpack.c.0.s8 %v666
      %v668 = vlaneseq
      %v669 = vshrl.u32 %v668, 7
      %v670 = vsub.s32 %v667, %v669
      %v671 = vrot.slane %v662, %v670
      %v673 = vunpack.c.l.s4 1983009808
      %v674 = vunpack.c.0.s8 %v673
      %v675 = vlaneseq
      %v676 = vshrl.u32 %v675, 7
      %v677 = vsub.s32 %v674, %v676
      %v678 = vrot.slane %v664, %v677
      %v679 = vcombine.high %v671, %v671
      %680 = vrot.lane.b32.xlu0 %v671, 109
      %v681 = vpop.permute.xlu0 %680
      %682 = vrot.lane.b32.xlu0 %v679, 109
      %v683 = vpop.permute.xlu0 %682
      %684 = vrot.lane.b32.xlu0 %v678, 109
      %v685 = vpop.permute.xlu0 %684
      %vm686 = vcmask 891904
      %v687 = vsel %vm686, %v681, %v683
      %v688 = vsel %vm686, %v683, %v685
      %v690 = vsel %vm222, %v661, 0
      %v693 = vsel %vm226, %v687, 0
      %v696 = vsel %vm226, %v688, 0
      %v699 = vsel %vm226, %v685, 0
      %701 = vmatprep.subr.bf16.mxu0 0
      %702 = vmatpush1.bf16.msra.mxu0 0
      %703 = vmatprep.subr.bf16.mxu0 0
      %704 = vmatpush1.bf16.msra.mxu0 0
      %705 = vmatprep.subr.bf16.mxu0 0
      %706 = vmatpush1.bf16.msra.mxu0 0
      %707 = vmatprep.subr.bf16.mxu0 0
      %708 = vmatpush1.bf16.msra.mxu0 0
      %709 = vmatprep.subr.bf16.mxu0 0
      %710 = vmatpush1.bf16.msra.mxu0 0
      %711 = vmatprep.subr.bf16.mxu0 0
      %712 = vmatpush1.bf16.msra.mxu0 0
      %713 = vmatprep.subr.bf16.mxu0 0
      %714 = vmatpush1.bf16.msra.mxu0 0
      %715 = vmatprep.subr.bf16.mxu0 %v696
      %716 = vmatpush1.bf16.msra.mxu0 %v693
      %717 = vmatprep.subr.bf16.mxu0 0
      %718 = vmatpush2.bf16.msra.mxu0 0
      %719 = vmatprep.subr.bf16.mxu0 0
      %720 = vmatpush2.bf16.msra.mxu0 0
      %721 = vmatprep.subr.bf16.mxu0 0
      %722 = vmatpush2.bf16.msra.mxu0 0
      %723 = vmatprep.subr.bf16.mxu0 0
      %724 = vmatpush2.bf16.msra.mxu0 0
      %725 = vmatprep.subr.bf16.mxu0 0
      %726 = vmatpush2.bf16.msra.mxu0 0
      %727 = vmatprep.subr.bf16.mxu0 0
      %728 = vmatpush2.bf16.msra.mxu0 0
      %729 = vmatprep.subr.bf16.mxu0 0
      %730 = vmatpush2.bf16.msra.mxu0 0
      %731 = vmatprep.subr.bf16.mxu0 0
      %732 = vmatpush2.bf16.msra.mxu0 0
      %733 = vmatprep.mubr.bf16.mxu0 0
      %734 = vmatmul.mubr.bf16.gmra.mxu0 %v690
      %v735 = vpop.f32.mrf.mxu0
      %v736 = vadd.f32 0.0, %v735
      %v737 = vpop.f32.mrf.mxu0
      %v738 = vadd.f32 0.0, %v737
      %v739 = vpop.f32.mrf.mxu0
      %v740 = vpop.f32.mrf.mxu0
      %741 = vdwg.mxu0
      %742 = vmatprep.subr.bf16.mxu0 0
      %743 = vmatpush1.bf16.msra.mxu0 0
      %744 = vmatprep.subr.bf16.mxu0 0
      %745 = vmatpush1.bf16.msra.mxu0 0
      %746 = vmatprep.subr.bf16.mxu0 0
      %747 = vmatpush1.bf16.msra.mxu0 0
      %748 = vmatprep.subr.bf16.mxu0 0
      %749 = vmatpush1.bf16.msra.mxu0 0
      %750 = vmatprep.subr.bf16.mxu0 0
      %751 = vmatpush1.bf16.msra.mxu0 0
      %752 = vmatprep.subr.bf16.mxu0 0
      %753 = vmatpush1.bf16.msra.mxu0 0
      %754 = vmatprep.subr.bf16.mxu0 0
      %755 = vmatpush1.bf16.msra.mxu0 0
      %756 = vmatprep.subr.bf16.mxu0 0
      %757 = vmatpush1.bf16.msra.mxu0 %v699
      %758 = vmatprep.subr.bf16.mxu0 0
      %759 = vmatpush2.bf16.msra.mxu0 0
      %760 = vmatprep.subr.bf16.mxu0 0
      %761 = vmatpush2.bf16.msra.mxu0 0
      %762 = vmatprep.subr.bf16.mxu0 0
      %763 = vmatpush2.bf16.msra.mxu0 0
      %764 = vmatprep.subr.bf16.mxu0 0
      %765 = vmatpush2.bf16.msra.mxu0 0
      %766 = vmatprep.subr.bf16.mxu0 0
      %767 = vmatpush2.bf16.msra.mxu0 0
      %768 = vmatprep.subr.bf16.mxu0 0
      %769 = vmatpush2.bf16.msra.mxu0 0
      %770 = vmatprep.subr.bf16.mxu0 0
      %771 = vmatpush2.bf16.msra.mxu0 0
      %772 = vmatprep.subr.bf16.mxu0 0
      %773 = vmatpush2.bf16.msra.mxu0 0
      %774 = vmatprep.mubr.bf16.mxu0 0
      %775 = vmatmul.mubr.bf16.gmra.mxu0 %v690
      %v776 = vpop.f32.mrf.mxu0
      %v777 = vadd.f32 0.0, %v776
      %v778 = vpop.f32.mrf.mxu0
      %v779 = vpop.f32.mrf.mxu0
      %v780 = vpop.f32.mrf.mxu0
      %781 = vdwg.mxu0
      %v782 = vadd.f32 %v657, %v736
      %v783 = vadd.f32 %v658, %v738
      %v784 = vadd.f32 %v659, %v777
      %s785 = scalar_lea.vmem %s180, 10
      %v786 = vld [vmem:[%s785] sm:$0x3]
      %v787 = vld [vmem:[%s185] sm:$0x3f]
      %v789 = vcombine.high %v787, %v787
      %v791 = vunpack.c.l.s4 1983009808
      %v792 = vunpack.c.0.s8 %v791
      %v793 = vlaneseq
      %v794 = vshrl.u32 %v793, 7
      %v795 = vsub.s32 %v792, %v794
      %v796 = vrot.slane %v787, %v795
      %v798 = vunpack.c.l.s4 1983009808
      %v799 = vunpack.c.0.s8 %v798
      %v800 = vlaneseq
      %v801 = vshrl.u32 %v800, 7
      %v802 = vsub.s32 %v799, %v801
      %v803 = vrot.slane %v789, %v802
      %v804 = vcombine.high %v796, %v796
      %805 = vrot.lane.b32.xlu0 %v796, 108
      %v806 = vpop.permute.xlu0 %805
      %807 = vrot.lane.b32.xlu0 %v804, 108
      %v808 = vpop.permute.xlu0 %807
      %809 = vrot.lane.b32.xlu0 %v803, 108
      %v810 = vpop.permute.xlu0 %809
      %vm811 = vcmask 883712
      %v812 = vsel %vm811, %v806, %v808
      %v813 = vsel %vm811, %v808, %v810
      %v815 = vsel %vm222, %v786, 0
      %v818 = vsel %vm226, %v812, 0
      %v821 = vsel %vm226, %v813, 0
      %v824 = vsel %vm226, %v810, 0
      %826 = vmatprep.subr.bf16.mxu0 0
      %827 = vmatpush1.bf16.msra.mxu0 0
      %828 = vmatprep.subr.bf16.mxu0 0
      %829 = vmatpush1.bf16.msra.mxu0 0
      %830 = vmatprep.subr.bf16.mxu0 0
      %831 = vmatpush1.bf16.msra.mxu0 0
      %832 = vmatprep.subr.bf16.mxu0 0
      %833 = vmatpush1.bf16.msra.mxu0 0
      %834 = vmatprep.subr.bf16.mxu0 0
      %835 = vmatpush1.bf16.msra.mxu0 0
      %836 = vmatprep.subr.bf16.mxu0 0
      %837 = vmatpush1.bf16.msra.mxu0 0
      %838 = vmatprep.subr.bf16.mxu0 0
      %839 = vmatpush1.bf16.msra.mxu0 0
      %840 = vmatprep.subr.bf16.mxu0 %v821
      %841 = vmatpush1.bf16.msra.mxu0 %v818
      %842 = vmatprep.subr.bf16.mxu0 0
      %843 = vmatpush2.bf16.msra.mxu0 0
      %844 = vmatprep.subr.bf16.mxu0 0
      %845 = vmatpush2.bf16.msra.mxu0 0
      %846 = vmatprep.subr.bf16.mxu0 0
      %847 = vmatpush2.bf16.msra.mxu0 0
      %848 = vmatprep.subr.bf16.mxu0 0
      %849 = vmatpush2.bf16.msra.mxu0 0
      %850 = vmatprep.subr.bf16.mxu0 0
      %851 = vmatpush2.bf16.msra.mxu0 0
      %852 = vmatprep.subr.bf16.mxu0 0
      %853 = vmatpush2.bf16.msra.mxu0 0
      %854 = vmatprep.subr.bf16.mxu0 0
      %855 = vmatpush2.bf16.msra.mxu0 0
      %856 = vmatprep.subr.bf16.mxu0 0
      %857 = vmatpush2.bf16.msra.mxu0 0
      %858 = vmatprep.mubr.bf16.mxu0 0
      %859 = vmatmul.mubr.bf16.gmra.mxu0 %v815
      %v860 = vpop.f32.mrf.mxu0
      %v861 = vadd.f32 0.0, %v860
      %v862 = vpop.f32.mrf.mxu0
      %v863 = vadd.f32 0.0, %v862
      %v864 = vpop.f32.mrf.mxu0
      %v865 = vpop.f32.mrf.mxu0
      %866 = vdwg.mxu0
      %867 = vmatprep.subr.bf16.mxu0 0
      %868 = vmatpush1.bf16.msra.mxu0 0
      %869 = vmatprep.subr.bf16.mxu0 0
      %870 = vmatpush1.bf16.msra.mxu0 0
      %871 = vmatprep.subr.bf16.mxu0 0
      %872 = vmatpush1.bf16.msra.mxu0 0
      %873 = vmatprep.subr.bf16.mxu0 0
      %874 = vmatpush1.bf16.msra.mxu0 0
      %875 = vmatprep.subr.bf16.mxu0 0
      %876 = vmatpush1.bf16.msra.mxu0 0
      %877 = vmatprep.subr.bf16.mxu0 0
      %878 = vmatpush1.bf16.msra.mxu0 0
      %879 = vmatprep.subr.bf16.mxu0 0
      %880 = vmatpush1.bf16.msra.mxu0 0
      %881 = vmatprep.subr.bf16.mxu0 0
      %882 = vmatpush1.bf16.msra.mxu0 %v824
      %883 = vmatprep.subr.bf16.mxu0 0
      %884 = vmatpush2.bf16.msra.mxu0 0
      %885 = vmatprep.subr.bf16.mxu0 0
      %886 = vmatpush2.bf16.msra.mxu0 0
      %887 = vmatprep.subr.bf16.mxu0 0
      %888 = vmatpush2.bf16.msra.mxu0 0
      %889 = vmatprep.subr.bf16.mxu0 0
      %890 = vmatpush2.bf16.msra.mxu0 0
      %891 = vmatprep.subr.bf16.mxu0 0
      %892 = vmatpush2.bf16.msra.mxu0 0
      %893 = vmatprep.subr.bf16.mxu0 0
      %894 = vmatpush2.bf16.msra.mxu0 0
      %895 = vmatprep.subr.bf16.mxu0 0
      %896 = vmatpush2.bf16.msra.mxu0 0
      %897 = vmatprep.subr.bf16.mxu0 0
      %898 = vmatpush2.bf16.msra.mxu0 0
      %899 = vmatprep.mubr.bf16.mxu0 0
      %900 = vmatmul.mubr.bf16.gmra.mxu0 %v815
      %v901 = vpop.f32.mrf.mxu0
      %v902 = vadd.f32 0.0, %v901
      %v903 = vpop.f32.mrf.mxu0
      %v904 = vpop.f32.mrf.mxu0
      %v905 = vpop.f32.mrf.mxu0
      %906 = vdwg.mxu0
      %v907 = vadd.f32 %v782, %v861
      %v908 = vadd.f32 %v783, %v863
      %v909 = vadd.f32 %v784, %v902
      %s910 = scalar_lea.vmem %s180, 12
      %v911 = vld [vmem:[%s910] sm:$0x3]
      %v912 = vld [vmem:[%s185] sm:$0x3f]
      %v914 = vcombine.high %v912, %v912
      %v916 = vunpack.c.l.s4 1983009808
      %v917 = vunpack.c.0.s8 %v916
      %v918 = vlaneseq
      %v919 = vshrl.u32 %v918, 7
      %v920 = vsub.s32 %v917, %v919
      %v921 = vrot.slane %v912, %v920
      %v923 = vunpack.c.l.s4 1983009808
      %v924 = vunpack.c.0.s8 %v923
      %v925 = vlaneseq
      %v926 = vshrl.u32 %v925, 7
      %v927 = vsub.s32 %v924, %v926
      %v928 = vrot.slane %v914, %v927
      %v929 = vcombine.high %v921, %v921
      %930 = vrot.lane.b32.xlu0 %v921, 92
      %v931 = vpop.permute.xlu0 %930
      %932 = vrot.lane.b32.xlu0 %v929, 92
      %v933 = vpop.permute.xlu0 %932
      %934 = vrot.lane.b32.xlu0 %v928, 92
      %v935 = vpop.permute.xlu0 %934
      %vm936 = vcmask 752640
      %v937 = vsel %vm936, %v931, %v933
      %v938 = vsel %vm936, %v933, %v935
      %v940 = vsel %vm222, %v911, 0
      %v943 = vsel %vm226, %v937, 0
      %v946 = vsel %vm226, %v938, 0
      %v949 = vsel %vm226, %v935, 0
      %951 = vmatprep.subr.bf16.mxu0 0
      %952 = vmatpush1.bf16.msra.mxu0 0
      %953 = vmatprep.subr.bf16.mxu0 0
      %954 = vmatpush1.bf16.msra.mxu0 0
      %955 = vmatprep.subr.bf16.mxu0 0
      %956 = vmatpush1.bf16.msra.mxu0 0
      %957 = vmatprep.subr.bf16.mxu0 0
      %958 = vmatpush1.bf16.msra.mxu0 0
      %959 = vmatprep.subr.bf16.mxu0 0
      %960 = vmatpush1.bf16.msra.mxu0 0
      %961 = vmatprep.subr.bf16.mxu0 0
      %962 = vmatpush1.bf16.msra.mxu0 0
      %963 = vmatprep.subr.bf16.mxu0 0
      %964 = vmatpush1.bf16.msra.mxu0 0
      %965 = vmatprep.subr.bf16.mxu0 %v946
      %966 = vmatpush1.bf16.msra.mxu0 %v943
      %967 = vmatprep.subr.bf16.mxu0 0
      %968 = vmatpush2.bf16.msra.mxu0 0
      %969 = vmatprep.subr.bf16.mxu0 0
      %970 = vmatpush2.bf16.msra.mxu0 0
      %971 = vmatprep.subr.bf16.mxu0 0
      %972 = vmatpush2.bf16.msra.mxu0 0
      %973 = vmatprep.subr.bf16.mxu0 0
      %974 = vmatpush2.bf16.msra.mxu0 0
      %975 = vmatprep.subr.bf16.mxu0 0
      %976 = vmatpush2.bf16.msra.mxu0 0
      %977 = vmatprep.subr.bf16.mxu0 0
      %978 = vmatpush2.bf16.msra.mxu0 0
      %979 = vmatprep.subr.bf16.mxu0 0
      %980 = vmatpush2.bf16.msra.mxu0 0
      %981 = vmatprep.subr.bf16.mxu0 0
      %982 = vmatpush2.bf16.msra.mxu0 0
      %983 = vmatprep.mubr.bf16.mxu0 0
      %984 = vmatmul.mubr.bf16.gmra.mxu0 %v940
      %v985 = vpop.f32.mrf.mxu0
      %v986 = vadd.f32 0.0, %v985
      %v987 = vpop.f32.mrf.mxu0
      %v988 = vadd.f32 0.0, %v987
      %v989 = vpop.f32.mrf.mxu0
      %v990 = vpop.f32.mrf.mxu0
      %991 = vdwg.mxu0
      %992 = vmatprep.subr.bf16.mxu0 0
      %993 = vmatpush1.bf16.msra.mxu0 0
      %994 = vmatprep.subr.bf16.mxu0 0
      %995 = vmatpush1.bf16.msra.mxu0 0
      %996 = vmatprep.subr.bf16.mxu0 0
      %997 = vmatpush1.bf16.msra.mxu0 0
      %998 = vmatprep.subr.bf16.mxu0 0
      %999 = vmatpush1.bf16.msra.mxu0 0
      %1000 = vmatprep.subr.bf16.mxu0 0
      %1001 = vmatpush1.bf16.msra.mxu0 0
      %1002 = vmatprep.subr.bf16.mxu0 0
      %1003 = vmatpush1.bf16.msra.mxu0 0
      %1004 = vmatprep.subr.bf16.mxu0 0
      %1005 = vmatpush1.bf16.msra.mxu0 0
      %1006 = vmatprep.subr.bf16.mxu0 0
      %1007 = vmatpush1.bf16.msra.mxu0 %v949
      %1008 = vmatprep.subr.bf16.mxu0 0
      %1009 = vmatpush2.bf16.msra.mxu0 0
      %1010 = vmatprep.subr.bf16.mxu0 0
      %1011 = vmatpush2.bf16.msra.mxu0 0
      %1012 = vmatprep.subr.bf16.mxu0 0
      %1013 = vmatpush2.bf16.msra.mxu0 0
      %1014 = vmatprep.subr.bf16.mxu0 0
      %1015 = vmatpush2.bf16.msra.mxu0 0
      %1016 = vmatprep.subr.bf16.mxu0 0
      %1017 = vmatpush2.bf16.msra.mxu0 0
      %1018 = vmatprep.subr.bf16.mxu0 0
      %1019 = vmatpush2.bf16.msra.mxu0 0
      %1020 = vmatprep.subr.bf16.mxu0 0
      %1021 = vmatpush2.bf16.msra.mxu0 0
      %1022 = vmatprep.subr.bf16.mxu0 0
      %1023 = vmatpush2.bf16.msra.mxu0 0
      %1024 = vmatprep.mubr.bf16.mxu0 0
      %1025 = vmatmul.mubr.bf16.gmra.mxu0 %v940
      %v1026 = vpop.f32.mrf.mxu0
      %v1027 = vadd.f32 0.0, %v1026
      %v1028 = vpop.f32.mrf.mxu0
      %v1029 = vpop.f32.mrf.mxu0
      %v1030 = vpop.f32.mrf.mxu0
      %1031 = vdwg.mxu0
      %v1032 = vadd.f32 %v907, %v986
      %v1033 = vadd.f32 %v908, %v988
      %v1034 = vadd.f32 %v909, %v1027
      %s1035 = scalar_lea.vmem %s180, 14
      %v1036 = vld [vmem:[%s1035] sm:$0x3]
      %v1037 = vld [vmem:[%s185] sm:$0x3f]
      %v1039 = vcombine.high %v1037, %v1037
      %v1041 = vunpack.c.l.s4 1983009808
      %v1042 = vunpack.c.0.s8 %v1041
      %v1043 = vlaneseq
      %v1044 = vshrl.u32 %v1043, 7
      %v1045 = vsub.s32 %v1042, %v1044
      %v1046 = vrot.slane %v1037, %v1045
      %v1048 = vunpack.c.l.s4 1983009808
      %v1049 = vunpack.c.0.s8 %v1048
      %v1050 = vlaneseq
      %v1051 = vshrl.u32 %v1050, 7
      %v1052 = vsub.s32 %v1049, %v1051
      %v1053 = vrot.slane %v1039, %v1052
      %v1054 = vcombine.high %v1046, %v1046
      %1055 = vrot.lane.b32.xlu0 %v1046, 91
      %v1056 = vpop.permute.xlu0 %1055
      %1057 = vrot.lane.b32.xlu0 %v1054, 91
      %v1058 = vpop.permute.xlu0 %1057
      %1059 = vrot.lane.b32.xlu0 %v1053, 91
      %v1060 = vpop.permute.xlu0 %1059
      %vm1061 = vcmask 744448
      %v1062 = vsel %vm1061, %v1056, %v1058
      %v1063 = vsel %vm1061, %v1058, %v1060
      %v1065 = vsel %vm222, %v1036, 0
      %v1068 = vsel %vm226, %v1062, 0
      %v1071 = vsel %vm226, %v1063, 0
      %v1074 = vsel %vm226, %v1060, 0
      %1076 = vmatprep.subr.bf16.mxu0 0
      %1077 = vmatpush1.bf16.msra.mxu0 0
      %1078 = vmatprep.subr.bf16.mxu0 0
      %1079 = vmatpush1.bf16.msra.mxu0 0
      %1080 = vmatprep.subr.bf16.mxu0 0
      %1081 = vmatpush1.bf16.msra.mxu0 0
      %1082 = vmatprep.subr.bf16.mxu0 0
      %1083 = vmatpush1.bf16.msra.mxu0 0
      %1084 = vmatprep.subr.bf16.mxu0 0
      %1085 = vmatpush1.bf16.msra.mxu0 0
      %1086 = vmatprep.subr.bf16.mxu0 0
      %1087 = vmatpush1.bf16.msra.mxu0 0
      %1088 = vmatprep.subr.bf16.mxu0 0
      %1089 = vmatpush1.bf16.msra.mxu0 0
      %1090 = vmatprep.subr.bf16.mxu0 %v1071
      %1091 = vmatpush1.bf16.msra.mxu0 %v1068
      %1092 = vmatprep.subr.bf16.mxu0 0
      %1093 = vmatpush2.bf16.msra.mxu0 0
      %1094 = vmatprep.subr.bf16.mxu0 0
      %1095 = vmatpush2.bf16.msra.mxu0 0
      %1096 = vmatprep.subr.bf16.mxu0 0
      %1097 = vmatpush2.bf16.msra.mxu0 0
      %1098 = vmatprep.subr.bf16.mxu0 0
      %1099 = vmatpush2.bf16.msra.mxu0 0
      %1100 = vmatprep.subr.bf16.mxu0 0
      %1101 = vmatpush2.bf16.msra.mxu0 0
      %1102 = vmatprep.subr.bf16.mxu0 0
      %1103 = vmatpush2.bf16.msra.mxu0 0
      %1104 = vmatprep.subr.bf16.mxu0 0
      %1105 = vmatpush2.bf16.msra.mxu0 0
      %1106 = vmatprep.subr.bf16.mxu0 0
      %1107 = vmatpush2.bf16.msra.mxu0 0
      %1108 = vmatprep.mubr.bf16.mxu0 0
      %1109 = vmatmul.mubr.bf16.gmra.mxu0 %v1065
      %v1110 = vpop.f32.mrf.mxu0
      %v1111 = vadd.f32 0.0, %v1110
      %v1112 = vpop.f32.mrf.mxu0
      %v1113 = vadd.f32 0.0, %v1112
      %v1114 = vpop.f32.mrf.mxu0
      %v1115 = vpop.f32.mrf.mxu0
      %1116 = vdwg.mxu0
      %1117 = vmatprep.subr.bf16.mxu0 0
      %1118 = vmatpush1.bf16.msra.mxu0 0
      %1119 = vmatprep.subr.bf16.mxu0 0
      %1120 = vmatpush1.bf16.msra.mxu0 0
      %1121 = vmatprep.subr.bf16.mxu0 0
      %1122 = vmatpush1.bf16.msra.mxu0 0
      %1123 = vmatprep.subr.bf16.mxu0 0
      %1124 = vmatpush1.bf16.msra.mxu0 0
      %1125 = vmatprep.subr.bf16.mxu0 0
      %1126 = vmatpush1.bf16.msra.mxu0 0
      %1127 = vmatprep.subr.bf16.mxu0 0
      %1128 = vmatpush1.bf16.msra.mxu0 0
      %1129 = vmatprep.subr.bf16.mxu0 0
      %1130 = vmatpush1.bf16.msra.mxu0 0
      %1131 = vmatprep.subr.bf16.mxu0 0
      %1132 = vmatpush1.bf16.msra.mxu0 %v1074
      %1133 = vmatprep.subr.bf16.mxu0 0
      %1134 = vmatpush2.bf16.msra.mxu0 0
      %1135 = vmatprep.subr.bf16.mxu0 0
      %1136 = vmatpush2.bf16.msra.mxu0 0
      %1137 = vmatprep.subr.bf16.mxu0 0
      %1138 = vmatpush2.bf16.msra.mxu0 0
      %1139 = vmatprep.subr.bf16.mxu0 0
      %1140 = vmatpush2.bf16.msra.mxu0 0
      %1141 = vmatprep.subr.bf16.mxu0 0
      %1142 = vmatpush2.bf16.msra.mxu0 0
      %1143 = vmatprep.subr.bf16.mxu0 0
      %1144 = vmatpush2.bf16.msra.mxu0 0
      %1145 = vmatprep.subr.bf16.mxu0 0
      %1146 = vmatpush2.bf16.msra.mxu0 0
      %1147 = vmatprep.subr.bf16.mxu0 0
      %1148 = vmatpush2.bf16.msra.mxu0 0
      %1149 = vmatprep.mubr.bf16.mxu0 0
      %1150 = vmatmul.mubr.bf16.gmra.mxu0 %v1065
      %v1151 = vpop.f32.mrf.mxu0
      %v1152 = vadd.f32 0.0, %v1151
      %v1153 = vpop.f32.mrf.mxu0
      %v1154 = vpop.f32.mrf.mxu0
      %v1155 = vpop.f32.mrf.mxu0
      %1156 = vdwg.mxu0
      %v1157 = vadd.f32 %v1032, %v1111
      %v1158 = vadd.f32 %v1033, %v1113
      %v1159 = vadd.f32 %v1034, %v1152
      %s1160 = scalar_lea.vmem %s180, 16
      %v1161 = vld [vmem:[%s1160] sm:$0x3]
      %v1162 = vld [vmem:[%s185] sm:$0x3f]
      %v1164 = vcombine.high %v1162, %v1162
      %v1166 = vunpack.c.l.s4 1983009808
      %v1167 = vunpack.c.0.s8 %v1166
      %v1168 = vlaneseq
      %v1169 = vshrl.u32 %v1168, 7
      %v1170 = vsub.s32 %v1167, %v1169
      %v1171 = vrot.slane %v1162, %v1170
      %v1173 = vunpack.c.l.s4 1983009808
      %v1174 = vunpack.c.0.s8 %v1173
      %v1175 = vlaneseq
      %v1176 = vshrl.u32 %v1175, 7
      %v1177 = vsub.s32 %v1174, %v1176
      %v1178 = vrot.slane %v1164, %v1177
      %v1179 = vcombine.high %v1171, %v1171
      %1180 = vrot.lane.b32.xlu0 %v1171, 90
      %v1181 = vpop.permute.xlu0 %1180
      %1182 = vrot.lane.b32.xlu0 %v1179, 90
      %v1183 = vpop.permute.xlu0 %1182
      %1184 = vrot.lane.b32.xlu0 %v1178, 90
      %v1185 = vpop.permute.xlu0 %1184
      %vm1186 = vcmask 736256
      %v1187 = vsel %vm1186, %v1181, %v1183
      %v1188 = vsel %vm1186, %v1183, %v1185
      %v1190 = vsel %vm222, %v1161, 0
      %v1193 = vsel %vm226, %v1187, 0
      %v1196 = vsel %vm226, %v1188, 0
      %v1199 = vsel %vm226, %v1185, 0
      %1201 = vmatprep.subr.bf16.mxu0 0
      %1202 = vmatpush1.bf16.msra.mxu0 0
      %1203 = vmatprep.subr.bf16.mxu0 0
      %1204 = vmatpush1.bf16.msra.mxu0 0
      %1205 = vmatprep.subr.bf16.mxu0 0
      %1206 = vmatpush1.bf16.msra.mxu0 0
      %1207 = vmatprep.subr.bf16.mxu0 0
      %1208 = vmatpush1.bf16.msra.mxu0 0
      %1209 = vmatprep.subr.bf16.mxu0 0
      %1210 = vmatpush1.bf16.msra.mxu0 0
      %1211 = vmatprep.subr.bf16.mxu0 0
      %1212 = vmatpush1.bf16.msra.mxu0 0
      %1213 = vmatprep.subr.bf16.mxu0 0
      %1214 = vmatpush1.bf16.msra.mxu0 0
      %1215 = vmatprep.subr.bf16.mxu0 %v1196
      %1216 = vmatpush1.bf16.msra.mxu0 %v1193
      %1217 = vmatprep.subr.bf16.mxu0 0
      %1218 = vmatpush2.bf16.msra.mxu0 0
      %1219 = vmatprep.subr.bf16.mxu0 0
      %1220 = vmatpush2.bf16.msra.mxu0 0
      %1221 = vmatprep.subr.bf16.mxu0 0
      %1222 = vmatpush2.bf16.msra.mxu0 0
      %1223 = vmatprep.subr.bf16.mxu0 0
      %1224 = vmatpush2.bf16.msra.mxu0 0
      %1225 = vmatprep.subr.bf16.mxu0 0
      %1226 = vmatpush2.bf16.msra.mxu0 0
      %1227 = vmatprep.subr.bf16.mxu0 0
      %1228 = vmatpush2.bf16.msra.mxu0 0
      %1229 = vmatprep.subr.bf16.mxu0 0
      %1230 = vmatpush2.bf16.msra.mxu0 0
      %1231 = vmatprep.subr.bf16.mxu0 0
      %1232 = vmatpush2.bf16.msra.mxu0 0
      %1233 = vmatprep.mubr.bf16.mxu0 0
      %1234 = vmatmul.mubr.bf16.gmra.mxu0 %v1190
      %v1235 = vpop.f32.mrf.mxu0
      %v1236 = vadd.f32 0.0, %v1235
      %v1237 = vpop.f32.mrf.mxu0
      %v1238 = vadd.f32 0.0, %v1237
      %v1239 = vpop.f32.mrf.mxu0
      %v1240 = vpop.f32.mrf.mxu0
      %1241 = vdwg.mxu0
      %1242 = vmatprep.subr.bf16.mxu0 0
      %1243 = vmatpush1.bf16.msra.mxu0 0
      %1244 = vmatprep.subr.bf16.mxu0 0
      %1245 = vmatpush1.bf16.msra.mxu0 0
      %1246 = vmatprep.subr.bf16.mxu0 0
      %1247 = vmatpush1.bf16.msra.mxu0 0
      %1248 = vmatprep.subr.bf16.mxu0 0
      %1249 = vmatpush1.bf16.msra.mxu0 0
      %1250 = vmatprep.subr.bf16.mxu0 0
      %1251 = vmatpush1.bf16.msra.mxu0 0
      %1252 = vmatprep.subr.bf16.mxu0 0
      %1253 = vmatpush1.bf16.msra.mxu0 0
      %1254 = vmatprep.subr.bf16.mxu0 0
      %1255 = vmatpush1.bf16.msra.mxu0 0
      %1256 = vmatprep.subr.bf16.mxu0 0
      %1257 = vmatpush1.bf16.msra.mxu0 %v1199
      %1258 = vmatprep.subr.bf16.mxu0 0
      %1259 = vmatpush2.bf16.msra.mxu0 0
      %1260 = vmatprep.subr.bf16.mxu0 0
      %1261 = vmatpush2.bf16.msra.mxu0 0
      %1262 = vmatprep.subr.bf16.mxu0 0
      %1263 = vmatpush2.bf16.msra.mxu0 0
      %1264 = vmatprep.subr.bf16.mxu0 0
      %1265 = vmatpush2.bf16.msra.mxu0 0
      %1266 = vmatprep.subr.bf16.mxu0 0
      %1267 = vmatpush2.bf16.msra.mxu0 0
      %1268 = vmatprep.subr.bf16.mxu0 0
      %1269 = vmatpush2.bf16.msra.mxu0 0
      %1270 = vmatprep.subr.bf16.mxu0 0
      %1271 = vmatpush2.bf16.msra.mxu0 0
      %1272 = vmatprep.subr.bf16.mxu0 0
      %1273 = vmatpush2.bf16.msra.mxu0 0
      %1274 = vmatprep.mubr.bf16.mxu0 0
      %1275 = vmatmul.mubr.bf16.gmra.mxu0 %v1190
      %v1276 = vpop.f32.mrf.mxu0
      %v1277 = vadd.f32 0.0, %v1276
      %v1278 = vpop.f32.mrf.mxu0
      %v1279 = vpop.f32.mrf.mxu0
      %v1280 = vpop.f32.mrf.mxu0
      %1281 = vdwg.mxu0
      %v1282 = vadd.f32 %v1157, %v1236
      %v1283 = vadd.f32 %v1158, %v1238
      %v1284 = vadd.f32 %v1159, %v1277
      %v1285 = vld [vmem:[%s2] sm:$0xf]
      %1287 = vset.pattern.permute.xlu0 0
      %1288 = vperm.xlu0 %1287, %v1285
      %v1289 = vpop.permute.xlu0 %1288
      %v1291 = vadd.f32 %v1282, %v1289
      %v1292 = vadd.f32 %v1283, %v1289
      %v1293 = vadd.f32 %v1284, %v1289
      %v1294 = vmax.f32 %v1291, 0.0
      %v1295 = vmax.f32 %v1292, 0.0
      %v1296 = vmax.f32 %v1293, 0.0
      %v1299 = vcombine.low %v1294, %v1295
      %1301 = vst [vmem:[%s190] sm:$0xff] %v1299
      %vm1302 = vcmask 257024
      %1303 = vst.msk [vmem:[%s190 + $0x8] sm:$0xf] %vm1302, %v1296
      %p1304 = scmp.lt.s32.totalorder %s14, 1
      %s1305 = scalar_select %p1304, %s14, 1
      %s1306 = smul.addr %s1305, 3
      %s1307 = smul.addr %s1306, 4
      %s1308 = scalar_lea.vmem %s3, %s1307
      // Predicated region
      $region33: #{residual_group.11} parent=31 // pred_check
        %p1309 = pneg %p105
      $region34: #{residual_group.11} parent=31 // pred_check_branch
        %1311 = sbr.rel (%p1309) target = $region36
      $region35: #{residual_group.11} parent=31 // pred_region
        _
      $region36: #{residual_group.11} parent=31 // pred_fallthru
        _
    $region32: #{residual_group.11} parent=5 // pred_fallthru
      _
    %p1312 = scmp.le.s32.totalorder 2, %s9
    // Predicated region
    $region37: #{residual_group.11} parent=5 // pred_check
      %p1313 = pneg %p1312
    $region38: #{residual_group.11} parent=5 // pred_check_branch
      %1315 = sbr.rel (%p1313) target = $region40
    $region39: #{residual_group.11} parent=5 // pred_region
      %s1316 = ssub.s32 %s9, 2
      // Predicated region
      $region41: #{residual_group.11} parent=39 // pred_check
        %p1317 = pneg %p111
      $region42: #{residual_group.11} parent=39 // pred_check_branch
        %1319 = sbr.rel (%p1317) target = $region44
      $region43: #{residual_group.11} parent=39 // pred_region
        %p1320 = scmp.lt.s32.totalorder %s15, 1
        %s1321 = scalar_select %p1320, %s15, 1
        %s1322 = smul.addr %s1321, 3
        %s1323 = smul.addr %s1322, 4
        %s1324 = scalar_lea.vmem %s3, %s1323
      $region44: #{residual_group.11} parent=39 // pred_fallthru
        _
    $region40: #{residual_group.11} parent=5 // pred_fallthru
      _
  $region6: #{residual_group.11} parent=0 // loop_footer
    %s13 = sadd.s32 1, %s9
  $region7: #{residual_group.11} parent=0 // loop_footer_branch
    %8 = sbr.rel target = $region3
  $region8: #{residual_group.11} parent=0 // loop_exit
    _

// kernel: residual_group.12
$region0: #{residual_group.12}
  #allocation0 [shape = 'u32[]', space=smem, size = 0x4, offset = 0x4, fixed_abs, tag = 'smem constant byte address 0x4 - core index']
  #allocation1 [shape = 'u32[144,128]{1,0:T(1,128)}', space=vmem, size = 0x12000, scoped, tag = 'internal scratch']
  %s0 = inlined_call_operand.vmem [shape: bf16[2,9,4,4], index: 0, kind: input, shape index: {}]
  %s1 = inlined_call_operand.vmem [shape: bf16[2,4,342], index: 1, kind: input, shape index: {}]
  %s2 = inlined_call_operand.vmem [shape: f32[1,4,1], index: 2, kind: input, shape index: {}]
  %s3 = inlined_call_operand.vmem [shape: f32[2,4,288], index: 3, kind: output, shape index: {}]
  %s4 = sld [smem:[#allocation0]]
  $region45: #{residual_group.12} parent=0
    _
  %s6 = ssub.s32 1, %s4
  %s7 = scalar_select 0, %s6, %s4
  loop: start=0, step=1, limit=4
  $region2: #{residual_group.12} parent=0 // loop_pre_header
    _
  $region3: #{residual_group.12} parent=0 // loop_header
    %s9 = sphi 0, %s13
    %p10 = scmp.ge.s32.totalorder %s9, 4
    %s19 = sphi 0, %s21
    %s22 = sphi 0, %s19
    %s23 = sphi 0, %s22
    %s39 = sphi 0, %s23
    %s45 = sphi 0, %s47
    %s48 = sphi 0, %s45
    %s49 = sphi 0, %s48
    %s65 = sphi 0, %s49
    %s69 = sphi 0, %s69
    %s71 = sphi 0, %s69
    %s72 = sphi 0, %s71
    %s86 = sphi 0, %s72
    %s92 = sphi 0, %s94
    %s95 = sphi 0, %s92
    %s96 = sphi 0, %s95
    %s112 = sphi 0, %s96
  $region4: #{residual_group.12} parent=0 // loop_header_branch
    %12 = sbr.rel (%p10) target = $region8
  $region5: #{residual_group.12} parent=0 // loop_body
    %s14 = ssub.s32 %s9, 1
    %s15 = ssub.s32 %s9, 2
    %s16 = sadd.s32 %s9, 1
    %s17 = ssub.s32 %s9, %s16
    %p18 = scmp.eq.s32.totalorder %s17, 0
    %s20 = sadd.s32 %s19, 1
    %s21 = scalar_select %p18, %s19, %s20
    %p24 = pneg %p18
    %p25 = scmp.eq.s32.totalorder %s9, 1
    %p26 = por %p24, %p25
    %p27 = scmp.ne.s32.totalorder %s19, %s22
    %p28 = scmp.eq.s32.totalorder %s9, 0
    %p29 = por %p27, %p28
    %p30 = scmp.ne.s32.totalorder %s19, %s22
    %p31 = scmp.eq.s32.totalorder %s14, 1
    %p32 = por %p30, %p31
    %p33 = scmp.ne.s32.totalorder %s22, %s23
    %p34 = scmp.eq.s32.totalorder %s14, 0
    %p35 = por %p33, %p34
    %p36 = scmp.ne.s32.totalorder %s22, %s23
    %p37 = scmp.eq.s32.totalorder %s15, 1
    %p38 = por %p36, %p37
    %p40 = scmp.ne.s32.totalorder %s23, %s39
    %p41 = scmp.eq.s32.totalorder %s15, 0
    %p42 = por %p40, %p41
    %s43 = ssub.s32 %s9, %s16
    %p44 = scmp.eq.s32.totalorder %s43, 0
    %s46 = sadd.s32 %s45, 1
    %s47 = scalar_select %p44, %s45, %s46
    %p50 = pneg %p44
    %p51 = scmp.eq.s32.totalorder %s9, 1
    %p52 = por %p50, %p51
    %p53 = scmp.ne.s32.totalorder %s45, %s48
    %p54 = scmp.eq.s32.totalorder %s9, 0
    %p55 = por %p53, %p54
    %p56 = scmp.ne.s32.totalorder %s45, %s48
    %p57 = scmp.eq.s32.totalorder %s14, 1
    %p58 = por %p56, %p57
    %p59 = scmp.ne.s32.totalorder %s48, %s49
    %p60 = scmp.eq.s32.totalorder %s14, 0
    %p61 = por %p59, %p60
    %p62 = scmp.ne.s32.totalorder %s48, %s49
    %p63 = scmp.eq.s32.totalorder %s15, 1
    %p64 = por %p62, %p63
    %p66 = scmp.ne.s32.totalorder %s49, %s65
    %p67 = scmp.eq.s32.totalorder %s15, 0
    %p68 = por %p66, %p67
    %s70 = sadd.s32 %s69, 1
    %p73 = scmp.eq.s32.totalorder %s9, 1
    %p74 = scmp.ne.s32.totalorder %s69, %s71
    %p75 = scmp.eq.s32.totalorder %s9, 0
    %p76 = por %p74, %p75
    %p77 = scmp.ne.s32.totalorder %s69, %s71
    %p78 = scmp.eq.s32.totalorder %s14, 1
    %p79 = por %p77, %p78
    %p80 = scmp.ne.s32.totalorder %s71, %s72
    %p81 = scmp.eq.s32.totalorder %s14, 0
    %p82 = por %p80, %p81
    %p83 = scmp.ne.s32.totalorder %s71, %s72
    %p84 = scmp.eq.s32.totalorder %s15, 1
    %p85 = por %p83, %p84
    %p87 = scmp.ne.s32.totalorder %s72, %s86
    %p88 = scmp.eq.s32.totalorder %s15, 0
    %p89 = por %p87, %p88
    %s90 = ssub.s32 %s9, %s16
    %p91 = scmp.eq.s32.totalorder %s90, 0
    %s93 = sadd.s32 %s92, 1
    %s94 = scalar_select %p91, %s92, %s93
    %p97 = pneg %p91
    %p98 = scmp.eq.s32.totalorder %s9, 1
    %p99 = por %p97, %p98
    %p100 = scmp.ne.s32.totalorder %s92, %s95
    %p101 = scmp.eq.s32.totalorder %s9, 0
    %p102 = por %p100, %p101
    %p103 = scmp.ne.s32.totalorder %s92, %s95
    %p104 = scmp.eq.s32.totalorder %s14, 1
    %p105 = por %p103, %p104
    %p106 = scmp.ne.s32.totalorder %s95, %s96
    %p107 = scmp.eq.s32.totalorder %s14, 0
    %p108 = por %p106, %p107
    %p109 = scmp.ne.s32.totalorder %s95, %s96
    %p110 = scmp.eq.s32.totalorder %s15, 1
    %p111 = por %p109, %p110
    %p113 = scmp.ne.s32.totalorder %s96, %s112
    %p114 = scmp.eq.s32.totalorder %s15, 0
    %p115 = por %p113, %p114
    %p116 = scmp.le.s32.totalorder 1, %s9
    %p117 = scmp.lt.s32.totalorder %s9, 3
    %p118 = pnand %p116, %p117
    %p119 = pneg %p118
    // Predicated region
    $region9: #{residual_group.12} parent=5 // pred_check
      _
    $region10: #{residual_group.12} parent=5 // pred_check_branch
      %121 = sbr.rel (%p118) target = $region12
    $region11: #{residual_group.12} parent=5 // pred_region
      %s122 = ssub.s32 %s9, 1
      // Predicated region
      $region13: #{residual_group.12} parent=11 // pred_check
        %p123 = pneg %p82
      $region14: #{residual_group.12} parent=11 // pred_check_branch
        %125 = sbr.rel (%p123) target = $region16
      $region15: #{residual_group.12} parent=11 // pred_region
        _
      $region16: #{residual_group.12} parent=11 // pred_fallthru
        _
    $region12: #{residual_group.12} parent=5 // pred_fallthru
      _
    %p126 = scmp.lt.s32.totalorder %s9, 2
    // Predicated region
    $region17: #{residual_group.12} parent=5 // pred_check
      %p127 = pneg %p126
    $region18: #{residual_group.12} parent=5 // pred_check_branch
      %129 = sbr.rel (%p127) target = $region20
    $region19: #{residual_group.12} parent=5 // pred_region
      // Predicated region
      $region21: #{residual_group.12} parent=19 // pred_check
        %p130 = pneg %p29
      $region22: #{residual_group.12} parent=19 // pred_check_branch
        %132 = sbr.rel (%p130) target = $region24
      $region23: #{residual_group.12} parent=19 // pred_region
        %p133 = scmp.lt.s32.totalorder %s9, 1
        %s134 = scalar_select %p133, %s9, 1
        %s135 = smul.addr %s134, 9
        %s136 = smul.addr %s135, 2
        %s137 = scalar_lea.vmem %s0, %s136
      $region24: #{residual_group.12} parent=19 // pred_fallthru
        _
      // Predicated region
      $region25: #{residual_group.12} parent=19 // pred_check
        %p138 = pneg %p55
      $region26: #{residual_group.12} parent=19 // pred_check_branch
        %140 = sbr.rel (%p138) target = $region28
      $region27: #{residual_group.12} parent=19 // pred_region
        %p141 = scmp.lt.s32.totalorder %s9, 1
        %s142 = scalar_select %p141, %s9, 1
        %s143 = smul.addr %s142, 3
        %s144 = smul.addr %s143, 2
        %s145 = scalar_lea.vmem %s1, %s144
      $region28: #{residual_group.12} parent=19 // pred_fallthru
        _
    $region20: #{residual_group.12} parent=5 // pred_fallthru
      _
    %p146 = scmp.le.s32.totalorder 1, %s9
    %p147 = scmp.lt.s32.totalorder %s9, 3
    %p148 = pnand %p146, %p147
    %p149 = pneg %p148
    // Predicated region
    $region29: #{residual_group.12} parent=5 // pred_check
      _
    $region30: #{residual_group.12} parent=5 // pred_check_branch
      %151 = sbr.rel (%p148) target = $region32
    $region31: #{residual_group.12} parent=5 // pred_region
      %s152 = ssub.s32 %s9, 1
      %p153 = scmp.lt.s32.totalorder %s14, 1
      %s154 = scalar_select %p153, %s14, 1
      %s155 = smul.addr %s154, 9
      %s156 = smul.addr %s155, 2
      %s157 = scalar_lea.vmem %s0, %s156
      %p158 = pneg %p35
      %p159 = pneg %p32
      %p160 = scmp.lt.s32.totalorder %s14, 1
      %s161 = scalar_select %p160, %s14, 1
      %s162 = smul.addr %s161, 3
      %s163 = smul.addr %s162, 2
      %s164 = scalar_lea.vmem %s1, %s163
      %p165 = pneg %p61
      %p166 = pneg %p58
      %p167 = pneg %p82
      %p168 = pneg %p79
      %p169 = pneg %p108
      %p170 = pneg %p105
      %p171 = scmp.lt.s32.totalorder %s14, 1
      %s172 = scalar_select %p171, %s14, 1
      %s173 = smul.addr %s172, 3
      %s174 = smul.addr %s173, 4
      %s175 = scalar_lea.vmem %s3, %s174
      %p176 = scmp.lt.s32.totalorder %s14, 1
      %s177 = scalar_select %p176, %s14, 1
      %s178 = smul.addr %s177, 9
      %s179 = smul.addr %s178, 2
      %s180 = scalar_lea.vmem %s0, %s179
      %p181 = scmp.lt.s32.totalorder %s14, 1
      %s182 = scalar_select %p181, %s14, 1
      %s183 = smul.addr %s182, 3
      %s184 = smul.addr %s183, 2
      %s185 = scalar_lea.vmem %s1, %s184
      %p186 = scmp.lt.s32.totalorder %s14, 1
      %s187 = scalar_select %p186, %s14, 1
      %s188 = smul.addr %s187, 3
      %s189 = smul.addr %s188, 4
      %s190 = scalar_lea.vmem %s3, %s189
      %v192 = vld [vmem:[%s180] sm:$0x3]
      %v193 = vld [vmem:[%s185] sm:$0x3f]
      %s194 = scalar_lea.vmem %s180, 2
      %v195 = vld [vmem:[%s194] sm:$0x3]
      %v197 = vcombine.high %v193, %v193
      %v199 = vunpack.c.l.s4 1983009808
      %v200 = vunpack.c.0.s8 %v199
      %v201 = vlaneseq
      %v202 = vshrl.u32 %v201, 7
      %v203 = vsub.s32 %v200, %v202
      %v204 = vrot.slane %v193, %v203
      %v206 = vunpack.c.l.s4 1983009808
      %v207 = vunpack.c.0.s8 %v206
      %v208 = vlaneseq
      %v209 = vshrl.u32 %v208, 7
      %v210 = vsub.s32 %v207, %v209
      %v211 = vrot.slane %v197, %v210
      %v212 = vcombine.high %v204, %v204
      %213 = vrot.lane.b32.xlu0 %v204, 127
      %v214 = vpop.permute.xlu0 %213
      %215 = vrot.lane.b32.xlu0 %v212, 127
      %v216 = vpop.permute.xlu0 %215
      %217 = vrot.lane.b32.xlu0 %v211, 127
      %v218 = vpop.permute.xlu0 %217
      %vm219 = vcmask 1039360
      %v220 = vsel %vm219, %v214, %v216
      %v221 = vsel %vm219, %v216, %v218
      %vm222 = vcmask 31744
      %v224 = vsel %vm222, %v195, 0
      %vm226 = vcmask 1041408
      %v228 = vsel %vm226, %v220, 0
      %v231 = vsel %vm226, %v221, 0
      %v234 = vsel %vm226, %v218, 0
      %236 = vmatprep.subr.bf16.mxu0 0
      %237 = vmatpush1.bf16.msra.mxu0 0
      %238 = vmatprep.subr.bf16.mxu0 0
      %239 = vmatpush1.bf16.msra.mxu0 0
      %240 = vmatprep.subr.bf16.mxu0 0
      %241 = vmatpush1.bf16.msra.mxu0 0
      %242 = vmatprep.subr.bf16.mxu0 0
      %243 = vmatpush1.bf16.msra.mxu0 0
      %244 = vmatprep.subr.bf16.mxu0 0
      %245 = vmatpush1.bf16.msra.mxu0 0
      %246 = vmatprep.subr.bf16.mxu0 0
      %247 = vmatpush1.bf16.msra.mxu0 0
      %248 = vmatprep.subr.bf16.mxu0 0
      %249 = vmatpush1.bf16.msra.mxu0 0
      %250 = vmatprep.subr.bf16.mxu0 %v231
      %251 = vmatpush1.bf16.msra.mxu0 %v228
      %252 = vmatprep.subr.bf16.mxu0 0
      %253 = vmatpush2.bf16.msra.mxu0 0
      %254 = vmatprep.subr.bf16.mxu0 0
      %255 = vmatpush2.bf16.msra.mxu0 0
      %256 = vmatprep.subr.bf16.mxu0 0
      %257 = vmatpush2.bf16.msra.mxu0 0
      %258 = vmatprep.subr.bf16.mxu0 0
      %259 = vmatpush2.bf16.msra.mxu0 0
      %260 = vmatprep.subr.bf16.mxu0 0
      %261 = vmatpush2.bf16.msra.mxu0 0
      %262 = vmatprep.subr.bf16.mxu0 0
      %263 = vmatpush2.bf16.msra.mxu0 0
      %264 = vmatprep.subr.bf16.mxu0 0
      %265 = vmatpush2.bf16.msra.mxu0 0
      %266 = vmatprep.subr.bf16.mxu0 0
      %267 = vmatpush2.bf16.msra.mxu0 0
      %268 = vmatprep.mubr.bf16.mxu0 0
      %269 = vmatmul.mubr.bf16.gmra.mxu0 %v224
      %v270 = vpop.f32.mrf.mxu0
      %v271 = vadd.f32 0.0, %v270
      %v272 = vpop.f32.mrf.mxu0
      %v273 = vadd.f32 0.0, %v272
      %v274 = vpop.f32.mrf.mxu0
      %v275 = vpop.f32.mrf.mxu0
      %276 = vdwg.mxu0
      %277 = vmatprep.subr.bf16.mxu0 0
      %278 = vmatpush1.bf16.msra.mxu0 0
      %279 = vmatprep.subr.bf16.mxu0 0
      %280 = vmatpush1.bf16.msra.mxu0 0
      %281 = vmatprep.subr.bf16.mxu0 0
      %282 = vmatpush1.bf16.msra.mxu0 0
      %283 = vmatprep.subr.bf16.mxu0 0
      %284 = vmatpush1.bf16.msra.mxu0 0
      %285 = vmatprep.subr.bf16.mxu0 0
      %286 = vmatpush1.bf16.msra.mxu0 0
      %287 = vmatprep.subr.bf16.mxu0 0
      %288 = vmatpush1.bf16.msra.mxu0 0
      %289 = vmatprep.subr.bf16.mxu0 0
      %290 = vmatpush1.bf16.msra.mxu0 0
      %291 = vmatprep.subr.bf16.mxu0 0
      %292 = vmatpush1.bf16.msra.mxu0 %v234
      %293 = vmatprep.subr.bf16.mxu0 0
      %294 = vmatpush2.bf16.msra.mxu0 0
      %295 = vmatprep.subr.bf16.mxu0 0
      %296 = vmatpush2.bf16.msra.mxu0 0
      %297 = vmatprep.subr.bf16.mxu0 0
      %298 = vmatpush2.bf16.msra.mxu0 0
      %299 = vmatprep.subr.bf16.mxu0 0
      %300 = vmatpush2.bf16.msra.mxu0 0
      %301 = vmatprep.subr.bf16.mxu0 0
      %302 = vmatpush2.bf16.msra.mxu0 0
      %303 = vmatprep.subr.bf16.mxu0 0
      %304 = vmatpush2.bf16.msra.mxu0 0
      %305 = vmatprep.subr.bf16.mxu0 0
      %306 = vmatpush2.bf16.msra.mxu0 0
      %307 = vmatprep.subr.bf16.mxu0 0
      %308 = vmatpush2.bf16.msra.mxu0 0
      %309 = vmatprep.mubr.bf16.mxu0 0
      %310 = vmatmul.mubr.bf16.gmra.mxu0 %v224
      %v311 = vpop.f32.mrf.mxu0
      %v312 = vadd.f32 0.0, %v311
      %v313 = vpop.f32.mrf.mxu0
      %v314 = vpop.f32.mrf.mxu0
      %v315 = vpop.f32.mrf.mxu0
      %316 = vdwg.mxu0
      %v318 = vsel %vm222, %v192, 0
      %v321 = vsel %vm226, %v204, 0
      %v324 = vsel %vm226, %v212, 0
      %v327 = vsel %vm226, %v211, 0
      %329 = vmatprep.subr.bf16.mxu0 0
      %330 = vmatpush1.bf16.msra.mxu0 0
      %331 = vmatprep.subr.bf16.mxu0 0
      %332 = vmatpush1.bf16.msra.mxu0 0
      %333 = vmatprep.subr.bf16.mxu0 0
      %334 = vmatpush1.bf16.msra.mxu0 0
      %335 = vmatprep.subr.bf16.mxu0 0
      %336 = vmatpush1.bf16.msra.mxu0 0
      %337 = vmatprep.subr.bf16.mxu0 0
      %338 = vmatpush1.bf16.msra.mxu0 0
      %339 = vmatprep.subr.bf16.mxu0 0
      %340 = vmatpush1.bf16.msra.mxu0 0
      %341 = vmatprep.subr.bf16.mxu0 0
      %342 = vmatpush1.bf16.msra.mxu0 0
      %343 = vmatprep.subr.bf16.mxu0 %v324
      %344 = vmatpush1.bf16.msra.mxu0 %v321
      %345 = vmatprep.subr.bf16.mxu0 0
      %346 = vmatpush2.bf16.msra.mxu0 0
      %347 = vmatprep.subr.bf16.mxu0 0
      %348 = vmatpush2.bf16.msra.mxu0 0
      %349 = vmatprep.subr.bf16.mxu0 0
      %350 = vmatpush2.bf16.msra.mxu0 0
      %351 = vmatprep.subr.bf16.mxu0 0
      %352 = vmatpush2.bf16.msra.mxu0 0
      %353 = vmatprep.subr.bf16.mxu0 0
      %354 = vmatpush2.bf16.msra.mxu0 0
      %355 = vmatprep.subr.bf16.mxu0 0
      %356 = vmatpush2.bf16.msra.mxu0 0
      %357 = vmatprep.subr.bf16.mxu0 0
      %358 = vmatpush2.bf16.msra.mxu0 0
      %359 = vmatprep.subr.bf16.mxu0 0
      %360 = vmatpush2.bf16.msra.mxu0 0
      %361 = vmatprep.mubr.bf16.mxu0 0
      %362 = vmatmul.mubr.bf16.gmra.mxu0 %v318
      %v363 = vpop.f32.mrf.mxu0
      %v364 = vadd.f32 %v271, %v363
      %v365 = vpop.f32.mrf.mxu0
      %v366 = vadd.f32 %v273, %v365
      %v367 = vpop.f32.mrf.mxu0
      %v368 = vpop.f32.mrf.mxu0
      %369 = vdwg.mxu0
      %370 = vmatprep.subr.bf16.mxu0 0
      %371 = vmatpush1.bf16.msra.mxu0 0
      %372 = vmatprep.subr.bf16.mxu0 0
      %373 = vmatpush1.bf16.msra.mxu0 0
      %374 = vmatprep.subr.bf16.mxu0 0
      %375 = vmatpush1.bf16.msra.mxu0 0
      %376 = vmatprep.subr.bf16.mxu0 0
      %377 = vmatpush1.bf16.msra.mxu0 0
      %378 = vmatprep.subr.bf16.mxu0 0
      %379 = vmatpush1.bf16.msra.mxu0 0
      %380 = vmatprep.subr.bf16.mxu0 0
      %381 = vmatpush1.bf16.msra.mxu0 0
      %382 = vmatprep.subr.bf16.mxu0 0
      %383 = vmatpush1.bf16.msra.mxu0 0
      %384 = vmatprep.subr.bf16.mxu0 0
      %385 = vmatpush1.bf16.msra.mxu0 %v327
      %386 = vmatprep.subr.bf16.mxu0 0
      %387 = vmatpush2.bf16.msra.mxu0 0
      %388 = vmatprep.subr.bf16.mxu0 0
      %389 = vmatpush2.bf16.msra.mxu0 0
      %390 = vmatprep.subr.bf16.mxu0 0
      %391 = vmatpush2.bf16.msra.mxu0 0
      %392 = vmatprep.subr.bf16.mxu0 0
      %393 = vmatpush2.bf16.msra.mxu0 0
      %394 = vmatprep.subr.bf16.mxu0 0
      %395 = vmatpush2.bf16.msra.mxu0 0
      %396 = vmatprep.subr.bf16.mxu0 0
      %397 = vmatpush2.bf16.msra.mxu0 0
      %398 = vmatprep.subr.bf16.mxu0 0
      %399 = vmatpush2.bf16.msra.mxu0 0
      %400 = vmatprep.subr.bf16.mxu0 0
      %401 = vmatpush2.bf16.msra.mxu0 0
      %402 = vmatprep.mubr.bf16.mxu0 0
      %403 = vmatmul.mubr.bf16.gmra.mxu0 %v318
      %v404 = vpop.f32.mrf.mxu0
      %v405 = vadd.f32 %v312, %v404
      %v406 = vpop.f32.mrf.mxu0
      %v407 = vpop.f32.mrf.mxu0
      %v408 = vpop.f32.mrf.mxu0
      %409 = vdwg.mxu0
      %s410 = scalar_lea.vmem %s180, 4
      %v411 = vld [vmem:[%s410] sm:$0x3]
      %v412 = vld [vmem:[%s185] sm:$0x3f]
      %v414 = vcombine.high %v412, %v412
      %v416 = vunpack.c.l.s4 1983009808
      %v417 = vunpack.c.0.s8 %v416
      %v418 = vlaneseq
      %v419 = vshrl.u32 %v418, 7
      %v420 = vsub.s32 %v417, %v419
      %v421 = vrot.slane %v412, %v420
      %v423 = vunpack.c.l.s4 1983009808
      %v424 = vunpack.c.0.s8 %v423
      %v425 = vlaneseq
      %v426 = vshrl.u32 %v425, 7
      %v427 = vsub.s32 %v424, %v426
      %v428 = vrot.slane %v414, %v427
      %v429 = vcombine.high %v421, %v421
      %430 = vrot.lane.b32.xlu0 %v421, 126
      %v431 = vpop.permute.xlu0 %430
      %432 = vrot.lane.b32.xlu0 %v429, 126
      %v433 = vpop.permute.xlu0 %432
      %434 = vrot.lane.b32.xlu0 %v428, 126
      %v435 = vpop.permute.xlu0 %434
      %vm436 = vcmask 1031168
      %v437 = vsel %vm436, %v431, %v433
      %v438 = vsel %vm436, %v433, %v435
      %v440 = vsel %vm222, %v411, 0
      %v443 = vsel %vm226, %v437, 0
      %v446 = vsel %vm226, %v438, 0
      %v449 = vsel %vm226, %v435, 0
      %451 = vmatprep.subr.bf16.mxu0 0
      %452 = vmatpush1.bf16.msra.mxu0 0
      %453 = vmatprep.subr.bf16.mxu0 0
      %454 = vmatpush1.bf16.msra.mxu0 0
      %455 = vmatprep.subr.bf16.mxu0 0
      %456 = vmatpush1.bf16.msra.mxu0 0
      %457 = vmatprep.subr.bf16.mxu0 0
      %458 = vmatpush1.bf16.msra.mxu0 0
      %459 = vmatprep.subr.bf16.mxu0 0
      %460 = vmatpush1.bf16.msra.mxu0 0
      %461 = vmatprep.subr.bf16.mxu0 0
      %462 = vmatpush1.bf16.msra.mxu0 0
      %463 = vmatprep.subr.bf16.mxu0 0
      %464 = vmatpush1.bf16.msra.mxu0 0
      %465 = vmatprep.subr.bf16.mxu0 %v446
      %466 = vmatpush1.bf16.msra.mxu0 %v443
      %467 = vmatprep.subr.bf16.mxu0 0
      %468 = vmatpush2.bf16.msra.mxu0 0
      %469 = vmatprep.subr.bf16.mxu0 0
      %470 = vmatpush2.bf16.msra.mxu0 0
      %471 = vmatprep.subr.bf16.mxu0 0
      %472 = vmatpush2.bf16.msra.mxu0 0
      %473 = vmatprep.subr.bf16.mxu0 0
      %474 = vmatpush2.bf16.msra.mxu0 0
      %475 = vmatprep.subr.bf16.mxu0 0
      %476 = vmatpush2.bf16.msra.mxu0 0
      %477 = vmatprep.subr.bf16.mxu0 0
      %478 = vmatpush2.bf16.msra.mxu0 0
      %479 = vmatprep.subr.bf16.mxu0 0
      %480 = vmatpush2.bf16.msra.mxu0 0
      %481 = vmatprep.subr.bf16.mxu0 0
      %482 = vmatpush2.bf16.msra.mxu0 0
      %483 = vmatprep.mubr.bf16.mxu0 0
      %484 = vmatmul.mubr.bf16.gmra.mxu0 %v440
      %v485 = vpop.f32.mrf.mxu0
      %v486 = vadd.f32 0.0, %v485
      %v487 = vpop.f32.mrf.mxu0
      %v488 = vadd.f32 0.0, %v487
      %v489 = vpop.f32.mrf.mxu0
      %v490 = vpop.f32.mrf.mxu0
      %491 = vdwg.mxu0
      %492 = vmatprep.subr.bf16.mxu0 0
      %493 = vmatpush1.bf16.msra.mxu0 0
      %494 = vmatprep.subr.bf16.mxu0 0
      %495 = vmatpush1.bf16.msra.mxu0 0
      %496 = vmatprep.subr.bf16.mxu0 0
      %497 = vmatpush1.bf16.msra.mxu0 0
      %498 = vmatprep.subr.bf16.mxu0 0
      %499 = vmatpush1.bf16.msra.mxu0 0
      %500 = vmatprep.subr.bf16.mxu0 0
      %501 = vmatpush1.bf16.msra.mxu0 0
      %502 = vmatprep.subr.bf16.mxu0 0
      %503 = vmatpush1.bf16.msra.mxu0 0
      %504 = vmatprep.subr.bf16.mxu0 0
      %505 = vmatpush1.bf16.msra.mxu0 0
      %506 = vmatprep.subr.bf16.mxu0 0
      %507 = vmatpush1.bf16.msra.mxu0 %v449
      %508 = vmatprep.subr.bf16.mxu0 0
      %509 = vmatpush2.bf16.msra.mxu0 0
      %510 = vmatprep.subr.bf16.mxu0 0
      %511 = vmatpush2.bf16.msra.mxu0 0
      %512 = vmatprep.subr.bf16.mxu0 0
      %513 = vmatpush2.bf16.msra.mxu0 0
      %514 = vmatprep.subr.bf16.mxu0 0
      %515 = vmatpush2.bf16.msra.mxu0 0
      %516 = vmatprep.subr.bf16.mxu0 0
      %517 = vmatpush2.bf16.msra.mxu0 0
      %518 = vmatprep.subr.bf16.mxu0 0
      %519 = vmatpush2.bf16.msra.mxu0 0
      %520 = vmatprep.subr.bf16.mxu0 0
      %521 = vmatpush2.bf16.msra.mxu0 0
      %522 = vmatprep.subr.bf16.mxu0 0
      %523 = vmatpush2.bf16.msra.mxu0 0
      %524 = vmatprep.mubr.bf16.mxu0 0
      %525 = vmatmul.mubr.bf16.gmra.mxu0 %v440
      %v526 = vpop.f32.mrf.mxu0
      %v527 = vadd.f32 0.0, %v526
      %v528 = vpop.f32.mrf.mxu0
      %v529 = vpop.f32.mrf.mxu0
      %v530 = vpop.f32.mrf.mxu0
      %531 = vdwg.mxu0
      %v532 = vadd.f32 %v364, %v486
      %v533 = vadd.f32 %v366, %v488
      %v534 = vadd.f32 %v405, %v527
      %s535 = scalar_lea.vmem %s180, 6
      %v536 = vld [vmem:[%s535] sm:$0x3]
      %v537 = vld [vmem:[%s185] sm:$0x3f]
      %v539 = vcombine.high %v537, %v537
      %v541 = vunpack.c.l.s4 1983009808
      %v542 = vunpack.c.0.s8 %v541
      %v543 = vlaneseq
      %v544 = vshrl.u32 %v543, 7
      %v545 = vsub.s32 %v542, %v544
      %v546 = vrot.slane %v537, %v545
      %v548 = vunpack.c.l.s4 1983009808
      %v549 = vunpack.c.0.s8 %v548
      %v550 = vlaneseq
      %v551 = vshrl.u32 %v550, 7
      %v552 = vsub.s32 %v549, %v551
      %v553 = vrot.slane %v539, %v552
      %v554 = vcombine.high %v546, %v546
      %555 = vrot.lane.b32.xlu0 %v546, 110
      %v556 = vpop.permute.xlu0 %555
      %557 = vrot.lane.b32.xlu0 %v554, 110
      %v558 = vpop.permute.xlu0 %557
      %559 = vrot.lane.b32.xlu0 %v553, 110
      %v560 = vpop.permute.xlu0 %559
      %vm561 = vcmask 900096
      %v562 = vsel %vm561, %v556, %v558
      %v563 = vsel %vm561, %v558, %v560
      %v565 = vsel %vm222, %v536, 0
      %v568 = vsel %vm226, %v562, 0
      %v571 = vsel %vm226, %v563, 0
      %v574 = vsel %vm226, %v560, 0
      %576 = vmatprep.subr.bf16.mxu0 0
      %577 = vmatpush1.bf16.msra.mxu0 0
      %578 = vmatprep.subr.bf16.mxu0 0
      %579 = vmatpush1.bf16.msra.mxu0 0
      %580 = vmatprep.subr.bf16.mxu0 0
      %581 = vmatpush1.bf16.msra.mxu0 0
      %582 = vmatprep.subr.bf16.mxu0 0
      %583 = vmatpush1.bf16.msra.mxu0 0
      %584 = vmatprep.subr.bf16.mxu0 0
      %585 = vmatpush1.bf16.msra.mxu0 0
      %586 = vmatprep.subr.bf16.mxu0 0
      %587 = vmatpush1.bf16.msra.mxu0 0
      %588 = vmatprep.subr.bf16.mxu0 0
      %589 = vmatpush1.bf16.msra.mxu0 0
      %590 = vmatprep.subr.bf16.mxu0 %v571
      %591 = vmatpush1.bf16.msra.mxu0 %v568
      %592 = vmatprep.subr.bf16.mxu0 0
      %593 = vmatpush2.bf16.msra.mxu0 0
      %594 = vmatprep.subr.bf16.mxu0 0
      %595 = vmatpush2.bf16.msra.mxu0 0
      %596 = vmatprep.subr.bf16.mxu0 0
      %597 = vmatpush2.bf16.msra.mxu0 0
      %598 = vmatprep.subr.bf16.mxu0 0
      %599 = vmatpush2.bf16.msra.mxu0 0
      %600 = vmatprep.subr.bf16.mxu0 0
      %601 = vmatpush2.bf16.msra.mxu0 0
      %602 = vmatprep.subr.bf16.mxu0 0
      %603 = vmatpush2.bf16.msra.mxu0 0
      %604 = vmatprep.subr.bf16.mxu0 0
      %605 = vmatpush2.bf16.msra.mxu0 0
      %606 = vmatprep.subr.bf16.mxu0 0
      %607 = vmatpush2.bf16.msra.mxu0 0
      %608 = vmatprep.mubr.bf16.mxu0 0
      %609 = vmatmul.mubr.bf16.gmra.mxu0 %v565
      %v610 = vpop.f32.mrf.mxu0
      %v611 = vadd.f32 0.0, %v610
      %v612 = vpop.f32.mrf.mxu0
      %v613 = vadd.f32 0.0, %v612
      %v614 = vpop.f32.mrf.mxu0
      %v615 = vpop.f32.mrf.mxu0
      %616 = vdwg.mxu0
      %617 = vmatprep.subr.bf16.mxu0 0
      %618 = vmatpush1.bf16.msra.mxu0 0
      %619 = vmatprep.subr.bf16.mxu0 0
      %620 = vmatpush1.bf16.msra.mxu0 0
      %621 = vmatprep.subr.bf16.mxu0 0
      %622 = vmatpush1.bf16.msra.mxu0 0
      %623 = vmatprep.subr.bf16.mxu0 0
      %624 = vmatpush1.bf16.msra.mxu0 0
      %625 = vmatprep.subr.bf16.mxu0 0
      %626 = vmatpush1.bf16.msra.mxu0 0
      %627 = vmatprep.subr.bf16.mxu0 0
      %628 = vmatpush1.bf16.msra.mxu0 0
      %629 = vmatprep.subr.bf16.mxu0 0
      %630 = vmatpush1.bf16.msra.mxu0 0
      %631 = vmatprep.subr.bf16.mxu0 0
      %632 = vmatpush1.bf16.msra.mxu0 %v574
      %633 = vmatprep.subr.bf16.mxu0 0
      %634 = vmatpush2.bf16.msra.mxu0 0
      %635 = vmatprep.subr.bf16.mxu0 0
      %636 = vmatpush2.bf16.msra.mxu0 0
      %637 = vmatprep.subr.bf16.mxu0 0
      %638 = vmatpush2.bf16.msra.mxu0 0
      %639 = vmatprep.subr.bf16.mxu0 0
      %640 = vmatpush2.bf16.msra.mxu0 0
      %641 = vmatprep.subr.bf16.mxu0 0
      %642 = vmatpush2.bf16.msra.mxu0 0
      %643 = vmatprep.subr.bf16.mxu0 0
      %644 = vmatpush2.bf16.msra.mxu0 0
      %645 = vmatprep.subr.bf16.mxu0 0
      %646 = vmatpush2.bf16.msra.mxu0 0
      %647 = vmatprep.subr.bf16.mxu0 0
      %648 = vmatpush2.bf16.msra.mxu0 0
      %649 = vmatprep.mubr.bf16.mxu0 0
      %650 = vmatmul.mubr.bf16.gmra.mxu0 %v565
      %v651 = vpop.f32.mrf.mxu0
      %v652 = vadd.f32 0.0, %v651
      %v653 = vpop.f32.mrf.mxu0
      %v654 = vpop.f32.mrf.mxu0
      %v655 = vpop.f32.mrf.mxu0
      %656 = vdwg.mxu0
      %v657 = vadd.f32 %v532, %v611
      %v658 = vadd.f32 %v533, %v613
      %v659 = vadd.f32 %v534, %v652
      %s660 = scalar_lea.vmem %s180, 8
      %v661 = vld [vmem:[%s660] sm:$0x3]
      %v662 = vld [vmem:[%s185] sm:$0x3f]
      %v664 = vcombine.high %v662, %v662
      %v666 = vunpack.c.l.s4 1983009808
      %v667 = vunpack.c.0.s8 %v666
      %v668 = vlaneseq
      %v669 = vshrl.u32 %v668, 7
      %v670 = vsub.s32 %v667, %v669
      %v671 = vrot.slane %v662, %v670
      %v673 = vunpack.c.l.s4 1983009808
      %v674 = vunpack.c.0.s8 %v673
      %v675 = vlaneseq
      %v676 = vshrl.u32 %v675, 7
      %v677 = vsub.s32 %v674, %v676
      %v678 = vrot.slane %v664, %v677
      %v679 = vcombine.high %v671, %v671
      %680 = vrot.lane.b32.xlu0 %v671, 109
      %v681 = vpop.permute.xlu0 %680
      %682 = vrot.lane.b32.xlu0 %v679, 109
      %v683 = vpop.permute.xlu0 %682
      %684 = vrot.lane.b32.xlu0 %v678, 109
      %v685 = vpop.permute.xlu0 %684
      %vm686 = vcmask 891904
      %v687 = vsel %vm686, %v681, %v683
      %v688 = vsel %vm686, %v683, %v685
      %v690 = vsel %vm222, %v661, 0
      %v693 = vsel %vm226, %v687, 0
      %v696 = vsel %vm226, %v688, 0
      %v699 = vsel %vm226, %v685, 0
      %701 = vmatprep.subr.bf16.mxu0 0
      %702 = vmatpush1.bf16.msra.mxu0 0
      %703 = vmatprep.subr.bf16.mxu0 0
      %704 = vmatpush1.bf16.msra.mxu0 0
      %705 = vmatprep.subr.bf16.mxu0 0
      %706 = vmatpush1.bf16.msra.mxu0 0
      %707 = vmatprep.subr.bf16.mxu0 0
      %708 = vmatpush1.bf16.msra.mxu0 0
      %709 = vmatprep.subr.bf16.mxu0 0
      %710 = vmatpush1.bf16.msra.mxu0 0
      %711 = vmatprep.subr.bf16.mxu0 0
      %712 = vmatpush1.bf16.msra.mxu0 0
      %713 = vmatprep.subr.bf16.mxu0 0
      %714 = vmatpush1.bf16.msra.mxu0 0
      %715 = vmatprep.subr.bf16.mxu0 %v696
      %716 = vmatpush1.bf16.msra.mxu0 %v693
      %717 = vmatprep.subr.bf16.mxu0 0
      %718 = vmatpush2.bf16.msra.mxu0 0
      %719 = vmatprep.subr.bf16.mxu0 0
      %720 = vmatpush2.bf16.msra.mxu0 0
      %721 = vmatprep.subr.bf16.mxu0 0
      %722 = vmatpush2.bf16.msra.mxu0 0
      %723 = vmatprep.subr.bf16.mxu0 0
      %724 = vmatpush2.bf16.msra.mxu0 0
      %725 = vmatprep.subr.bf16.mxu0 0
      %726 = vmatpush2.bf16.msra.mxu0 0
      %727 = vmatprep.subr.bf16.mxu0 0
      %728 = vmatpush2.bf16.msra.mxu0 0
      %729 = vmatprep.subr.bf16.mxu0 0
      %730 = vmatpush2.bf16.msra.mxu0 0
      %731 = vmatprep.subr.bf16.mxu0 0
      %732 = vmatpush2.bf16.msra.mxu0 0
      %733 = vmatprep.mubr.bf16.mxu0 0
      %734 = vmatmul.mubr.bf16.gmra.mxu0 %v690
      %v735 = vpop.f32.mrf.mxu0
      %v736 = vadd.f32 0.0, %v735
      %v737 = vpop.f32.mrf.mxu0
      %v738 = vadd.f32 0.0, %v737
      %v739 = vpop.f32.mrf.mxu0
      %v740 = vpop.f32.mrf.mxu0
      %741 = vdwg.mxu0
      %742 = vmatprep.subr.bf16.mxu0 0
      %743 = vmatpush1.bf16.msra.mxu0 0
      %744 = vmatprep.subr.bf16.mxu0 0
      %745 = vmatpush1.bf16.msra.mxu0 0
      %746 = vmatprep.subr.bf16.mxu0 0
      %747 = vmatpush1.bf16.msra.mxu0 0
      %748 = vmatprep.subr.bf16.mxu0 0
      %749 = vmatpush1.bf16.msra.mxu0 0
      %750 = vmatprep.subr.bf16.mxu0 0
      %751 = vmatpush1.bf16.msra.mxu0 0
      %752 = vmatprep.subr.bf16.mxu0 0
      %753 = vmatpush1.bf16.msra.mxu0 0
      %754 = vmatprep.subr.bf16.mxu0 0
      %755 = vmatpush1.bf16.msra.mxu0 0
      %756 = vmatprep.subr.bf16.mxu0 0
      %757 = vmatpush1.bf16.msra.mxu0 %v699
      %758 = vmatprep.subr.bf16.mxu0 0
      %759 = vmatpush2.bf16.msra.mxu0 0
      %760 = vmatprep.subr.bf16.mxu0 0
      %761 = vmatpush2.bf16.msra.mxu0 0
      %762 = vmatprep.subr.bf16.mxu0 0
      %763 = vmatpush2.bf16.msra.mxu0 0
      %764 = vmatprep.subr.bf16.mxu0 0
      %765 = vmatpush2.bf16.msra.mxu0 0
      %766 = vmatprep.subr.bf16.mxu0 0
      %767 = vmatpush2.bf16.msra.mxu0 0
      %768 = vmatprep.subr.bf16.mxu0 0
      %769 = vmatpush2.bf16.msra.mxu0 0
      %770 = vmatprep.subr.bf16.mxu0 0
      %771 = vmatpush2.bf16.msra.mxu0 0
      %772 = vmatprep.subr.bf16.mxu0 0
      %773 = vmatpush2.bf16.msra.mxu0 0
      %774 = vmatprep.mubr.bf16.mxu0 0
      %775 = vmatmul.mubr.bf16.gmra.mxu0 %v690
      %v776 = vpop.f32.mrf.mxu0
      %v777 = vadd.f32 0.0, %v776
      %v778 = vpop.f32.mrf.mxu0
      %v779 = vpop.f32.mrf.mxu0
      %v780 = vpop.f32.mrf.mxu0
      %781 = vdwg.mxu0
      %v782 = vadd.f32 %v657, %v736
      %v783 = vadd.f32 %v658, %v738
      %v784 = vadd.f32 %v659, %v777
      %s785 = scalar_lea.vmem %s180, 10
      %v786 = vld [vmem:[%s785] sm:$0x3]
      %v787 = vld [vmem:[%s185] sm:$0x3f]
      %v789 = vcombine.high %v787, %v787
      %v791 = vunpack.c.l.s4 1983009808
      %v792 = vunpack.c.0.s8 %v791
      %v793 = vlaneseq
      %v794 = vshrl.u32 %v793, 7
      %v795 = vsub.s32 %v792, %v794
      %v796 = vrot.slane %v787, %v795
      %v798 = vunpack.c.l.s4 1983009808
      %v799 = vunpack.c.0.s8 %v798
      %v800 = vlaneseq
      %v801 = vshrl.u32 %v800, 7
      %v802 = vsub.s32 %v799, %v801
      %v803 = vrot.slane %v789, %v802
      %v804 = vcombine.high %v796, %v796
      %805 = vrot.lane.b32.xlu0 %v796, 108
      %v806 = vpop.permute.xlu0 %805
      %807 = vrot.lane.b32.xlu0 %v804, 108
      %v808 = vpop.permute.xlu0 %807
      %809 = vrot.lane.b32.xlu0 %v803, 108
      %v810 = vpop.permute.xlu0 %809
      %vm811 = vcmask 883712
      %v812 = vsel %vm811, %v806, %v808
      %v813 = vsel %vm811, %v808, %v810
      %v815 = vsel %vm222, %v786, 0
      %v818 = vsel %vm226, %v812, 0
      %v821 = vsel %vm226, %v813, 0
      %v824 = vsel %vm226, %v810, 0
      %826 = vmatprep.subr.bf16.mxu0 0
      %827 = vmatpush1.bf16.msra.mxu0 0
      %828 = vmatprep.subr.bf16.mxu0 0
      %829 = vmatpush1.bf16.msra.mxu0 0
      %830 = vmatprep.subr.bf16.mxu0 0
      %831 = vmatpush1.bf16.msra.mxu0 0
      %832 = vmatprep.subr.bf16.mxu0 0
      %833 = vmatpush1.bf16.msra.mxu0 0
      %834 = vmatprep.subr.bf16.mxu0 0
      %835 = vmatpush1.bf16.msra.mxu0 0
      %836 = vmatprep.subr.bf16.mxu0 0
      %837 = vmatpush1.bf16.msra.mxu0 0
      %838 = vmatprep.subr.bf16.mxu0 0
      %839 = vmatpush1.bf16.msra.mxu0 0
      %840 = vmatprep.subr.bf16.mxu0 %v821
      %841 = vmatpush1.bf16.msra.mxu0 %v818
      %842 = vmatprep.subr.bf16.mxu0 0
      %843 = vmatpush2.bf16.msra.mxu0 0
      %844 = vmatprep.subr.bf16.mxu0 0
      %845 = vmatpush2.bf16.msra.mxu0 0
      %846 = vmatprep.subr.bf16.mxu0 0
      %847 = vmatpush2.bf16.msra.mxu0 0
      %848 = vmatprep.subr.bf16.mxu0 0
      %849 = vmatpush2.bf16.msra.mxu0 0
      %850 = vmatprep.subr.bf16.mxu0 0
      %851 = vmatpush2.bf16.msra.mxu0 0
      %852 = vmatprep.subr.bf16.mxu0 0
      %853 = vmatpush2.bf16.msra.mxu0 0
      %854 = vmatprep.subr.bf16.mxu0 0
      %855 = vmatpush2.bf16.msra.mxu0 0
      %856 = vmatprep.subr.bf16.mxu0 0
      %857 = vmatpush2.bf16.msra.mxu0 0
      %858 = vmatprep.mubr.bf16.mxu0 0
      %859 = vmatmul.mubr.bf16.gmra.mxu0 %v815
      %v860 = vpop.f32.mrf.mxu0
      %v861 = vadd.f32 0.0, %v860
      %v862 = vpop.f32.mrf.mxu0
      %v863 = vadd.f32 0.0, %v862
      %v864 = vpop.f32.mrf.mxu0
      %v865 = vpop.f32.mrf.mxu0
      %866 = vdwg.mxu0
      %867 = vmatprep.subr.bf16.mxu0 0
      %868 = vmatpush1.bf16.msra.mxu0 0
      %869 = vmatprep.subr.bf16.mxu0 0
      %870 = vmatpush1.bf16.msra.mxu0 0
      %871 = vmatprep.subr.bf16.mxu0 0
      %872 = vmatpush1.bf16.msra.mxu0 0
      %873 = vmatprep.subr.bf16.mxu0 0
      %874 = vmatpush1.bf16.msra.mxu0 0
      %875 = vmatprep.subr.bf16.mxu0 0
      %876 = vmatpush1.bf16.msra.mxu0 0
      %877 = vmatprep.subr.bf16.mxu0 0
      %878 = vmatpush1.bf16.msra.mxu0 0
      %879 = vmatprep.subr.bf16.mxu0 0
      %880 = vmatpush1.bf16.msra.mxu0 0
      %881 = vmatprep.subr.bf16.mxu0 0
      %882 = vmatpush1.bf16.msra.mxu0 %v824
      %883 = vmatprep.subr.bf16.mxu0 0
      %884 = vmatpush2.bf16.msra.mxu0 0
      %885 = vmatprep.subr.bf16.mxu0 0
      %886 = vmatpush2.bf16.msra.mxu0 0
      %887 = vmatprep.subr.bf16.mxu0 0
      %888 = vmatpush2.bf16.msra.mxu0 0
      %889 = vmatprep.subr.bf16.mxu0 0
      %890 = vmatpush2.bf16.msra.mxu0 0
      %891 = vmatprep.subr.bf16.mxu0 0
      %892 = vmatpush2.bf16.msra.mxu0 0
      %893 = vmatprep.subr.bf16.mxu0 0
      %894 = vmatpush2.bf16.msra.mxu0 0
      %895 = vmatprep.subr.bf16.mxu0 0
      %896 = vmatpush2.bf16.msra.mxu0 0
      %897 = vmatprep.subr.bf16.mxu0 0
      %898 = vmatpush2.bf16.msra.mxu0 0
      %899 = vmatprep.mubr.bf16.mxu0 0
      %900 = vmatmul.mubr.bf16.gmra.mxu0 %v815
      %v901 = vpop.f32.mrf.mxu0
      %v902 = vadd.f32 0.0, %v901
      %v903 = vpop.f32.mrf.mxu0
      %v904 = vpop.f32.mrf.mxu0
      %v905 = vpop.f32.mrf.mxu0
      %906 = vdwg.mxu0
      %v907 = vadd.f32 %v782, %v861
      %v908 = vadd.f32 %v783, %v863
      %v909 = vadd.f32 %v784, %v902
      %s910 = scalar_lea.vmem %s180, 12
      %v911 = vld [vmem:[%s910] sm:$0x3]
      %v912 = vld [vmem:[%s185] sm:$0x3f]
      %v914 = vcombine.high %v912, %v912
      %v916 = vunpack.c.l.s4 1983009808
      %v917 = vunpack.c.0.s8 %v916
      %v918 = vlaneseq
      %v919 = vshrl.u32 %v918, 7
      %v920 = vsub.s32 %v917, %v919
      %v921 = vrot.slane %v912, %v920
      %v923 = vunpack.c.l.s4 1983009808
      %v924 = vunpack.c.0.s8 %v923
      %v925 = vlaneseq
      %v926 = vshrl.u32 %v925, 7
      %v927 = vsub.s32 %v924, %v926
      %v928 = vrot.slane %v914, %v927
      %v929 = vcombine.high %v921, %v921
      %930 = vrot.lane.b32.xlu0 %v921, 92
      %v931 = vpop.permute.xlu0 %930
      %932 = vrot.lane.b32.xlu0 %v929, 92
      %v933 = vpop.permute.xlu0 %932
      %934 = vrot.lane.b32.xlu0 %v928, 92
      %v935 = vpop.permute.xlu0 %934
      %vm936 = vcmask 752640
      %v937 = vsel %vm936, %v931, %v933
      %v938 = vsel %vm936, %v933, %v935
      %v940 = vsel %vm222, %v911, 0
      %v943 = vsel %vm226, %v937, 0
      %v946 = vsel %vm226, %v938, 0
      %v949 = vsel %vm226, %v935, 0
      %951 = vmatprep.subr.bf16.mxu0 0
      %952 = vmatpush1.bf16.msra.mxu0 0
      %953 = vmatprep.subr.bf16.mxu0 0
      %954 = vmatpush1.bf16.msra.mxu0 0
      %955 = vmatprep.subr.bf16.mxu0 0
      %956 = vmatpush1.bf16.msra.mxu0 0
      %957 = vmatprep.subr.bf16.mxu0 0
      %958 = vmatpush1.bf16.msra.mxu0 0
      %959 = vmatprep.subr.bf16.mxu0 0
      %960 = vmatpush1.bf16.msra.mxu0 0
      %961 = vmatprep.subr.bf16.mxu0 0
      %962 = vmatpush1.bf16.msra.mxu0 0
      %963 = vmatprep.subr.bf16.mxu0 0
      %964 = vmatpush1.bf16.msra.mxu0 0
      %965 = vmatprep.subr.bf16.mxu0 %v946
      %966 = vmatpush1.bf16.msra.mxu0 %v943
      %967 = vmatprep.subr.bf16.mxu0 0
      %968 = vmatpush2.bf16.msra.mxu0 0
      %969 = vmatprep.subr.bf16.mxu0 0
      %970 = vmatpush2.bf16.msra.mxu0 0
      %971 = vmatprep.subr.bf16.mxu0 0
      %972 = vmatpush2.bf16.msra.mxu0 0
      %973 = vmatprep.subr.bf16.mxu0 0
      %974 = vmatpush2.bf16.msra.mxu0 0
      %975 = vmatprep.subr.bf16.mxu0 0
      %976 = vmatpush2.bf16.msra.mxu0 0
      %977 = vmatprep.subr.bf16.mxu0 0
      %978 = vmatpush2.bf16.msra.mxu0 0
      %979 = vmatprep.subr.bf16.mxu0 0
      %980 = vmatpush2.bf16.msra.mxu0 0
      %981 = vmatprep.subr.bf16.mxu0 0
      %982 = vmatpush2.bf16.msra.mxu0 0
      %983 = vmatprep.mubr.bf16.mxu0 0
      %984 = vmatmul.mubr.bf16.gmra.mxu0 %v940
      %v985 = vpop.f32.mrf.mxu0
      %v986 = vadd.f32 0.0, %v985
      %v987 = vpop.f32.mrf.mxu0
      %v988 = vadd.f32 0.0, %v987
      %v989 = vpop.f32.mrf.mxu0
      %v990 = vpop.f32.mrf.mxu0
      %991 = vdwg.mxu0
      %992 = vmatprep.subr.bf16.mxu0 0
      %993 = vmatpush1.bf16.msra.mxu0 0
      %994 = vmatprep.subr.bf16.mxu0 0
      %995 = vmatpush1.bf16.msra.mxu0 0
      %996 = vmatprep.subr.bf16.mxu0 0
      %997 = vmatpush1.bf16.msra.mxu0 0
      %998 = vmatprep.subr.bf16.mxu0 0
      %999 = vmatpush1.bf16.msra.mxu0 0
      %1000 = vmatprep.subr.bf16.mxu0 0
      %1001 = vmatpush1.bf16.msra.mxu0 0
      %1002 = vmatprep.subr.bf16.mxu0 0
      %1003 = vmatpush1.bf16.msra.mxu0 0
      %1004 = vmatprep.subr.bf16.mxu0 0
      %1005 = vmatpush1.bf16.msra.mxu0 0
      %1006 = vmatprep.subr.bf16.mxu0 0
      %1007 = vmatpush1.bf16.msra.mxu0 %v949
      %1008 = vmatprep.subr.bf16.mxu0 0
      %1009 = vmatpush2.bf16.msra.mxu0 0
      %1010 = vmatprep.subr.bf16.mxu0 0
      %1011 = vmatpush2.bf16.msra.mxu0 0
      %1012 = vmatprep.subr.bf16.mxu0 0
      %1013 = vmatpush2.bf16.msra.mxu0 0
      %1014 = vmatprep.subr.bf16.mxu0 0
      %1015 = vmatpush2.bf16.msra.mxu0 0
      %1016 = vmatprep.subr.bf16.mxu0 0
      %1017 = vmatpush2.bf16.msra.mxu0 0
      %1018 = vmatprep.subr.bf16.mxu0 0
      %1019 = vmatpush2.bf16.msra.mxu0 0
      %1020 = vmatprep.subr.bf16.mxu0 0
      %1021 = vmatpush2.bf16.msra.mxu0 0
      %1022 = vmatprep.subr.bf16.mxu0 0
      %1023 = vmatpush2.bf16.msra.mxu0 0
      %1024 = vmatprep.mubr.bf16.mxu0 0
      %1025 = vmatmul.mubr.bf16.gmra.mxu0 %v940
      %v1026 = vpop.f32.mrf.mxu0
      %v1027 = vadd.f32 0.0, %v1026
      %v1028 = vpop.f32.mrf.mxu0
      %v1029 = vpop.f32.mrf.mxu0
      %v1030 = vpop.f32.mrf.mxu0
      %1031 = vdwg.mxu0
      %v1032 = vadd.f32 %v907, %v986
      %v1033 = vadd.f32 %v908, %v988
      %v1034 = vadd.f32 %v909, %v1027
      %s1035 = scalar_lea.vmem %s180, 14
      %v1036 = vld [vmem:[%s1035] sm:$0x3]
      %v1037 = vld [vmem:[%s185] sm:$0x3f]
      %v1039 = vcombine.high %v1037, %v1037
      %v1041 = vunpack.c.l.s4 1983009808
      %v1042 = vunpack.c.0.s8 %v1041
      %v1043 = vlaneseq
      %v1044 = vshrl.u32 %v1043, 7
      %v1045 = vsub.s32 %v1042, %v1044
      %v1046 = vrot.slane %v1037, %v1045
      %v1048 = vunpack.c.l.s4 1983009808
      %v1049 = vunpack.c.0.s8 %v1048
      %v1050 = vlaneseq
      %v1051 = vshrl.u32 %v1050, 7
      %v1052 = vsub.s32 %v1049, %v1051
      %v1053 = vrot.slane %v1039, %v1052
      %v1054 = vcombine.high %v1046, %v1046
      %1055 = vrot.lane.b32.xlu0 %v1046, 91
      %v1056 = vpop.permute.xlu0 %1055
      %1057 = vrot.lane.b32.xlu0 %v1054, 91
      %v1058 = vpop.permute.xlu0 %1057
      %1059 = vrot.lane.b32.xlu0 %v1053, 91
      %v1060 = vpop.permute.xlu0 %1059
      %vm1061 = vcmask 744448
      %v1062 = vsel %vm1061, %v1056, %v1058
      %v1063 = vsel %vm1061, %v1058, %v1060
      %v1065 = vsel %vm222, %v1036, 0
      %v1068 = vsel %vm226, %v1062, 0
      %v1071 = vsel %vm226, %v1063, 0
      %v1074 = vsel %vm226, %v1060, 0
      %1076 = vmatprep.subr.bf16.mxu0 0
      %1077 = vmatpush1.bf16.msra.mxu0 0
      %1078 = vmatprep.subr.bf16.mxu0 0
      %1079 = vmatpush1.bf16.msra.mxu0 0
      %1080 = vmatprep.subr.bf16.mxu0 0
      %1081 = vmatpush1.bf16.msra.mxu0 0
      %1082 = vmatprep.subr.bf16.mxu0 0
      %1083 = vmatpush1.bf16.msra.mxu0 0
      %1084 = vmatprep.subr.bf16.mxu0 0
      %1085 = vmatpush1.bf16.msra.mxu0 0
      %1086 = vmatprep.subr.bf16.mxu0 0
      %1087 = vmatpush1.bf16.msra.mxu0 0
      %1088 = vmatprep.subr.bf16.mxu0 0
      %1089 = vmatpush1.bf16.msra.mxu0 0
      %1090 = vmatprep.subr.bf16.mxu0 %v1071
      %1091 = vmatpush1.bf16.msra.mxu0 %v1068
      %1092 = vmatprep.subr.bf16.mxu0 0
      %1093 = vmatpush2.bf16.msra.mxu0 0
      %1094 = vmatprep.subr.bf16.mxu0 0
      %1095 = vmatpush2.bf16.msra.mxu0 0
      %1096 = vmatprep.subr.bf16.mxu0 0
      %1097 = vmatpush2.bf16.msra.mxu0 0
      %1098 = vmatprep.subr.bf16.mxu0 0
      %1099 = vmatpush2.bf16.msra.mxu0 0
      %1100 = vmatprep.subr.bf16.mxu0 0
      %1101 = vmatpush2.bf16.msra.mxu0 0
      %1102 = vmatprep.subr.bf16.mxu0 0
      %1103 = vmatpush2.bf16.msra.mxu0 0
      %1104 = vmatprep.subr.bf16.mxu0 0
      %1105 = vmatpush2.bf16.msra.mxu0 0
      %1106 = vmatprep.subr.bf16.mxu0 0
      %1107 = vmatpush2.bf16.msra.mxu0 0
      %1108 = vmatprep.mubr.bf16.mxu0 0
      %1109 = vmatmul.mubr.bf16.gmra.mxu0 %v1065
      %v1110 = vpop.f32.mrf.mxu0
      %v1111 = vadd.f32 0.0, %v1110
      %v1112 = vpop.f32.mrf.mxu0
      %v1113 = vadd.f32 0.0, %v1112
      %v1114 = vpop.f32.mrf.mxu0
      %v1115 = vpop.f32.mrf.mxu0
      %1116 = vdwg.mxu0
      %1117 = vmatprep.subr.bf16.mxu0 0
      %1118 = vmatpush1.bf16.msra.mxu0 0
      %1119 = vmatprep.subr.bf16.mxu0 0
      %1120 = vmatpush1.bf16.msra.mxu0 0
      %1121 = vmatprep.subr.bf16.mxu0 0
      %1122 = vmatpush1.bf16.msra.mxu0 0
      %1123 = vmatprep.subr.bf16.mxu0 0
      %1124 = vmatpush1.bf16.msra.mxu0 0
      %1125 = vmatprep.subr.bf16.mxu0 0
      %1126 = vmatpush1.bf16.msra.mxu0 0
      %1127 = vmatprep.subr.bf16.mxu0 0
      %1128 = vmatpush1.bf16.msra.mxu0 0
      %1129 = vmatprep.subr.bf16.mxu0 0
      %1130 = vmatpush1.bf16.msra.mxu0 0
      %1131 = vmatprep.subr.bf16.mxu0 0
      %1132 = vmatpush1.bf16.msra.mxu0 %v1074
      %1133 = vmatprep.subr.bf16.mxu0 0
      %1134 = vmatpush2.bf16.msra.mxu0 0
      %1135 = vmatprep.subr.bf16.mxu0 0
      %1136 = vmatpush2.bf16.msra.mxu0 0
      %1137 = vmatprep.subr.bf16.mxu0 0
      %1138 = vmatpush2.bf16.msra.mxu0 0
      %1139 = vmatprep.subr.bf16.mxu0 0
      %1140 = vmatpush2.bf16.msra.mxu0 0
      %1141 = vmatprep.subr.bf16.mxu0 0
      %1142 = vmatpush2.bf16.msra.mxu0 0
      %1143 = vmatprep.subr.bf16.mxu0 0
      %1144 = vmatpush2.bf16.msra.mxu0 0
      %1145 = vmatprep.subr.bf16.mxu0 0
      %1146 = vmatpush2.bf16.msra.mxu0 0
      %1147 = vmatprep.subr.bf16.mxu0 0
      %1148 = vmatpush2.bf16.msra.mxu0 0
      %1149 = vmatprep.mubr.bf16.mxu0 0
      %1150 = vmatmul.mubr.bf16.gmra.mxu0 %v1065
      %v1151 = vpop.f32.mrf.mxu0
      %v1152 = vadd.f32 0.0, %v1151
      %v1153 = vpop.f32.mrf.mxu0
      %v1154 = vpop.f32.mrf.mxu0
      %v1155 = vpop.f32.mrf.mxu0
      %1156 = vdwg.mxu0
      %v1157 = vadd.f32 %v1032, %v1111
      %v1158 = vadd.f32 %v1033, %v1113
      %v1159 = vadd.f32 %v1034, %v1152
      %s1160 = scalar_lea.vmem %s180, 16
      %v1161 = vld [vmem:[%s1160] sm:$0x3]
      %v1162 = vld [vmem:[%s185] sm:$0x3f]
      %v1164 = vcombine.high %v1162, %v1162
      %v1166 = vunpack.c.l.s4 1983009808
      %v1167 = vunpack.c.0.s8 %v1166
      %v1168 = vlaneseq
      %v1169 = vshrl.u32 %v1168, 7
      %v1170 = vsub.s32 %v1167, %v1169
      %v1171 = vrot.slane %v1162, %v1170
      %v1173 = vunpack.c.l.s4 1983009808
      %v1174 = vunpack.c.0.s8 %v1173
      %v1175 = vlaneseq
      %v1176 = vshrl.u32 %v1175, 7
      %v1177 = vsub.s32 %v1174, %v1176
      %v1178 = vrot.slane %v1164, %v1177
      %v1179 = vcombine.high %v1171, %v1171
      %1180 = vrot.lane.b32.xlu0 %v1171, 90
      %v1181 = vpop.permute.xlu0 %1180
      %1182 = vrot.lane.b32.xlu0 %v1179, 90
      %v1183 = vpop.permute.xlu0 %1182
      %1184 = vrot.lane.b32.xlu0 %v1178, 90
      %v1185 = vpop.permute.xlu0 %1184
      %vm1186 = vcmask 736256
      %v1187 = vsel %vm1186, %v1181, %v1183
      %v1188 = vsel %vm1186, %v1183, %v1185
      %v1190 = vsel %vm222, %v1161, 0
      %v1193 = vsel %vm226, %v1187, 0
      %v1196 = vsel %vm226, %v1188, 0
      %v1199 = vsel %vm226, %v1185, 0
      %1201 = vmatprep.subr.bf16.mxu0 0
      %1202 = vmatpush1.bf16.msra.mxu0 0
      %1203 = vmatprep.subr.bf16.mxu0 0
      %1204 = vmatpush1.bf16.msra.mxu0 0
      %1205 = vmatprep.subr.bf16.mxu0 0
      %1206 = vmatpush1.bf16.msra.mxu0 0
      %1207 = vmatprep.subr.bf16.mxu0 0
      %1208 = vmatpush1.bf16.msra.mxu0 0
      %1209 = vmatprep.subr.bf16.mxu0 0
      %1210 = vmatpush1.bf16.msra.mxu0 0
      %1211 = vmatprep.subr.bf16.mxu0 0
      %1212 = vmatpush1.bf16.msra.mxu0 0
      %1213 = vmatprep.subr.bf16.mxu0 0
      %1214 = vmatpush1.bf16.msra.mxu0 0
      %1215 = vmatprep.subr.bf16.mxu0 %v1196
      %1216 = vmatpush1.bf16.msra.mxu0 %v1193
      %1217 = vmatprep.subr.bf16.mxu0 0
      %1218 = vmatpush2.bf16.msra.mxu0 0
      %1219 = vmatprep.subr.bf16.mxu0 0
      %1220 = vmatpush2.bf16.msra.mxu0 0
      %1221 = vmatprep.subr.bf16.mxu0 0
      %1222 = vmatpush2.bf16.msra.mxu0 0
      %1223 = vmatprep.subr.bf16.mxu0 0
      %1224 = vmatpush2.bf16.msra.mxu0 0
      %1225 = vmatprep.subr.bf16.mxu0 0
      %1226 = vmatpush2.bf16.msra.mxu0 0
      %1227 = vmatprep.subr.bf16.mxu0 0
      %1228 = vmatpush2.bf16.msra.mxu0 0
      %1229 = vmatprep.subr.bf16.mxu0 0
      %1230 = vmatpush2.bf16.msra.mxu0 0
      %1231 = vmatprep.subr.bf16.mxu0 0
      %1232 = vmatpush2.bf16.msra.mxu0 0
      %1233 = vmatprep.mubr.bf16.mxu0 0
      %1234 = vmatmul.mubr.bf16.gmra.mxu0 %v1190
      %v1235 = vpop.f32.mrf.mxu0
      %v1236 = vadd.f32 0.0, %v1235
      %v1237 = vpop.f32.mrf.mxu0
      %v1238 = vadd.f32 0.0, %v1237
      %v1239 = vpop.f32.mrf.mxu0
      %v1240 = vpop.f32.mrf.mxu0
      %1241 = vdwg.mxu0
      %1242 = vmatprep.subr.bf16.mxu0 0
      %1243 = vmatpush1.bf16.msra.mxu0 0
      %1244 = vmatprep.subr.bf16.mxu0 0
      %1245 = vmatpush1.bf16.msra.mxu0 0
      %1246 = vmatprep.subr.bf16.mxu0 0
      %1247 = vmatpush1.bf16.msra.mxu0 0
      %1248 = vmatprep.subr.bf16.mxu0 0
      %1249 = vmatpush1.bf16.msra.mxu0 0
      %1250 = vmatprep.subr.bf16.mxu0 0
      %1251 = vmatpush1.bf16.msra.mxu0 0
      %1252 = vmatprep.subr.bf16.mxu0 0
      %1253 = vmatpush1.bf16.msra.mxu0 0
      %1254 = vmatprep.subr.bf16.mxu0 0
      %1255 = vmatpush1.bf16.msra.mxu0 0
      %1256 = vmatprep.subr.bf16.mxu0 0
      %1257 = vmatpush1.bf16.msra.mxu0 %v1199
      %1258 = vmatprep.subr.bf16.mxu0 0
      %1259 = vmatpush2.bf16.msra.mxu0 0
      %1260 = vmatprep.subr.bf16.mxu0 0
      %1261 = vmatpush2.bf16.msra.mxu0 0
      %1262 = vmatprep.subr.bf16.mxu0 0
      %1263 = vmatpush2.bf16.msra.mxu0 0
      %1264 = vmatprep.subr.bf16.mxu0 0
      %1265 = vmatpush2.bf16.msra.mxu0 0
      %1266 = vmatprep.subr.bf16.mxu0 0
      %1267 = vmatpush2.bf16.msra.mxu0 0
      %1268 = vmatprep.subr.bf16.mxu0 0
      %1269 = vmatpush2.bf16.msra.mxu0 0
      %1270 = vmatprep.subr.bf16.mxu0 0
      %1271 = vmatpush2.bf16.msra.mxu0 0
      %1272 = vmatprep.subr.bf16.mxu0 0
      %1273 = vmatpush2.bf16.msra.mxu0 0
      %1274 = vmatprep.mubr.bf16.mxu0 0
      %1275 = vmatmul.mubr.bf16.gmra.mxu0 %v1190
      %v1276 = vpop.f32.mrf.mxu0
      %v1277 = vadd.f32 0.0, %v1276
      %v1278 = vpop.f32.mrf.mxu0
      %v1279 = vpop.f32.mrf.mxu0
      %v1280 = vpop.f32.mrf.mxu0
      %1281 = vdwg.mxu0
      %v1282 = vadd.f32 %v1157, %v1236
      %v1283 = vadd.f32 %v1158, %v1238
      %v1284 = vadd.f32 %v1159, %v1277
      %v1285 = vld [vmem:[%s2] sm:$0xf]
      %1287 = vset.pattern.permute.xlu0 0
      %1288 = vperm.xlu0 %1287, %v1285
      %v1289 = vpop.permute.xlu0 %1288
      %v1291 = vadd.f32 %v1282, %v1289
      %v1292 = vadd.f32 %v1283, %v1289
      %v1293 = vadd.f32 %v1284, %v1289
      %v1296 = vcombine.low %v1291, %v1292
      %1298 = vst [vmem:[%s190] sm:$0xff] %v1296
      %vm1299 = vcmask 257024
      %1300 = vst.msk [vmem:[%s190 + $0x8] sm:$0xf] %vm1299, %v1293
      %p1301 = scmp.lt.s32.totalorder %s14, 1
      %s1302 = scalar_select %p1301, %s14, 1
      %s1303 = smul.addr %s1302, 3
      %s1304 = smul.addr %s1303, 4
      %s1305 = scalar_lea.vmem %s3, %s1304
      // Predicated region
      $region33: #{residual_group.12} parent=31 // pred_check
        %p1306 = pneg %p105
      $region34: #{residual_group.12} parent=31 // pred_check_branch
        %1308 = sbr.rel (%p1306) target = $region36
      $region35: #{residual_group.12} parent=31 // pred_region
        _
      $region36: #{residual_group.12} parent=31 // pred_fallthru
        _
    $region32: #{residual_group.12} parent=5 // pred_fallthru
      _
    %p1309 = scmp.le.s32.totalorder 2, %s9
    // Predicated region
    $region37: #{residual_group.12} parent=5 // pred_check
      %p1310 = pneg %p1309
    $region38: #{residual_group.12} parent=5 // pred_check_branch
      %1312 = sbr.rel (%p1310) target = $region40
    $region39: #{residual_group.12} parent=5 // pred_region
      %s1313 = ssub.s32 %s9, 2
      // Predicated region
      $region41: #{residual_group.12} parent=39 // pred_check
        %p1314 = pneg %p111
      $region42: #{residual_group.12} parent=39 // pred_check_branch
        %1316 = sbr.rel (%p1314) target = $region44
      $region43: #{residual_group.12} parent=39 // pred_region
        %p1317 = scmp.lt.s32.totalorder %s15, 1
        %s1318 = scalar_select %p1317, %s15, 1
        %s1319 = smul.addr %s1318, 3
        %s1320 = smul.addr %s1319, 4
        %s1321 = scalar_lea.vmem %s3, %s1320
      $region44: #{residual_group.12} parent=39 // pred_fallthru
        _
    $region40: #{residual_group.12} parent=5 // pred_fallthru
      _
  $region6: #{residual_group.12} parent=0 // loop_footer
    %s13 = sadd.s32 1, %s9
  $region7: #{residual_group.12} parent=0 // loop_footer_branch
    %8 = sbr.rel target = $region3
  $region8: #{residual_group.12} parent=0 // loop_exit
    _

</llo_original>
